<compile_context>
chip_gen: v7x
topology: tpu7x:2x2x1
jax: 0.10.0
libtpu: 0.0.40
codegen_flags: <defaults>
</compile_context>

<pallas_src>
import math
from functools import partial

import jax
import jax.numpy as jnp
from jax import lax
from jax.experimental import pallas as pl
from jax.experimental.pallas import tpu as pltpu


# ------------------------------ fused kernel --------------------------------

def _encoder_kernel(mbias_ref, h_in_ref, emb_g_ref, emb_b_ref,
                    w_qkv_ref, b_qkv_ref, w_o_ref, b_o_ref,
                    sa_g_ref, sa_b_ref,
                    w_ff1_ref, b_ff1_ref, w_ff2_ref, b_ff2_ref,
                    out_g_ref, out_b_ref,
                    proj_w_ref, proj_b_ref,
                    o_ref,
                    h_vmem,
                    *, n_heads, seq_len, b_tile, eps):
    layer = pl.program_id(1)
    n_layers = pl.num_programs(1)

    L = seq_len
    Bt = b_tile
    rows = Bt * L
    D = h_vmem.shape[-1]
    H = n_heads
    Dh = D // H
    scale = 1.0 / math.sqrt(Dh)

    def layer_norm(x, g, b):
        mu = jnp.mean(x, axis=-1, keepdims=True)
        var = jnp.mean((x - mu) ** 2, axis=-1, keepdims=True)
        return (x - mu) * lax.rsqrt(var + eps) * g + b

    # Grid step (b, 0): embedding LayerNorm initializes the resident activation
    # for this batch tile.
    @pl.when(layer == 0)
    def _():
        x0 = h_in_ref[...].reshape(rows, D)
        h_vmem[...] = layer_norm(x0, emb_g_ref[...], emb_b_ref[...])

    x = h_vmem[...]                                   # [rows, D] f32
    x_bf = x.astype(jnp.bfloat16)
    mbias = mbias_ref[...]                            # [Bt, 1, L] f32 (0 / -1e9)

    # ---- Multi-head self-attention ------------------------------------------
    # Per-head projection weights avoid lane-misaligned slices and the ctx
    # concat; the output projection is accumulated per head.
    attn = jnp.zeros((rows, D), jnp.float32)
    for h in range(H):
        q = jnp.dot(x_bf, w_qkv_ref[0, 0, h],
                    preferred_element_type=jnp.float32) + b_qkv_ref[0, 0, h]
        k = jnp.dot(x_bf, w_qkv_ref[0, 1, h],
                    preferred_element_type=jnp.float32) + b_qkv_ref[0, 1, h]
        v = jnp.dot(x_bf, w_qkv_ref[0, 2, h],
                    preferred_element_type=jnp.float32) + b_qkv_ref[0, 2, h]

        q3 = (q * scale).astype(jnp.bfloat16).reshape(Bt, L, Dh)
        k3 = k.astype(jnp.bfloat16).reshape(Bt, L, Dh)
        v3 = v.astype(jnp.bfloat16).reshape(Bt, L, Dh)

        s = jnp.einsum('bqd,bkd->bqk', q3, k3,
                       preferred_element_type=jnp.float32)          # [Bt, L, L]
        s = s + mbias                                                # key-pad mask
        s = s - jnp.max(s, axis=-1, keepdims=True)
        p = jnp.exp(s)
        p = p * pl.reciprocal(jnp.sum(p, axis=-1, keepdims=True), approx=True)

        ctx = jnp.einsum('bqk,bkd->bqd', p.astype(jnp.bfloat16), v3,
                         preferred_element_type=jnp.float32)         # [Bt, L, Dh]
        attn = attn + jnp.dot(ctx.reshape(rows, Dh).astype(jnp.bfloat16),
                              w_o_ref[0, h],
                              preferred_element_type=jnp.float32)
    attn = attn + b_o_ref[0]
    sa = layer_norm(attn + x, sa_g_ref[0], sa_b_ref[0])

    # ---- Feed-forward (tanh-approx GELU; transcendental lands on the EUP) ----
    ff = jnp.dot(sa.astype(jnp.bfloat16), w_ff1_ref[0],
                 preferred_element_type=jnp.float32) + b_ff1_ref[0]
    c0 = math.sqrt(2.0 / math.pi)
    ff = 0.5 * ff * (1.0 + jnp.tanh(c0 * (ff + 0.044715 * ff * ff * ff)))
    ff = jnp.dot(ff.astype(jnp.bfloat16), w_ff2_ref[0],
                 preferred_element_type=jnp.float32) + b_ff2_ref[0]
    h_new = layer_norm(ff + sa, out_g_ref[0], out_b_ref[0])
    h_vmem[...] = h_new

    # ---- Final Linear projection (lane-dense, padded to 128 cols) -----------
    @pl.when(layer == n_layers - 1)
    def _():
        proj = jnp.dot(h_new.astype(jnp.bfloat16), proj_w_ref[...],
                       preferred_element_type=jnp.float32) + proj_b_ref[...]
        o_ref[...] = proj.reshape(Bt, L, -1).astype(o_ref.dtype)


# ------------------------------ model wrapper --------------------------------

def transformer_encoder_forward(params, tokens, *, n_heads, b_tile=1):
    """Mirrors TransformerEncoder.forward: mask = (tokens != 0), truncated
    DistilBERT-style encoder (3 layers / 4 heads), then Linear projection.
    Returns [B, L, proj_dim] float32."""
    B, L = tokens.shape
    d_model = params["word_emb"].shape[1]
    n_layers = params["w_qkv"].shape[0]
    d_ffn = params["w_ff1"].shape[-1]
    proj_dim = params["proj_w"].shape[-1]
    H = n_heads
    Dh = d_model // H
    assert H * Dh == d_model
    assert B % b_tile == 0
    n_btiles = B // b_tile
    rows = b_tile * L

    # Lane-dense projection width (pad to a multiple of 128, slice back below).
    P = ((proj_dim + 127) // 128) * 128

    # ---- plain-JAX glue: embedding gather + mask bias (computed once) -------
    pos = params["pos_emb"][:L]
    h_in = (jnp.take(params["word_emb"], tokens, axis=0)
            + pos[None, :, :]).astype(jnp.float32)                     # [B, L, D]
    mbias = jnp.where(tokens != 0, 0.0, -1e9).astype(jnp.float32)[:, None, :]

    proj_w_p = jnp.zeros((d_model, P), jnp.bfloat16)
    proj_w_p = proj_w_p.at[:, :proj_dim].set(params["proj_w"].astype(jnp.bfloat16))
    proj_b_p = jnp.zeros((1, P), jnp.float32)
    proj_b_p = proj_b_p.at[0, :proj_dim].set(params["proj_b"])

    emb_g = params["emb_ln_g"].reshape(1, -1)
    emb_b = params["emb_ln_b"].reshape(1, -1)

    # Per-layer stacked weights: one layer slice per inner grid step.
    def lw(shape):
        nd = len(shape)
        return pl.BlockSpec((1,) + shape, lambda b, l, _nd=nd: (l,) + (0,) * _nd)

    def const_spec(shape):
        nd = len(shape)
        return pl.BlockSpec(shape, lambda b, l, _nd=nd: (0,) * _nd)

    def batch_spec(shape):   # blocked over the batch axis, constant over layers
        nd = len(shape)
        return pl.BlockSpec((b_tile,) + shape, lambda b, l, _nd=nd: (b,) + (0,) * _nd)

    # ---- explicit scoped-VMEM budget (review item) ---------------------------
    def blk_bytes(a):
        n = a.dtype.itemsize
        for s in a.shape[1:]:
            n *= s
        return n

    layer_keys = ("w_qkv", "b_qkv", "w_o", "b_o", "sa_ln_g", "sa_ln_b",
                  "w_ff1", "b_ff1", "w_ff2", "b_ff2", "out_ln_g", "out_ln_b")
    layer_bytes = sum(blk_bytes(params[k]) for k in layer_keys)
    const_bytes = (b_tile * L * 4                      # mbias block
                   + b_tile * L * d_model * 4          # h_in block
                   + 2 * d_model * 4                   # emb LN
                   + d_model * P * 2 + P * 4           # projection
                   + b_tile * L * P * 4)               # output block
    scratch_bytes = rows * d_model * 4
    work_bytes = rows * max(3 * d_model, d_ffn, P) * 4 * 6   # f32 intermediates headroom
    vmem_limit = 2 * layer_bytes + 2 * const_bytes + scratch_bytes + work_bytes + (4 << 20)
    vmem_limit = int(min(64 << 20, max(16 << 20, vmem_limit)))

    feats = pl.pallas_call(
        partial(_encoder_kernel, n_heads=H, seq_len=L, b_tile=b_tile, eps=1e-12),
        out_shape=jax.ShapeDtypeStruct((B, L, P), jnp.float32),
        grid=(n_btiles, n_layers),
        in_specs=[
            batch_spec((1, L)),                     # mbias      [B, 1, L]
            batch_spec((L, d_model)),               # h_in       [B, L, D]
            const_spec((1, d_model)),               # emb_ln_g
            const_spec((1, d_model)),               # emb_ln_b
            lw((3, H, d_model, Dh)),                # w_qkv      [nl, 3, H, D, Dh] bf16
            lw((3, H, 1, Dh)),                      # b_qkv
            lw((H, Dh, d_model)),                   # w_o        [nl, H, Dh, D]   bf16
            lw((1, d_model)),                       # b_o
            lw((1, d_model)),                       # sa_ln_g
            lw((1, d_model)),                       # sa_ln_b
            lw((d_model, d_ffn)),                   # w_ff1
            lw((1, d_ffn)),                         # b_ff1
            lw((d_ffn, d_model)),                   # w_ff2
            lw((1, d_model)),                       # b_ff2
            lw((1, d_model)),                       # out_ln_g
            lw((1, d_model)),                       # out_ln_b
            const_spec((d_model, P)),               # proj_w (padded)
            const_spec((1, P)),                     # proj_b (padded)
        ],
        out_specs=batch_spec((L, P)),
        scratch_shapes=[pltpu.VMEM((rows, d_model), jnp.float32)],
        compiler_params=pltpu.CompilerParams(
            dimension_semantics=("parallel", "arbitrary"),
            vmem_limit_bytes=vmem_limit),
    )(mbias, h_in, emb_g, emb_b,
      params["w_qkv"], params["b_qkv"],
      params["w_o"], params["b_o"],
      params["sa_ln_g"], params["sa_ln_b"],
      params["w_ff1"], params["b_ff1"],
      params["w_ff2"], params["b_ff2"],
      params["out_ln_g"], params["out_ln_b"],
      proj_w_p, proj_b_p)

    return feats[:, :, :proj_dim]


# ------------------------------ parameter init --------------------------------

def init_params(key, *, vocab, max_pos, d_model, n_heads, d_ffn, n_layers, proj_dim):
    H = n_heads
    Dh = d_model // H
    ks = jax.random.split(key, 6 * n_layers + 4)
    ki = iter(ks)

    def dense(kk, fan_in, fan_out):
        lim = math.sqrt(6.0 / (fan_in + fan_out))      # xavier-uniform
        w = jax.random.uniform(kk, (fan_in, fan_out), jnp.float32, -lim, lim)
        return w, jnp.zeros((fan_out,), jnp.float32)

    word_emb = 0.02 * jax.random.normal(next(ki), (vocab, d_model), jnp.float32)
    pos_emb = 0.02 * jax.random.normal(next(ki), (max_pos, d_model), jnp.float32)

    w_qkv, b_qkv, w_o, b_o = [], [], [], []
    w_ff1, b_ff1, w_ff2, b_ff2 = [], [], [], []
    for _ in range(n_layers):
        qw, _ = dense(next(ki), d_model, d_model)
        kw, _ = dense(next(ki), d_model, d_model)
        vw, _ = dense(next(ki), d_model, d_model)
        # [3, H, D, Dh]: per-head column slices of the full [D, D] projections.
        w_qkv.append(jnp.stack(
            [w.reshape(d_model, H, Dh).transpose(1, 0, 2) for w in (qw, kw, vw)]))
        b_qkv.append(jnp.zeros((3, H, 1, Dh), jnp.float32))
        ow, ob = dense(next(ki), d_model, d_model)
        w_o.append(ow.reshape(H, Dh, d_model))          # per-head row slices
        b_o.append(ob[None, :])
        f1w, f1b = dense(next(ki), d_model, d_ffn)
        w_ff1.append(f1w); b_ff1.append(f1b[None, :])
        f2w, f2b = dense(next(ki), d_ffn, d_model)
        w_ff2.append(f2w); b_ff2.append(f2b[None, :])
    proj_w, proj_b = dense(next(ki), d_model, proj_dim)

    ones = jnp.ones((n_layers, 1, d_model), jnp.float32)
    zeros = jnp.zeros((n_layers, 1, d_model), jnp.float32)

    return {
        "word_emb": word_emb,
        "pos_emb": pos_emb,
        "emb_ln_g": jnp.ones((d_model,), jnp.float32),
        "emb_ln_b": jnp.zeros((d_model,), jnp.float32),
        # matmul weights stored bf16 (MXU operands); biases / LN params in f32
        "w_qkv": jnp.stack(w_qkv).astype(jnp.bfloat16),
        "b_qkv": jnp.stack(b_qkv),
        "w_o": jnp.stack(w_o).astype(jnp.bfloat16),
        "b_o": jnp.stack(b_o),
        "sa_ln_g": ones, "sa_ln_b": zeros,
        "w_ff1": jnp.stack(w_ff1).astype(jnp.bfloat16),
        "b_ff1": jnp.stack(b_ff1),
        "w_ff2": jnp.stack(w_ff2).astype(jnp.bfloat16),
        "b_ff2": jnp.stack(b_ff2),
        "out_ln_g": ones, "out_ln_b": zeros,
        "proj_w": proj_w,
        "proj_b": proj_b,
    }


# --------------------------------- driver -------------------------------------

if __name__ == "__main__":
    # Small synthetic configuration (truncated-DistilBERT-style): 3 layers,
    # 4 heads, d_model=64, ffn=128, projection hidden_dim=32.
    B, L = 2, 8
    VOCAB, MAX_POS = 100, 32
    D_MODEL, N_HEADS, D_FFN, N_LAYERS = 64, 4, 128, 3
    PROJ_DIM = 32

    key = jax.random.PRNGKey(0)
    k_tok, k_par = jax.random.split(key)

    tokens = jax.random.randint(k_tok, (B, L), 1, VOCAB, dtype=jnp.int32)
    # Introduce padding (token id 0) so the attention mask is exercised.
    tokens = tokens.at[0, 6:].set(0)
    tokens = tokens.at[1, 5:].set(0)

    params = init_params(
        k_par, vocab=VOCAB, max_pos=MAX_POS, d_model=D_MODEL,
        n_heads=N_HEADS, d_ffn=D_FFN, n_layers=N_LAYERS, proj_dim=PROJ_DIM)

    out = transformer_encoder_forward(params, tokens, n_heads=N_HEADS, b_tile=1)
    out = jax.block_until_ready(out)
    assert out.shape == (B, L, PROJ_DIM), out.shape
    assert bool(jnp.all(jnp.isfinite(out)))
    print("KERNEL_OK")
</pallas_src>

<mosaic_0001>
module attributes {stable_mosaic.version = 11 : i64} {
  func.func @_encoder_kernel(%arg0: i32, %arg1: i32, %arg2: memref<1x1x8xf32, #tpu.memory_space<vmem>>, %arg3: memref<1x8x64xf32, #tpu.memory_space<vmem>>, %arg4: memref<1x64xf32, #tpu.memory_space<vmem>>, %arg5: memref<1x64xf32, #tpu.memory_space<vmem>>, %arg6: memref<1x3x4x64x16xbf16, #tpu.memory_space<vmem>>, %arg7: memref<1x3x4x1x16xf32, #tpu.memory_space<vmem>>, %arg8: memref<1x4x16x64xbf16, #tpu.memory_space<vmem>>, %arg9: memref<1x1x64xf32, #tpu.memory_space<vmem>>, %arg10: memref<1x1x64xf32, #tpu.memory_space<vmem>>, %arg11: memref<1x1x64xf32, #tpu.memory_space<vmem>>, %arg12: memref<1x64x128xbf16, #tpu.memory_space<vmem>>, %arg13: memref<1x1x128xf32, #tpu.memory_space<vmem>>, %arg14: memref<1x128x64xbf16, #tpu.memory_space<vmem>>, %arg15: memref<1x1x64xf32, #tpu.memory_space<vmem>>, %arg16: memref<1x1x64xf32, #tpu.memory_space<vmem>>, %arg17: memref<1x1x64xf32, #tpu.memory_space<vmem>>, %arg18: memref<64x128xbf16, #tpu.memory_space<vmem>>, %arg19: memref<1x128xf32, #tpu.memory_space<vmem>>, %arg20: memref<1x8x128xf32, #tpu.memory_space<vmem>>, %arg21: memref<8x64xf32, #tpu.memory_space<vmem>>) attributes {dimension_semantics = [#tpu.dimension_semantics<parallel>, #tpu.dimension_semantics<arbitrary>], iteration_bounds = array<i64: 2, 3>, scalar_prefetch = 0 : i64, scratch_operands = 1 : i64, tpu.core_type = #tpu.core_type<tc>, window_params = [{transform_indices = @transform_0, window_bounds = array<i64: 1, 1, 8>}, {transform_indices = @transform_1, window_bounds = array<i64: 1, 8, 64>}, {pipeline_mode = #tpu.pipeline_mode<synchronous>, transform_indices = @transform_2, window_bounds = array<i64: 1, 64>}, {pipeline_mode = #tpu.pipeline_mode<synchronous>, transform_indices = @transform_3, window_bounds = array<i64: 1, 64>}, {transform_indices = @transform_4, window_bounds = array<i64: 1, 3, 4, 64, 16>}, {transform_indices = @transform_5, window_bounds = array<i64: 1, 3, 4, 1, 16>}, {transform_indices = @transform_6, window_bounds = array<i64: 1, 4, 16, 64>}, {transform_indices = @transform_7, window_bounds = array<i64: 1, 1, 64>}, {transform_indices = @transform_8, window_bounds = array<i64: 1, 1, 64>}, {transform_indices = @transform_9, window_bounds = array<i64: 1, 1, 64>}, {transform_indices = @transform_10, window_bounds = array<i64: 1, 64, 128>}, {transform_indices = @transform_11, window_bounds = array<i64: 1, 1, 128>}, {transform_indices = @transform_12, window_bounds = array<i64: 1, 128, 64>}, {transform_indices = @transform_13, window_bounds = array<i64: 1, 1, 64>}, {transform_indices = @transform_14, window_bounds = array<i64: 1, 1, 64>}, {transform_indices = @transform_15, window_bounds = array<i64: 1, 1, 64>}, {pipeline_mode = #tpu.pipeline_mode<synchronous>, transform_indices = @transform_16, window_bounds = array<i64: 64, 128>}, {pipeline_mode = #tpu.pipeline_mode<synchronous>, transform_indices = @transform_17, window_bounds = array<i64: 1, 128>}, {transform_indices = @transform_18, window_bounds = array<i64: 1, 8, 128>}]} {
    %c0_i32 = arith.constant 0 : i32
    %0 = arith.cmpi eq, %arg1, %c0_i32 : i32
    %1 = arith.extui %0 : i1 to i32
    %c0_i32_0 = arith.constant 0 : i32
    %2 = arith.cmpi ne, %1, %c0_i32_0 : i32
    scf.if %2 {
      %c0_220 = arith.constant 0 : index
      %c0_221 = arith.constant 0 : index
      %c0_222 = arith.constant 0 : index
      %298 = vector.load %arg3[%c0_220, %c0_221, %c0_222] : memref<1x8x64xf32, #tpu.memory_space<vmem>>, vector<1x8x64xf32>
      %299 = vector.shape_cast %298 : vector<1x8x64xf32> to vector<8x64xf32>
      %c0_223 = arith.constant 0 : index
      %c0_224 = arith.constant 0 : index
      %300 = vector.load %arg4[%c0_223, %c0_224] : memref<1x64xf32, #tpu.memory_space<vmem>>, vector<1x64xf32>
      %c0_225 = arith.constant 0 : index
      %c0_226 = arith.constant 0 : index
      %301 = vector.load %arg5[%c0_225, %c0_226] : memref<1x64xf32, #tpu.memory_space<vmem>>, vector<1x64xf32>
      %cst_227 = arith.constant dense<0.000000e+00> : vector<8xf32>
      %302 = vector.multi_reduction <add>, %299, %cst_227 [1] : vector<8x64xf32> to vector<8xf32>
      %303 = vector.shape_cast %302 : vector<8xf32> to vector<8x1xf32>
      %cst_228 = arith.constant 6.400000e+01 : f32
      %304 = vector.broadcast %cst_228 : f32 to vector<8x1xf32>
      %305 = arith.divf %303, %304 : vector<8x1xf32>
      %306 = vector.broadcast %305 : vector<8x1xf32> to vector<8x64xf32>
      %307 = arith.subf %299, %306 : vector<8x64xf32>
      %308 = arith.mulf %307, %307 : vector<8x64xf32>
      %cst_229 = arith.constant dense<0.000000e+00> : vector<8xf32>
      %309 = vector.multi_reduction <add>, %308, %cst_229 [1] : vector<8x64xf32> to vector<8xf32>
      %310 = vector.shape_cast %309 : vector<8xf32> to vector<8x1xf32>
      %cst_230 = arith.constant 6.400000e+01 : f32
      %311 = vector.broadcast %cst_230 : f32 to vector<8x1xf32>
      %312 = arith.divf %310, %311 : vector<8x1xf32>
      %313 = vector.broadcast %305 : vector<8x1xf32> to vector<8x64xf32>
      %314 = arith.subf %299, %313 : vector<8x64xf32>
      %cst_231 = arith.constant 9.99999996E-13 : f32
      %315 = vector.broadcast %cst_231 : f32 to vector<8x1xf32>
      %316 = arith.addf %312, %315 : vector<8x1xf32>
      %317 = math.rsqrt %316 : vector<8x1xf32>
      %318 = vector.broadcast %317 : vector<8x1xf32> to vector<8x64xf32>
      %319 = arith.mulf %314, %318 : vector<8x64xf32>
      %320 = vector.broadcast %300 : vector<1x64xf32> to vector<8x64xf32>
      %321 = arith.mulf %319, %320 : vector<8x64xf32>
      %322 = vector.broadcast %301 : vector<1x64xf32> to vector<8x64xf32>
      %323 = arith.addf %321, %322 : vector<8x64xf32>
      %c0_232 = arith.constant 0 : index
      %c0_233 = arith.constant 0 : index
      %324 = vector.load %arg21[%c0_232, %c0_233] : memref<8x64xf32, #tpu.memory_space<vmem>>, vector<8x64xf32>
      tpu.vector_store %arg21[%c0_232, %c0_233], %323 {strides = array<i32>} : memref<8x64xf32, #tpu.memory_space<vmem>>, vector<8x64xf32>,
    } else {
    }
    %c0 = arith.constant 0 : index
    %c0_1 = arith.constant 0 : index
    %3 = vector.load %arg21[%c0, %c0_1] : memref<8x64xf32, #tpu.memory_space<vmem>>, vector<8x64xf32>
    %4 = arith.truncf %3 : vector<8x64xf32> to vector<8x64xbf16>
    %c0_2 = arith.constant 0 : index
    %c0_3 = arith.constant 0 : index
    %c0_4 = arith.constant 0 : index
    %5 = vector.load %arg2[%c0_2, %c0_3, %c0_4] : memref<1x1x8xf32, #tpu.memory_space<vmem>>, vector<1x1x8xf32>
    %cst = arith.constant 0.000000e+00 : f32
    %6 = vector.broadcast %cst : f32 to vector<8x64xf32>
    %c0_5 = arith.constant 0 : index
    %c0_6 = arith.constant 0 : index
    %c0_7 = arith.constant 0 : index
    %c0_8 = arith.constant 0 : index
    %c0_9 = arith.constant 0 : index
    %7 = vector.load %arg6[%c0_5, %c0_6, %c0_7, %c0_8, %c0_9] : memref<1x3x4x64x16xbf16, #tpu.memory_space<vmem>>, vector<1x1x1x64x16xbf16>
    %8 = vector.shape_cast %7 : vector<1x1x1x64x16xbf16> to vector<64x16xbf16>
    %cst_10 = arith.constant dense<0.000000e+00> : vector<8x16xf32>
    %9 = tpu.matmul %4, %8, %cst_10 {dimension_numbers = #tpu.dot_dimension_numbers<[1], [0], [0], [1], [0, 0, 1, 1], [], []>} : vector<8x64xbf16>, vector<64x16xbf16>, vector<8x16xf32> -> vector<8x16xf32>
    %c0_11 = arith.constant 0 : index
    %c0_12 = arith.constant 0 : index
    %c0_13 = arith.constant 0 : index
    %c0_14 = arith.constant 0 : index
    %c0_15 = arith.constant 0 : index
    %10 = vector.load %arg7[%c0_11, %c0_12, %c0_13, %c0_14, %c0_15] : memref<1x3x4x1x16xf32, #tpu.memory_space<vmem>>, vector<1x1x1x1x16xf32>
    %11 = vector.shape_cast %10 : vector<1x1x1x1x16xf32> to vector<1x16xf32>
    %12 = vector.broadcast %11 : vector<1x16xf32> to vector<8x16xf32>
    %13 = arith.addf %9, %12 : vector<8x16xf32>
    %c0_16 = arith.constant 0 : index
    %c1 = arith.constant 1 : index
    %c0_17 = arith.constant 0 : index
    %c0_18 = arith.constant 0 : index
    %c0_19 = arith.constant 0 : index
    %14 = vector.load %arg6[%c0_16, %c1, %c0_17, %c0_18, %c0_19] : memref<1x3x4x64x16xbf16, #tpu.memory_space<vmem>>, vector<1x1x1x64x16xbf16>
    %15 = vector.shape_cast %14 : vector<1x1x1x64x16xbf16> to vector<64x16xbf16>
    %cst_20 = arith.constant dense<0.000000e+00> : vector<8x16xf32>
    %16 = tpu.matmul %4, %15, %cst_20 {dimension_numbers = #tpu.dot_dimension_numbers<[1], [0], [0], [1], [0, 0, 1, 1], [], []>} : vector<8x64xbf16>, vector<64x16xbf16>, vector<8x16xf32> -> vector<8x16xf32>
    %c0_21 = arith.constant 0 : index
    %c1_22 = arith.constant 1 : index
    %c0_23 = arith.constant 0 : index
    %c0_24 = arith.constant 0 : index
    %c0_25 = arith.constant 0 : index
    %17 = vector.load %arg7[%c0_21, %c1_22, %c0_23, %c0_24, %c0_25] : memref<1x3x4x1x16xf32, #tpu.memory_space<vmem>>, vector<1x1x1x1x16xf32>
    %18 = vector.shape_cast %17 : vector<1x1x1x1x16xf32> to vector<1x16xf32>
    %19 = vector.broadcast %18 : vector<1x16xf32> to vector<8x16xf32>
    %20 = arith.addf %16, %19 : vector<8x16xf32>
    %c0_26 = arith.constant 0 : index
    %c2 = arith.constant 2 : index
    %c0_27 = arith.constant 0 : index
    %c0_28 = arith.constant 0 : index
    %c0_29 = arith.constant 0 : index
    %21 = vector.load %arg6[%c0_26, %c2, %c0_27, %c0_28, %c0_29] : memref<1x3x4x64x16xbf16, #tpu.memory_space<vmem>>, vector<1x1x1x64x16xbf16>
    %22 = vector.shape_cast %21 : vector<1x1x1x64x16xbf16> to vector<64x16xbf16>
    %cst_30 = arith.constant dense<0.000000e+00> : vector<8x16xf32>
    %23 = tpu.matmul %4, %22, %cst_30 {dimension_numbers = #tpu.dot_dimension_numbers<[1], [0], [0], [1], [0, 0, 1, 1], [], []>} : vector<8x64xbf16>, vector<64x16xbf16>, vector<8x16xf32> -> vector<8x16xf32>
    %c0_31 = arith.constant 0 : index
    %c2_32 = arith.constant 2 : index
    %c0_33 = arith.constant 0 : index
    %c0_34 = arith.constant 0 : index
    %c0_35 = arith.constant 0 : index
    %24 = vector.load %arg7[%c0_31, %c2_32, %c0_33, %c0_34, %c0_35] : memref<1x3x4x1x16xf32, #tpu.memory_space<vmem>>, vector<1x1x1x1x16xf32>
    %25 = vector.shape_cast %24 : vector<1x1x1x1x16xf32> to vector<1x16xf32>
    %26 = vector.broadcast %25 : vector<1x16xf32> to vector<8x16xf32>
    %27 = arith.addf %23, %26 : vector<8x16xf32>
    %cst_36 = arith.constant 2.500000e-01 : f32
    %28 = vector.broadcast %cst_36 : f32 to vector<8x16xf32>
    %29 = arith.mulf %13, %28 : vector<8x16xf32>
    %30 = arith.truncf %29 : vector<8x16xf32> to vector<8x16xbf16>
    %31 = vector.shape_cast %30 : vector<8x16xbf16> to vector<1x8x16xbf16>
    %32 = arith.truncf %20 : vector<8x16xf32> to vector<8x16xbf16>
    %33 = vector.shape_cast %32 : vector<8x16xbf16> to vector<1x8x16xbf16>
    %34 = arith.truncf %27 : vector<8x16xf32> to vector<8x16xbf16>
    %35 = vector.shape_cast %34 : vector<8x16xbf16> to vector<1x8x16xbf16>
    "tpu.trace_start"() <{level = 10 : i32, message = "bqd,bkd->bqk"}> : () -> ()
    %cst_37 = arith.constant dense<0.000000e+00> : vector<1x8x8xf32>
    %36 = tpu.matmul %31, %33, %cst_37 {dimension_numbers = #tpu.dot_dimension_numbers<[2], [2], [1], [1], [0, 0, 0, 1, 1, 1], [0], [0]>} : vector<1x8x16xbf16>, vector<1x8x16xbf16>, vector<1x8x8xf32> -> vector<1x8x8xf32>
    "tpu.trace_stop"() : () -> ()
    %37 = vector.broadcast %5 : vector<1x1x8xf32> to vector<1x8x8xf32>
    %38 = arith.addf %36, %37 : vector<1x8x8xf32>
    %cst_38 = arith.constant dense<0xFF800000> : vector<1x8xf32>
    %39 = vector.multi_reduction <maximumf>, %38, %cst_38 [2] : vector<1x8x8xf32> to vector<1x8xf32>
    %40 = vector.shape_cast %39 : vector<1x8xf32> to vector<1x8x1xf32>
    %41 = vector.broadcast %40 : vector<1x8x1xf32> to vector<1x8x8xf32>
    %42 = arith.subf %38, %41 : vector<1x8x8xf32>
    %43 = math.exp %42 : vector<1x8x8xf32>
    %cst_39 = arith.constant dense<0.000000e+00> : vector<1x8xf32>
    %44 = vector.multi_reduction <add>, %43, %cst_39 [2] : vector<1x8x8xf32> to vector<1x8xf32>
    %45 = vector.shape_cast %44 : vector<1x8xf32> to vector<1x8x1xf32>
    %46 = tpu.reciprocal %45 {approx = true} : vector<1x8x1xf32> -> vector<1x8x1xf32>
    %47 = vector.broadcast %46 : vector<1x8x1xf32> to vector<1x8x8xf32>
    %48 = arith.mulf %43, %47 : vector<1x8x8xf32>
    %49 = arith.truncf %48 : vector<1x8x8xf32> to vector<1x8x8xbf16>
    "tpu.trace_start"() <{level = 10 : i32, message = "bqk,bkd->bqd"}> : () -> ()
    %cst_40 = arith.constant dense<0.000000e+00> : vector<1x8x16xf32>
    %50 = tpu.matmul %49, %35, %cst_40 {dimension_numbers = #tpu.dot_dimension_numbers<[2], [1], [1], [2], [0, 0, 0, 1, 1, 2], [0], [0]>} : vector<1x8x8xbf16>, vector<1x8x16xbf16>, vector<1x8x16xf32> -> vector<1x8x16xf32>
    "tpu.trace_stop"() : () -> ()
    %51 = vector.shape_cast %50 : vector<1x8x16xf32> to vector<8x16xf32>
    %52 = arith.truncf %51 : vector<8x16xf32> to vector<8x16xbf16>
    %c0_41 = arith.constant 0 : index
    %c0_42 = arith.constant 0 : index
    %c0_43 = arith.constant 0 : index
    %c0_44 = arith.constant 0 : index
    %53 = vector.load %arg8[%c0_41, %c0_42, %c0_43, %c0_44] : memref<1x4x16x64xbf16, #tpu.memory_space<vmem>>, vector<1x1x16x64xbf16>
    %54 = vector.shape_cast %53 : vector<1x1x16x64xbf16> to vector<16x64xbf16>
    %cst_45 = arith.constant dense<0.000000e+00> : vector<8x64xf32>
    %55 = tpu.matmul %52, %54, %cst_45 {dimension_numbers = #tpu.dot_dimension_numbers<[1], [0], [0], [1], [0, 0, 1, 1], [], []>} : vector<8x16xbf16>, vector<16x64xbf16>, vector<8x64xf32> -> vector<8x64xf32>
    %56 = arith.addf %6, %55 : vector<8x64xf32>
    %c0_46 = arith.constant 0 : index
    %c0_47 = arith.constant 0 : index
    %c1_48 = arith.constant 1 : index
    %c0_49 = arith.constant 0 : index
    %c0_50 = arith.constant 0 : index
    %57 = vector.load %arg6[%c0_46, %c0_47, %c1_48, %c0_49, %c0_50] : memref<1x3x4x64x16xbf16, #tpu.memory_space<vmem>>, vector<1x1x1x64x16xbf16>
    %58 = vector.shape_cast %57 : vector<1x1x1x64x16xbf16> to vector<64x16xbf16>
    %cst_51 = arith.constant dense<0.000000e+00> : vector<8x16xf32>
    %59 = tpu.matmul %4, %58, %cst_51 {dimension_numbers = #tpu.dot_dimension_numbers<[1], [0], [0], [1], [0, 0, 1, 1], [], []>} : vector<8x64xbf16>, vector<64x16xbf16>, vector<8x16xf32> -> vector<8x16xf32>
    %c0_52 = arith.constant 0 : index
    %c0_53 = arith.constant 0 : index
    %c1_54 = arith.constant 1 : index
    %c0_55 = arith.constant 0 : index
    %c0_56 = arith.constant 0 : index
    %60 = vector.load %arg7[%c0_52, %c0_53, %c1_54, %c0_55, %c0_56] : memref<1x3x4x1x16xf32, #tpu.memory_space<vmem>>, vector<1x1x1x1x16xf32>
    %61 = vector.shape_cast %60 : vector<1x1x1x1x16xf32> to vector<1x16xf32>
    %62 = vector.broadcast %61 : vector<1x16xf32> to vector<8x16xf32>
    %63 = arith.addf %59, %62 : vector<8x16xf32>
    %c0_57 = arith.constant 0 : index
    %c1_58 = arith.constant 1 : index
    %c1_59 = arith.constant 1 : index
    %c0_60 = arith.constant 0 : index
    %c0_61 = arith.constant 0 : index
    %64 = vector.load %arg6[%c0_57, %c1_58, %c1_59, %c0_60, %c0_61] : memref<1x3x4x64x16xbf16, #tpu.memory_space<vmem>>, vector<1x1x1x64x16xbf16>
    %65 = vector.shape_cast %64 : vector<1x1x1x64x16xbf16> to vector<64x16xbf16>
    %cst_62 = arith.constant dense<0.000000e+00> : vector<8x16xf32>
    %66 = tpu.matmul %4, %65, %cst_62 {dimension_numbers = #tpu.dot_dimension_numbers<[1], [0], [0], [1], [0, 0, 1, 1], [], []>} : vector<8x64xbf16>, vector<64x16xbf16>, vector<8x16xf32> -> vector<8x16xf32>
    %c0_63 = arith.constant 0 : index
    %c1_64 = arith.constant 1 : index
    %c1_65 = arith.constant 1 : index
    %c0_66 = arith.constant 0 : index
    %c0_67 = arith.constant 0 : index
    %67 = vector.load %arg7[%c0_63, %c1_64, %c1_65, %c0_66, %c0_67] : memref<1x3x4x1x16xf32, #tpu.memory_space<vmem>>, vector<1x1x1x1x16xf32>
    %68 = vector.shape_cast %67 : vector<1x1x1x1x16xf32> to vector<1x16xf32>
    %69 = vector.broadcast %68 : vector<1x16xf32> to vector<8x16xf32>
    %70 = arith.addf %66, %69 : vector<8x16xf32>
    %c0_68 = arith.constant 0 : index
    %c2_69 = arith.constant 2 : index
    %c1_70 = arith.constant 1 : index
    %c0_71 = arith.constant 0 : index
    %c0_72 = arith.constant 0 : index
    %71 = vector.load %arg6[%c0_68, %c2_69, %c1_70, %c0_71, %c0_72] : memref<1x3x4x64x16xbf16, #tpu.memory_space<vmem>>, vector<1x1x1x64x16xbf16>
    %72 = vector.shape_cast %71 : vector<1x1x1x64x16xbf16> to vector<64x16xbf16>
    %cst_73 = arith.constant dense<0.000000e+00> : vector<8x16xf32>
    %73 = tpu.matmul %4, %72, %cst_73 {dimension_numbers = #tpu.dot_dimension_numbers<[1], [0], [0], [1], [0, 0, 1, 1], [], []>} : vector<8x64xbf16>, vector<64x16xbf16>, vector<8x16xf32> -> vector<8x16xf32>
    %c0_74 = arith.constant 0 : index
    %c2_75 = arith.constant 2 : index
    %c1_76 = arith.constant 1 : index
    %c0_77 = arith.constant 0 : index
    %c0_78 = arith.constant 0 : index
    %74 = vector.load %arg7[%c0_74, %c2_75, %c1_76, %c0_77, %c0_78] : memref<1x3x4x1x16xf32, #tpu.memory_space<vmem>>, vector<1x1x1x1x16xf32>
    %75 = vector.shape_cast %74 : vector<1x1x1x1x16xf32> to vector<1x16xf32>
    %76 = vector.broadcast %75 : vector<1x16xf32> to vector<8x16xf32>
    %77 = arith.addf %73, %76 : vector<8x16xf32>
    %cst_79 = arith.constant 2.500000e-01 : f32
    %78 = vector.broadcast %cst_79 : f32 to vector<8x16xf32>
    %79 = arith.mulf %63, %78 : vector<8x16xf32>
    %80 = arith.truncf %79 : vector<8x16xf32> to vector<8x16xbf16>
    %81 = vector.shape_cast %80 : vector<8x16xbf16> to vector<1x8x16xbf16>
    %82 = arith.truncf %70 : vector<8x16xf32> to vector<8x16xbf16>
    %83 = vector.shape_cast %82 : vector<8x16xbf16> to vector<1x8x16xbf16>
    %84 = arith.truncf %77 : vector<8x16xf32> to vector<8x16xbf16>
    %85 = vector.shape_cast %84 : vector<8x16xbf16> to vector<1x8x16xbf16>
    "tpu.trace_start"() <{level = 10 : i32, message = "bqd,bkd->bqk"}> : () -> ()
    %cst_80 = arith.constant dense<0.000000e+00> : vector<1x8x8xf32>
    %86 = tpu.matmul %81, %83, %cst_80 {dimension_numbers = #tpu.dot_dimension_numbers<[2], [2], [1], [1], [0, 0, 0, 1, 1, 1], [0], [0]>} : vector<1x8x16xbf16>, vector<1x8x16xbf16>, vector<1x8x8xf32> -> vector<1x8x8xf32>
    "tpu.trace_stop"() : () -> ()
    %87 = vector.broadcast %5 : vector<1x1x8xf32> to vector<1x8x8xf32>
    %88 = arith.addf %86, %87 : vector<1x8x8xf32>
    %cst_81 = arith.constant dense<0xFF800000> : vector<1x8xf32>
    %89 = vector.multi_reduction <maximumf>, %88, %cst_81 [2] : vector<1x8x8xf32> to vector<1x8xf32>
    %90 = vector.shape_cast %89 : vector<1x8xf32> to vector<1x8x1xf32>
    %91 = vector.broadcast %90 : vector<1x8x1xf32> to vector<1x8x8xf32>
    %92 = arith.subf %88, %91 : vector<1x8x8xf32>
    %93 = math.exp %92 : vector<1x8x8xf32>
    %cst_82 = arith.constant dense<0.000000e+00> : vector<1x8xf32>
    %94 = vector.multi_reduction <add>, %93, %cst_82 [2] : vector<1x8x8xf32> to vector<1x8xf32>
    %95 = vector.shape_cast %94 : vector<1x8xf32> to vector<1x8x1xf32>
    %96 = tpu.reciprocal %95 {approx = true} : vector<1x8x1xf32> -> vector<1x8x1xf32>
    %97 = vector.broadcast %96 : vector<1x8x1xf32> to vector<1x8x8xf32>
    %98 = arith.mulf %93, %97 : vector<1x8x8xf32>
    %99 = arith.truncf %98 : vector<1x8x8xf32> to vector<1x8x8xbf16>
    "tpu.trace_start"() <{level = 10 : i32, message = "bqk,bkd->bqd"}> : () -> ()
    %cst_83 = arith.constant dense<0.000000e+00> : vector<1x8x16xf32>
    %100 = tpu.matmul %99, %85, %cst_83 {dimension_numbers = #tpu.dot_dimension_numbers<[2], [1], [1], [2], [0, 0, 0, 1, 1, 2], [0], [0]>} : vector<1x8x8xbf16>, vector<1x8x16xbf16>, vector<1x8x16xf32> -> vector<1x8x16xf32>
    "tpu.trace_stop"() : () -> ()
    %101 = vector.shape_cast %100 : vector<1x8x16xf32> to vector<8x16xf32>
    %102 = arith.truncf %101 : vector<8x16xf32> to vector<8x16xbf16>
    %c0_84 = arith.constant 0 : index
    %c1_85 = arith.constant 1 : index
    %c0_86 = arith.constant 0 : index
    %c0_87 = arith.constant 0 : index
    %103 = vector.load %arg8[%c0_84, %c1_85, %c0_86, %c0_87] : memref<1x4x16x64xbf16, #tpu.memory_space<vmem>>, vector<1x1x16x64xbf16>
    %104 = vector.shape_cast %103 : vector<1x1x16x64xbf16> to vector<16x64xbf16>
    %cst_88 = arith.constant dense<0.000000e+00> : vector<8x64xf32>
    %105 = tpu.matmul %102, %104, %cst_88 {dimension_numbers = #tpu.dot_dimension_numbers<[1], [0], [0], [1], [0, 0, 1, 1], [], []>} : vector<8x16xbf16>, vector<16x64xbf16>, vector<8x64xf32> -> vector<8x64xf32>
    %106 = arith.addf %56, %105 : vector<8x64xf32>
    %c0_89 = arith.constant 0 : index
    %c0_90 = arith.constant 0 : index
    %c2_91 = arith.constant 2 : index
    %c0_92 = arith.constant 0 : index
    %c0_93 = arith.constant 0 : index
    %107 = vector.load %arg6[%c0_89, %c0_90, %c2_91, %c0_92, %c0_93] : memref<1x3x4x64x16xbf16, #tpu.memory_space<vmem>>, vector<1x1x1x64x16xbf16>
    %108 = vector.shape_cast %107 : vector<1x1x1x64x16xbf16> to vector<64x16xbf16>
    %cst_94 = arith.constant dense<0.000000e+00> : vector<8x16xf32>
    %109 = tpu.matmul %4, %108, %cst_94 {dimension_numbers = #tpu.dot_dimension_numbers<[1], [0], [0], [1], [0, 0, 1, 1], [], []>} : vector<8x64xbf16>, vector<64x16xbf16>, vector<8x16xf32> -> vector<8x16xf32>
    %c0_95 = arith.constant 0 : index
    %c0_96 = arith.constant 0 : index
    %c2_97 = arith.constant 2 : index
    %c0_98 = arith.constant 0 : index
    %c0_99 = arith.constant 0 : index
    %110 = vector.load %arg7[%c0_95, %c0_96, %c2_97, %c0_98, %c0_99] : memref<1x3x4x1x16xf32, #tpu.memory_space<vmem>>, vector<1x1x1x1x16xf32>
    %111 = vector.shape_cast %110 : vector<1x1x1x1x16xf32> to vector<1x16xf32>
    %112 = vector.broadcast %111 : vector<1x16xf32> to vector<8x16xf32>
    %113 = arith.addf %109, %112 : vector<8x16xf32>
    %c0_100 = arith.constant 0 : index
    %c1_101 = arith.constant 1 : index
    %c2_102 = arith.constant 2 : index
    %c0_103 = arith.constant 0 : index
    %c0_104 = arith.constant 0 : index
    %114 = vector.load %arg6[%c0_100, %c1_101, %c2_102, %c0_103, %c0_104] : memref<1x3x4x64x16xbf16, #tpu.memory_space<vmem>>, vector<1x1x1x64x16xbf16>
    %115 = vector.shape_cast %114 : vector<1x1x1x64x16xbf16> to vector<64x16xbf16>
    %cst_105 = arith.constant dense<0.000000e+00> : vector<8x16xf32>
    %116 = tpu.matmul %4, %115, %cst_105 {dimension_numbers = #tpu.dot_dimension_numbers<[1], [0], [0], [1], [0, 0, 1, 1], [], []>} : vector<8x64xbf16>, vector<64x16xbf16>, vector<8x16xf32> -> vector<8x16xf32>
    %c0_106 = arith.constant 0 : index
    %c1_107 = arith.constant 1 : index
    %c2_108 = arith.constant 2 : index
    %c0_109 = arith.constant 0 : index
    %c0_110 = arith.constant 0 : index
    %117 = vector.load %arg7[%c0_106, %c1_107, %c2_108, %c0_109, %c0_110] : memref<1x3x4x1x16xf32, #tpu.memory_space<vmem>>, vector<1x1x1x1x16xf32>
    %118 = vector.shape_cast %117 : vector<1x1x1x1x16xf32> to vector<1x16xf32>
    %119 = vector.broadcast %118 : vector<1x16xf32> to vector<8x16xf32>
    %120 = arith.addf %116, %119 : vector<8x16xf32>
    %c0_111 = arith.constant 0 : index
    %c2_112 = arith.constant 2 : index
    %c2_113 = arith.constant 2 : index
    %c0_114 = arith.constant 0 : index
    %c0_115 = arith.constant 0 : index
    %121 = vector.load %arg6[%c0_111, %c2_112, %c2_113, %c0_114, %c0_115] : memref<1x3x4x64x16xbf16, #tpu.memory_space<vmem>>, vector<1x1x1x64x16xbf16>
    %122 = vector.shape_cast %121 : vector<1x1x1x64x16xbf16> to vector<64x16xbf16>
    %cst_116 = arith.constant dense<0.000000e+00> : vector<8x16xf32>
    %123 = tpu.matmul %4, %122, %cst_116 {dimension_numbers = #tpu.dot_dimension_numbers<[1], [0], [0], [1], [0, 0, 1, 1], [], []>} : vector<8x64xbf16>, vector<64x16xbf16>, vector<8x16xf32> -> vector<8x16xf32>
    %c0_117 = arith.constant 0 : index
    %c2_118 = arith.constant 2 : index
    %c2_119 = arith.constant 2 : index
    %c0_120 = arith.constant 0 : index
    %c0_121 = arith.constant 0 : index
    %124 = vector.load %arg7[%c0_117, %c2_118, %c2_119, %c0_120, %c0_121] : memref<1x3x4x1x16xf32, #tpu.memory_space<vmem>>, vector<1x1x1x1x16xf32>
    %125 = vector.shape_cast %124 : vector<1x1x1x1x16xf32> to vector<1x16xf32>
    %126 = vector.broadcast %125 : vector<1x16xf32> to vector<8x16xf32>
    %127 = arith.addf %123, %126 : vector<8x16xf32>
    %cst_122 = arith.constant 2.500000e-01 : f32
    %128 = vector.broadcast %cst_122 : f32 to vector<8x16xf32>
    %129 = arith.mulf %113, %128 : vector<8x16xf32>
    %130 = arith.truncf %129 : vector<8x16xf32> to vector<8x16xbf16>
    %131 = vector.shape_cast %130 : vector<8x16xbf16> to vector<1x8x16xbf16>
    %132 = arith.truncf %120 : vector<8x16xf32> to vector<8x16xbf16>
    %133 = vector.shape_cast %132 : vector<8x16xbf16> to vector<1x8x16xbf16>
    %134 = arith.truncf %127 : vector<8x16xf32> to vector<8x16xbf16>
    %135 = vector.shape_cast %134 : vector<8x16xbf16> to vector<1x8x16xbf16>
    "tpu.trace_start"() <{level = 10 : i32, message = "bqd,bkd->bqk"}> : () -> ()
    %cst_123 = arith.constant dense<0.000000e+00> : vector<1x8x8xf32>
    %136 = tpu.matmul %131, %133, %cst_123 {dimension_numbers = #tpu.dot_dimension_numbers<[2], [2], [1], [1], [0, 0, 0, 1, 1, 1], [0], [0]>} : vector<1x8x16xbf16>, vector<1x8x16xbf16>, vector<1x8x8xf32> -> vector<1x8x8xf32>
    "tpu.trace_stop"() : () -> ()
    %137 = vector.broadcast %5 : vector<1x1x8xf32> to vector<1x8x8xf32>
    %138 = arith.addf %136, %137 : vector<1x8x8xf32>
    %cst_124 = arith.constant dense<0xFF800000> : vector<1x8xf32>
    %139 = vector.multi_reduction <maximumf>, %138, %cst_124 [2] : vector<1x8x8xf32> to vector<1x8xf32>
    %140 = vector.shape_cast %139 : vector<1x8xf32> to vector<1x8x1xf32>
    %141 = vector.broadcast %140 : vector<1x8x1xf32> to vector<1x8x8xf32>
    %142 = arith.subf %138, %141 : vector<1x8x8xf32>
    %143 = math.exp %142 : vector<1x8x8xf32>
    %cst_125 = arith.constant dense<0.000000e+00> : vector<1x8xf32>
    %144 = vector.multi_reduction <add>, %143, %cst_125 [2] : vector<1x8x8xf32> to vector<1x8xf32>
    %145 = vector.shape_cast %144 : vector<1x8xf32> to vector<1x8x1xf32>
    %146 = tpu.reciprocal %145 {approx = true} : vector<1x8x1xf32> -> vector<1x8x1xf32>
    %147 = vector.broadcast %146 : vector<1x8x1xf32> to vector<1x8x8xf32>
    %148 = arith.mulf %143, %147 : vector<1x8x8xf32>
    %149 = arith.truncf %148 : vector<1x8x8xf32> to vector<1x8x8xbf16>
    "tpu.trace_start"() <{level = 10 : i32, message = "bqk,bkd->bqd"}> : () -> ()
    %cst_126 = arith.constant dense<0.000000e+00> : vector<1x8x16xf32>
    %150 = tpu.matmul %149, %135, %cst_126 {dimension_numbers = #tpu.dot_dimension_numbers<[2], [1], [1], [2], [0, 0, 0, 1, 1, 2], [0], [0]>} : vector<1x8x8xbf16>, vector<1x8x16xbf16>, vector<1x8x16xf32> -> vector<1x8x16xf32>
    "tpu.trace_stop"() : () -> ()
    %151 = vector.shape_cast %150 : vector<1x8x16xf32> to vector<8x16xf32>
    %152 = arith.truncf %151 : vector<8x16xf32> to vector<8x16xbf16>
    %c0_127 = arith.constant 0 : index
    %c2_128 = arith.constant 2 : index
    %c0_129 = arith.constant 0 : index
    %c0_130 = arith.constant 0 : index
    %153 = vector.load %arg8[%c0_127, %c2_128, %c0_129, %c0_130] : memref<1x4x16x64xbf16, #tpu.memory_space<vmem>>, vector<1x1x16x64xbf16>
    %154 = vector.shape_cast %153 : vector<1x1x16x64xbf16> to vector<16x64xbf16>
    %cst_131 = arith.constant dense<0.000000e+00> : vector<8x64xf32>
    %155 = tpu.matmul %152, %154, %cst_131 {dimension_numbers = #tpu.dot_dimension_numbers<[1], [0], [0], [1], [0, 0, 1, 1], [], []>} : vector<8x16xbf16>, vector<16x64xbf16>, vector<8x64xf32> -> vector<8x64xf32>
    %156 = arith.addf %106, %155 : vector<8x64xf32>
    %c0_132 = arith.constant 0 : index
    %c0_133 = arith.constant 0 : index
    %c3 = arith.constant 3 : index
    %c0_134 = arith.constant 0 : index
    %c0_135 = arith.constant 0 : index
    %157 = vector.load %arg6[%c0_132, %c0_133, %c3, %c0_134, %c0_135] : memref<1x3x4x64x16xbf16, #tpu.memory_space<vmem>>, vector<1x1x1x64x16xbf16>
    %158 = vector.shape_cast %157 : vector<1x1x1x64x16xbf16> to vector<64x16xbf16>
    %cst_136 = arith.constant dense<0.000000e+00> : vector<8x16xf32>
    %159 = tpu.matmul %4, %158, %cst_136 {dimension_numbers = #tpu.dot_dimension_numbers<[1], [0], [0], [1], [0, 0, 1, 1], [], []>} : vector<8x64xbf16>, vector<64x16xbf16>, vector<8x16xf32> -> vector<8x16xf32>
    %c0_137 = arith.constant 0 : index
    %c0_138 = arith.constant 0 : index
    %c3_139 = arith.constant 3 : index
    %c0_140 = arith.constant 0 : index
    %c0_141 = arith.constant 0 : index
    %160 = vector.load %arg7[%c0_137, %c0_138, %c3_139, %c0_140, %c0_141] : memref<1x3x4x1x16xf32, #tpu.memory_space<vmem>>, vector<1x1x1x1x16xf32>
    %161 = vector.shape_cast %160 : vector<1x1x1x1x16xf32> to vector<1x16xf32>
    %162 = vector.broadcast %161 : vector<1x16xf32> to vector<8x16xf32>
    %163 = arith.addf %159, %162 : vector<8x16xf32>
    %c0_142 = arith.constant 0 : index
    %c1_143 = arith.constant 1 : index
    %c3_144 = arith.constant 3 : index
    %c0_145 = arith.constant 0 : index
    %c0_146 = arith.constant 0 : index
    %164 = vector.load %arg6[%c0_142, %c1_143, %c3_144, %c0_145, %c0_146] : memref<1x3x4x64x16xbf16, #tpu.memory_space<vmem>>, vector<1x1x1x64x16xbf16>
    %165 = vector.shape_cast %164 : vector<1x1x1x64x16xbf16> to vector<64x16xbf16>
    %cst_147 = arith.constant dense<0.000000e+00> : vector<8x16xf32>
    %166 = tpu.matmul %4, %165, %cst_147 {dimension_numbers = #tpu.dot_dimension_numbers<[1], [0], [0], [1], [0, 0, 1, 1], [], []>} : vector<8x64xbf16>, vector<64x16xbf16>, vector<8x16xf32> -> vector<8x16xf32>
    %c0_148 = arith.constant 0 : index
    %c1_149 = arith.constant 1 : index
    %c3_150 = arith.constant 3 : index
    %c0_151 = arith.constant 0 : index
    %c0_152 = arith.constant 0 : index
    %167 = vector.load %arg7[%c0_148, %c1_149, %c3_150, %c0_151, %c0_152] : memref<1x3x4x1x16xf32, #tpu.memory_space<vmem>>, vector<1x1x1x1x16xf32>
    %168 = vector.shape_cast %167 : vector<1x1x1x1x16xf32> to vector<1x16xf32>
    %169 = vector.broadcast %168 : vector<1x16xf32> to vector<8x16xf32>
    %170 = arith.addf %166, %169 : vector<8x16xf32>
    %c0_153 = arith.constant 0 : index
    %c2_154 = arith.constant 2 : index
    %c3_155 = arith.constant 3 : index
    %c0_156 = arith.constant 0 : index
    %c0_157 = arith.constant 0 : index
    %171 = vector.load %arg6[%c0_153, %c2_154, %c3_155, %c0_156, %c0_157] : memref<1x3x4x64x16xbf16, #tpu.memory_space<vmem>>, vector<1x1x1x64x16xbf16>
    %172 = vector.shape_cast %171 : vector<1x1x1x64x16xbf16> to vector<64x16xbf16>
    %cst_158 = arith.constant dense<0.000000e+00> : vector<8x16xf32>
    %173 = tpu.matmul %4, %172, %cst_158 {dimension_numbers = #tpu.dot_dimension_numbers<[1], [0], [0], [1], [0, 0, 1, 1], [], []>} : vector<8x64xbf16>, vector<64x16xbf16>, vector<8x16xf32> -> vector<8x16xf32>
    %c0_159 = arith.constant 0 : index
    %c2_160 = arith.constant 2 : index
    %c3_161 = arith.constant 3 : index
    %c0_162 = arith.constant 0 : index
    %c0_163 = arith.constant 0 : index
    %174 = vector.load %arg7[%c0_159, %c2_160, %c3_161, %c0_162, %c0_163] : memref<1x3x4x1x16xf32, #tpu.memory_space<vmem>>, vector<1x1x1x1x16xf32>
    %175 = vector.shape_cast %174 : vector<1x1x1x1x16xf32> to vector<1x16xf32>
    %176 = vector.broadcast %175 : vector<1x16xf32> to vector<8x16xf32>
    %177 = arith.addf %173, %176 : vector<8x16xf32>
    %cst_164 = arith.constant 2.500000e-01 : f32
    %178 = vector.broadcast %cst_164 : f32 to vector<8x16xf32>
    %179 = arith.mulf %163, %178 : vector<8x16xf32>
    %180 = arith.truncf %179 : vector<8x16xf32> to vector<8x16xbf16>
    %181 = vector.shape_cast %180 : vector<8x16xbf16> to vector<1x8x16xbf16>
    %182 = arith.truncf %170 : vector<8x16xf32> to vector<8x16xbf16>
    %183 = vector.shape_cast %182 : vector<8x16xbf16> to vector<1x8x16xbf16>
    %184 = arith.truncf %177 : vector<8x16xf32> to vector<8x16xbf16>
    %185 = vector.shape_cast %184 : vector<8x16xbf16> to vector<1x8x16xbf16>
    "tpu.trace_start"() <{level = 10 : i32, message = "bqd,bkd->bqk"}> : () -> ()
    %cst_165 = arith.constant dense<0.000000e+00> : vector<1x8x8xf32>
    %186 = tpu.matmul %181, %183, %cst_165 {dimension_numbers = #tpu.dot_dimension_numbers<[2], [2], [1], [1], [0, 0, 0, 1, 1, 1], [0], [0]>} : vector<1x8x16xbf16>, vector<1x8x16xbf16>, vector<1x8x8xf32> -> vector<1x8x8xf32>
    "tpu.trace_stop"() : () -> ()
    %187 = vector.broadcast %5 : vector<1x1x8xf32> to vector<1x8x8xf32>
    %188 = arith.addf %186, %187 : vector<1x8x8xf32>
    %cst_166 = arith.constant dense<0xFF800000> : vector<1x8xf32>
    %189 = vector.multi_reduction <maximumf>, %188, %cst_166 [2] : vector<1x8x8xf32> to vector<1x8xf32>
    %190 = vector.shape_cast %189 : vector<1x8xf32> to vector<1x8x1xf32>
    %191 = vector.broadcast %190 : vector<1x8x1xf32> to vector<1x8x8xf32>
    %192 = arith.subf %188, %191 : vector<1x8x8xf32>
    %193 = math.exp %192 : vector<1x8x8xf32>
    %cst_167 = arith.constant dense<0.000000e+00> : vector<1x8xf32>
    %194 = vector.multi_reduction <add>, %193, %cst_167 [2] : vector<1x8x8xf32> to vector<1x8xf32>
    %195 = vector.shape_cast %194 : vector<1x8xf32> to vector<1x8x1xf32>
    %196 = tpu.reciprocal %195 {approx = true} : vector<1x8x1xf32> -> vector<1x8x1xf32>
    %197 = vector.broadcast %196 : vector<1x8x1xf32> to vector<1x8x8xf32>
    %198 = arith.mulf %193, %197 : vector<1x8x8xf32>
    %199 = arith.truncf %198 : vector<1x8x8xf32> to vector<1x8x8xbf16>
    "tpu.trace_start"() <{level = 10 : i32, message = "bqk,bkd->bqd"}> : () -> ()
    %cst_168 = arith.constant dense<0.000000e+00> : vector<1x8x16xf32>
    %200 = tpu.matmul %199, %185, %cst_168 {dimension_numbers = #tpu.dot_dimension_numbers<[2], [1], [1], [2], [0, 0, 0, 1, 1, 2], [0], [0]>} : vector<1x8x8xbf16>, vector<1x8x16xbf16>, vector<1x8x16xf32> -> vector<1x8x16xf32>
    "tpu.trace_stop"() : () -> ()
    %201 = vector.shape_cast %200 : vector<1x8x16xf32> to vector<8x16xf32>
    %202 = arith.truncf %201 : vector<8x16xf32> to vector<8x16xbf16>
    %c0_169 = arith.constant 0 : index
    %c3_170 = arith.constant 3 : index
    %c0_171 = arith.constant 0 : index
    %c0_172 = arith.constant 0 : index
    %203 = vector.load %arg8[%c0_169, %c3_170, %c0_171, %c0_172] : memref<1x4x16x64xbf16, #tpu.memory_space<vmem>>, vector<1x1x16x64xbf16>
    %204 = vector.shape_cast %203 : vector<1x1x16x64xbf16> to vector<16x64xbf16>
    %cst_173 = arith.constant dense<0.000000e+00> : vector<8x64xf32>
    %205 = tpu.matmul %202, %204, %cst_173 {dimension_numbers = #tpu.dot_dimension_numbers<[1], [0], [0], [1], [0, 0, 1, 1], [], []>} : vector<8x16xbf16>, vector<16x64xbf16>, vector<8x64xf32> -> vector<8x64xf32>
    %206 = arith.addf %156, %205 : vector<8x64xf32>
    %c0_174 = arith.constant 0 : index
    %c0_175 = arith.constant 0 : index
    %c0_176 = arith.constant 0 : index
    %207 = vector.load %arg9[%c0_174, %c0_175, %c0_176] : memref<1x1x64xf32, #tpu.memory_space<vmem>>, vector<1x1x64xf32>
    %208 = vector.shape_cast %207 : vector<1x1x64xf32> to vector<1x64xf32>
    %209 = vector.broadcast %208 : vector<1x64xf32> to vector<8x64xf32>
    %210 = arith.addf %206, %209 : vector<8x64xf32>
    %211 = arith.addf %210, %3 : vector<8x64xf32>
    %c0_177 = arith.constant 0 : index
    %c0_178 = arith.constant 0 : index
    %c0_179 = arith.constant 0 : index
    %212 = vector.load %arg10[%c0_177, %c0_178, %c0_179] : memref<1x1x64xf32, #tpu.memory_space<vmem>>, vector<1x1x64xf32>
    %213 = vector.shape_cast %212 : vector<1x1x64xf32> to vector<1x64xf32>
    %c0_180 = arith.constant 0 : index
    %c0_181 = arith.constant 0 : index
    %c0_182 = arith.constant 0 : index
    %214 = vector.load %arg11[%c0_180, %c0_181, %c0_182] : memref<1x1x64xf32, #tpu.memory_space<vmem>>, vector<1x1x64xf32>
    %215 = vector.shape_cast %214 : vector<1x1x64xf32> to vector<1x64xf32>
    %cst_183 = arith.constant dense<0.000000e+00> : vector<8xf32>
    %216 = vector.multi_reduction <add>, %211, %cst_183 [1] : vector<8x64xf32> to vector<8xf32>
    %217 = vector.shape_cast %216 : vector<8xf32> to vector<8x1xf32>
    %cst_184 = arith.constant 6.400000e+01 : f32
    %218 = vector.broadcast %cst_184 : f32 to vector<8x1xf32>
    %219 = arith.divf %217, %218 : vector<8x1xf32>
    %220 = vector.broadcast %219 : vector<8x1xf32> to vector<8x64xf32>
    %221 = arith.subf %211, %220 : vector<8x64xf32>
    %222 = arith.mulf %221, %221 : vector<8x64xf32>
    %cst_185 = arith.constant dense<0.000000e+00> : vector<8xf32>
    %223 = vector.multi_reduction <add>, %222, %cst_185 [1] : vector<8x64xf32> to vector<8xf32>
    %224 = vector.shape_cast %223 : vector<8xf32> to vector<8x1xf32>
    %cst_186 = arith.constant 6.400000e+01 : f32
    %225 = vector.broadcast %cst_186 : f32 to vector<8x1xf32>
    %226 = arith.divf %224, %225 : vector<8x1xf32>
    %227 = vector.broadcast %219 : vector<8x1xf32> to vector<8x64xf32>
    %228 = arith.subf %211, %227 : vector<8x64xf32>
    %cst_187 = arith.constant 9.99999996E-13 : f32
    %229 = vector.broadcast %cst_187 : f32 to vector<8x1xf32>
    %230 = arith.addf %226, %229 : vector<8x1xf32>
    %231 = math.rsqrt %230 : vector<8x1xf32>
    %232 = vector.broadcast %231 : vector<8x1xf32> to vector<8x64xf32>
    %233 = arith.mulf %228, %232 : vector<8x64xf32>
    %234 = vector.broadcast %213 : vector<1x64xf32> to vector<8x64xf32>
    %235 = arith.mulf %233, %234 : vector<8x64xf32>
    %236 = vector.broadcast %215 : vector<1x64xf32> to vector<8x64xf32>
    %237 = arith.addf %235, %236 : vector<8x64xf32>
    %238 = arith.truncf %237 : vector<8x64xf32> to vector<8x64xbf16>
    %c0_188 = arith.constant 0 : index
    %c0_189 = arith.constant 0 : index
    %c0_190 = arith.constant 0 : index
    %239 = vector.load %arg12[%c0_188, %c0_189, %c0_190] : memref<1x64x128xbf16, #tpu.memory_space<vmem>>, vector<1x64x128xbf16>
    %240 = vector.shape_cast %239 : vector<1x64x128xbf16> to vector<64x128xbf16>
    %cst_191 = arith.constant dense<0.000000e+00> : vector<8x128xf32>
    %241 = tpu.matmul %238, %240, %cst_191 {dimension_numbers = #tpu.dot_dimension_numbers<[1], [0], [0], [1], [0, 0, 1, 1], [], []>} : vector<8x64xbf16>, vector<64x128xbf16>, vector<8x128xf32> -> vector<8x128xf32>
    %c0_192 = arith.constant 0 : index
    %c0_193 = arith.constant 0 : index
    %c0_194 = arith.constant 0 : index
    %242 = vector.load %arg13[%c0_192, %c0_193, %c0_194] : memref<1x1x128xf32, #tpu.memory_space<vmem>>, vector<1x1x128xf32>
    %243 = vector.shape_cast %242 : vector<1x1x128xf32> to vector<1x128xf32>
    %244 = vector.broadcast %243 : vector<1x128xf32> to vector<8x128xf32>
    %245 = arith.addf %241, %244 : vector<8x128xf32>
    %cst_195 = arith.constant 5.000000e-01 : f32
    %246 = vector.broadcast %cst_195 : f32 to vector<8x128xf32>
    %247 = arith.mulf %246, %245 : vector<8x128xf32>
    %cst_196 = arith.constant 4.471500e-02 : f32
    %248 = vector.broadcast %cst_196 : f32 to vector<8x128xf32>
    %249 = arith.mulf %248, %245 : vector<8x128xf32>
    %250 = arith.mulf %249, %245 : vector<8x128xf32>
    %251 = arith.mulf %250, %245 : vector<8x128xf32>
    %252 = arith.addf %245, %251 : vector<8x128xf32>
    %cst_197 = arith.constant 0.797884583 : f32
    %253 = vector.broadcast %cst_197 : f32 to vector<8x128xf32>
    %254 = arith.mulf %253, %252 : vector<8x128xf32>
    %255 = math.tanh %254 : vector<8x128xf32>
    %cst_198 = arith.constant 1.000000e+00 : f32
    %256 = vector.broadcast %cst_198 : f32 to vector<8x128xf32>
    %257 = arith.addf %256, %255 : vector<8x128xf32>
    %258 = arith.mulf %247, %257 : vector<8x128xf32>
    %259 = arith.truncf %258 : vector<8x128xf32> to vector<8x128xbf16>
    %c0_199 = arith.constant 0 : index
    %c0_200 = arith.constant 0 : index
    %c0_201 = arith.constant 0 : index
    %260 = vector.load %arg14[%c0_199, %c0_200, %c0_201] : memref<1x128x64xbf16, #tpu.memory_space<vmem>>, vector<1x128x64xbf16>
    %261 = vector.shape_cast %260 : vector<1x128x64xbf16> to vector<128x64xbf16>
    %cst_202 = arith.constant dense<0.000000e+00> : vector<8x64xf32>
    %262 = tpu.matmul %259, %261, %cst_202 {dimension_numbers = #tpu.dot_dimension_numbers<[1], [0], [0], [1], [0, 0, 1, 1], [], []>} : vector<8x128xbf16>, vector<128x64xbf16>, vector<8x64xf32> -> vector<8x64xf32>
    %c0_203 = arith.constant 0 : index
    %c0_204 = arith.constant 0 : index
    %c0_205 = arith.constant 0 : index
    %263 = vector.load %arg15[%c0_203, %c0_204, %c0_205] : memref<1x1x64xf32, #tpu.memory_space<vmem>>, vector<1x1x64xf32>
    %264 = vector.shape_cast %263 : vector<1x1x64xf32> to vector<1x64xf32>
    %265 = vector.broadcast %264 : vector<1x64xf32> to vector<8x64xf32>
    %266 = arith.addf %262, %265 : vector<8x64xf32>
    %267 = arith.addf %266, %237 : vector<8x64xf32>
    %c0_206 = arith.constant 0 : index
    %c0_207 = arith.constant 0 : index
    %c0_208 = arith.constant 0 : index
    %268 = vector.load %arg16[%c0_206, %c0_207, %c0_208] : memref<1x1x64xf32, #tpu.memory_space<vmem>>, vector<1x1x64xf32>
    %269 = vector.shape_cast %268 : vector<1x1x64xf32> to vector<1x64xf32>
    %c0_209 = arith.constant 0 : index
    %c0_210 = arith.constant 0 : index
    %c0_211 = arith.constant 0 : index
    %270 = vector.load %arg17[%c0_209, %c0_210, %c0_211] : memref<1x1x64xf32, #tpu.memory_space<vmem>>, vector<1x1x64xf32>
    %271 = vector.shape_cast %270 : vector<1x1x64xf32> to vector<1x64xf32>
    %cst_212 = arith.constant dense<0.000000e+00> : vector<8xf32>
    %272 = vector.multi_reduction <add>, %267, %cst_212 [1] : vector<8x64xf32> to vector<8xf32>
    %273 = vector.shape_cast %272 : vector<8xf32> to vector<8x1xf32>
    %cst_213 = arith.constant 6.400000e+01 : f32
    %274 = vector.broadcast %cst_213 : f32 to vector<8x1xf32>
    %275 = arith.divf %273, %274 : vector<8x1xf32>
    %276 = vector.broadcast %275 : vector<8x1xf32> to vector<8x64xf32>
    %277 = arith.subf %267, %276 : vector<8x64xf32>
    %278 = arith.mulf %277, %277 : vector<8x64xf32>
    %cst_214 = arith.constant dense<0.000000e+00> : vector<8xf32>
    %279 = vector.multi_reduction <add>, %278, %cst_214 [1] : vector<8x64xf32> to vector<8xf32>
    %280 = vector.shape_cast %279 : vector<8xf32> to vector<8x1xf32>
    %cst_215 = arith.constant 6.400000e+01 : f32
    %281 = vector.broadcast %cst_215 : f32 to vector<8x1xf32>
    %282 = arith.divf %280, %281 : vector<8x1xf32>
    %283 = vector.broadcast %275 : vector<8x1xf32> to vector<8x64xf32>
    %284 = arith.subf %267, %283 : vector<8x64xf32>
    %cst_216 = arith.constant 9.99999996E-13 : f32
    %285 = vector.broadcast %cst_216 : f32 to vector<8x1xf32>
    %286 = arith.addf %282, %285 : vector<8x1xf32>
    %287 = math.rsqrt %286 : vector<8x1xf32>
    %288 = vector.broadcast %287 : vector<8x1xf32> to vector<8x64xf32>
    %289 = arith.mulf %284, %288 : vector<8x64xf32>
    %290 = vector.broadcast %269 : vector<1x64xf32> to vector<8x64xf32>
    %291 = arith.mulf %289, %290 : vector<8x64xf32>
    %292 = vector.broadcast %271 : vector<1x64xf32> to vector<8x64xf32>
    %293 = arith.addf %291, %292 : vector<8x64xf32>
    %c0_217 = arith.constant 0 : index
    %c0_218 = arith.constant 0 : index
    %294 = vector.load %arg21[%c0_217, %c0_218] : memref<8x64xf32, #tpu.memory_space<vmem>>, vector<8x64xf32>
    tpu.vector_store %arg21[%c0_217, %c0_218], %293 {strides = array<i32>} : memref<8x64xf32, #tpu.memory_space<vmem>>, vector<8x64xf32>,
    %c2_i32 = arith.constant 2 : i32
    %295 = arith.cmpi eq, %arg1, %c2_i32 : i32
    %296 = arith.extui %295 : i1 to i32
    %c0_i32_219 = arith.constant 0 : i32
    %297 = arith.cmpi ne, %296, %c0_i32_219 : i32
    scf.if %297 {
      %298 = arith.truncf %293 : vector<8x64xf32> to vector<8x64xbf16>
      %c0_220 = arith.constant 0 : index
      %c0_221 = arith.constant 0 : index
      %299 = vector.load %arg18[%c0_220, %c0_221] : memref<64x128xbf16, #tpu.memory_space<vmem>>, vector<64x128xbf16>
      %cst_222 = arith.constant dense<0.000000e+00> : vector<8x128xf32>
      %300 = tpu.matmul %298, %299, %cst_222 {dimension_numbers = #tpu.dot_dimension_numbers<[1], [0], [0], [1], [0, 0, 1, 1], [], []>} : vector<8x64xbf16>, vector<64x128xbf16>, vector<8x128xf32> -> vector<8x128xf32>
      %c0_223 = arith.constant 0 : index
      %c0_224 = arith.constant 0 : index
      %301 = vector.load %arg19[%c0_223, %c0_224] : memref<1x128xf32, #tpu.memory_space<vmem>>, vector<1x128xf32>
      %302 = vector.broadcast %301 : vector<1x128xf32> to vector<8x128xf32>
      %303 = arith.addf %300, %302 : vector<8x128xf32>
      %304 = vector.shape_cast %303 : vector<8x128xf32> to vector<1x8x128xf32>
      %c0_225 = arith.constant 0 : index
      %c0_226 = arith.constant 0 : index
      %c0_227 = arith.constant 0 : index
      %305 = vector.load %arg20[%c0_225, %c0_226, %c0_227] : memref<1x8x128xf32, #tpu.memory_space<vmem>>, vector<1x8x128xf32>
      tpu.vector_store %arg20[%c0_225, %c0_226, %c0_227], %304 {strides = array<i32>} : memref<1x8x128xf32, #tpu.memory_space<vmem>>, vector<1x8x128xf32>,
    } else {
    }
    return
  }
  func.func @transform_0(%arg0: i32, %arg1: i32) -> (i32, i32, i32) {
    %c0_i32 = arith.constant 0 : i32
    %c0_i32_0 = arith.constant 0 : i32
    %c0_i32_1 = arith.constant 0 : i32
    return %arg0, %c0_i32, %c0_i32_0 : i32, i32, i32
  }
  func.func @transform_1(%arg0: i32, %arg1: i32) -> (i32, i32, i32) {
    %c0_i32 = arith.constant 0 : i32
    %c0_i32_0 = arith.constant 0 : i32
    %c0_i32_1 = arith.constant 0 : i32
    return %arg0, %c0_i32, %c0_i32_0 : i32, i32, i32
  }
  func.func @transform_2(%arg0: i32, %arg1: i32) -> (i32, i32) {
    %c0_i32 = arith.constant 0 : i32
    %c0_i32_0 = arith.constant 0 : i32
    %c0_i32_1 = arith.constant 0 : i32
    return %c0_i32, %c0_i32_0 : i32, i32
  }
  func.func @transform_3(%arg0: i32, %arg1: i32) -> (i32, i32) {
    %c0_i32 = arith.constant 0 : i32
    %c0_i32_0 = arith.constant 0 : i32
    %c0_i32_1 = arith.constant 0 : i32
    return %c0_i32, %c0_i32_0 : i32, i32
  }
  func.func @transform_4(%arg0: i32, %arg1: i32) -> (i32, i32, i32, i32, i32) {
    %c0_i32 = arith.constant 0 : i32
    %c0_i32_0 = arith.constant 0 : i32
    %c0_i32_1 = arith.constant 0 : i32
    %c0_i32_2 = arith.constant 0 : i32
    %c0_i32_3 = arith.constant 0 : i32
    return %arg1, %c0_i32, %c0_i32_0, %c0_i32_1, %c0_i32_2 : i32, i32, i32, i32, i32
  }
  func.func @transform_5(%arg0: i32, %arg1: i32) -> (i32, i32, i32, i32, i32) {
    %c0_i32 = arith.constant 0 : i32
    %c0_i32_0 = arith.constant 0 : i32
    %c0_i32_1 = arith.constant 0 : i32
    %c0_i32_2 = arith.constant 0 : i32
    %c0_i32_3 = arith.constant 0 : i32
    return %arg1, %c0_i32, %c0_i32_0, %c0_i32_1, %c0_i32_2 : i32, i32, i32, i32, i32
  }
  func.func @transform_6(%arg0: i32, %arg1: i32) -> (i32, i32, i32, i32) {
    %c0_i32 = arith.constant 0 : i32
    %c0_i32_0 = arith.constant 0 : i32
    %c0_i32_1 = arith.constant 0 : i32
    %c0_i32_2 = arith.constant 0 : i32
    return %arg1, %c0_i32, %c0_i32_0, %c0_i32_1 : i32, i32, i32, i32
  }
  func.func @transform_7(%arg0: i32, %arg1: i32) -> (i32, i32, i32) {
    %c0_i32 = arith.constant 0 : i32
    %c0_i32_0 = arith.constant 0 : i32
    %c0_i32_1 = arith.constant 0 : i32
    return %arg1, %c0_i32, %c0_i32_0 : i32, i32, i32
  }
  func.func @transform_8(%arg0: i32, %arg1: i32) -> (i32, i32, i32) {
    %c0_i32 = arith.constant 0 : i32
    %c0_i32_0 = arith.constant 0 : i32
    %c0_i32_1 = arith.constant 0 : i32
    return %arg1, %c0_i32, %c0_i32_0 : i32, i32, i32
  }
  func.func @transform_9(%arg0: i32, %arg1: i32) -> (i32, i32, i32) {
    %c0_i32 = arith.constant 0 : i32
    %c0_i32_0 = arith.constant 0 : i32
    %c0_i32_1 = arith.constant 0 : i32
    return %arg1, %c0_i32, %c0_i32_0 : i32, i32, i32
  }
  func.func @transform_10(%arg0: i32, %arg1: i32) -> (i32, i32, i32) {
    %c0_i32 = arith.constant 0 : i32
    %c0_i32_0 = arith.constant 0 : i32
    %c0_i32_1 = arith.constant 0 : i32
    return %arg1, %c0_i32, %c0_i32_0 : i32, i32, i32
  }
  func.func @transform_11(%arg0: i32, %arg1: i32) -> (i32, i32, i32) {
    %c0_i32 = arith.constant 0 : i32
    %c0_i32_0 = arith.constant 0 : i32
    %c0_i32_1 = arith.constant 0 : i32
    return %arg1, %c0_i32, %c0_i32_0 : i32, i32, i32
  }
  func.func @transform_12(%arg0: i32, %arg1: i32) -> (i32, i32, i32) {
    %c0_i32 = arith.constant 0 : i32
    %c0_i32_0 = arith.constant 0 : i32
    %c0_i32_1 = arith.constant 0 : i32
    return %arg1, %c0_i32, %c0_i32_0 : i32, i32, i32
  }
  func.func @transform_13(%arg0: i32, %arg1: i32) -> (i32, i32, i32) {
    %c0_i32 = arith.constant 0 : i32
    %c0_i32_0 = arith.constant 0 : i32
    %c0_i32_1 = arith.constant 0 : i32
    return %arg1, %c0_i32, %c0_i32_0 : i32, i32, i32
  }
  func.func @transform_14(%arg0: i32, %arg1: i32) -> (i32, i32, i32) {
    %c0_i32 = arith.constant 0 : i32
    %c0_i32_0 = arith.constant 0 : i32
    %c0_i32_1 = arith.constant 0 : i32
    return %arg1, %c0_i32, %c0_i32_0 : i32, i32, i32
  }
  func.func @transform_15(%arg0: i32, %arg1: i32) -> (i32, i32, i32) {
    %c0_i32 = arith.constant 0 : i32
    %c0_i32_0 = arith.constant 0 : i32
    %c0_i32_1 = arith.constant 0 : i32
    return %arg1, %c0_i32, %c0_i32_0 : i32, i32, i32
  }
  func.func @transform_16(%arg0: i32, %arg1: i32) -> (i32, i32) {
    %c0_i32 = arith.constant 0 : i32
    %c0_i32_0 = arith.constant 0 : i32
    %c0_i32_1 = arith.constant 0 : i32
    return %c0_i32, %c0_i32_0 : i32, i32
  }
  func.func @transform_17(%arg0: i32, %arg1: i32) -> (i32, i32) {
    %c0_i32 = arith.constant 0 : i32
    %c0_i32_0 = arith.constant 0 : i32
    %c0_i32_1 = arith.constant 0 : i32
    return %c0_i32, %c0_i32_0 : i32, i32
  }
  func.func @transform_18(%arg0: i32, %arg1: i32) -> (i32, i32, i32) {
    %c0_i32 = arith.constant 0 : i32
    %c0_i32_0 = arith.constant 0 : i32
    %c0_i32_1 = arith.constant 0 : i32
    return %arg0, %c0_i32, %c0_i32_0 : i32, i32, i32
  }
}

</mosaic_0001>

<llo_original>
// kernel: tpu_custom_call.1
$region0: #{tpu_custom_call.1}
  #allocation0 [shape = 'u32[]', space=smem, size = 0x4, offset = 0x4, fixed_abs, tag = 'smem constant byte address 0x4 - core index']
  #allocation1 [shape = 'u32[144,128]{1,0:T(1,128)}', space=vmem, size = 0x12000, scoped, tag = 'internal scratch']
  #allocation2 [shape = 'f32[8,64]{1,0:T(8,128)}', space=vmem, size = 0x1000, scoped, tag = 'scratch operand']
  %s0 = inlined_call_operand.vmem [shape: f32[2,1,8], index: 0, kind: input, shape index: {}]
  %s1 = inlined_call_operand.vmem [shape: f32[2,8,64], index: 1, kind: input, shape index: {}]
  %s2 = inlined_call_operand.vmem [shape: f32[1,64], index: 2, kind: input, shape index: {}]
  %s3 = inlined_call_operand.vmem [shape: f32[1,64], index: 3, kind: input, shape index: {}]
  %s4 = inlined_call_operand.vmem [shape: bf16[3,3,4,64,16], index: 4, kind: input, shape index: {}]
  %s5 = inlined_call_operand.vmem [shape: f32[3,3,4,1,16], index: 5, kind: input, shape index: {}]
  %s6 = inlined_call_operand.vmem [shape: bf16[3,4,16,64], index: 6, kind: input, shape index: {}]
  %s7 = inlined_call_operand.vmem [shape: f32[3,1,64], index: 7, kind: input, shape index: {}]
  %s8 = inlined_call_operand.vmem [shape: f32[3,1,64], index: 8, kind: input, shape index: {}]
  %s9 = inlined_call_operand.vmem [shape: f32[3,1,64], index: 9, kind: input, shape index: {}]
  %s10 = inlined_call_operand.vmem [shape: bf16[3,64,128], index: 10, kind: input, shape index: {}]
  %s11 = inlined_call_operand.vmem [shape: f32[3,1,128], index: 11, kind: input, shape index: {}]
  %s12 = inlined_call_operand.vmem [shape: bf16[3,128,64], index: 12, kind: input, shape index: {}]
  %s13 = inlined_call_operand.vmem [shape: f32[3,1,64], index: 13, kind: input, shape index: {}]
  %s14 = inlined_call_operand.vmem [shape: f32[3,1,64], index: 14, kind: input, shape index: {}]
  %s15 = inlined_call_operand.vmem [shape: f32[3,1,64], index: 15, kind: input, shape index: {}]
  %s16 = inlined_call_operand.vmem [shape: bf16[64,128], index: 16, kind: input, shape index: {}]
  %s17 = inlined_call_operand.vmem [shape: f32[1,128], index: 17, kind: input, shape index: {}]
  %s18 = inlined_call_operand.hbm [shape: f32[2,8,128], index: 18, kind: output, shape index: {}]
  %s19 = sld [smem:[#allocation0]]
  $region113: #{tpu_custom_call.1} parent=0
    _
  %s21 = ssub.s32 1, %s19
  %s22 = scalar_select 0, %s21, %s19
  $region1: #{tpu_custom_call.1} parent=0
    #allocation3 [shape = 'u8[8192]{0}', space=vmem, size = 0x2000, scoped, tag = 'output window, operand 0']
    #allocation4 [shape = 's32[2]{0}', space=sflag, size = 0x8, scoped, tag = 'scoped memory for tpu_custom_call.1']
    %23 = vsyncpa [#allocation4], 0
    %s24 = scalar_lea.sflag [#allocation4], 1
    %25 = vsyncpa %s24, 0
    loop: start=0, step=1, limit=8
    $region2: #{tpu_custom_call.1} parent=1 // loop_pre_header
      _
    $region3: #{tpu_custom_call.1} parent=1 // loop_header
      %s27 = sphi 0, %s31
      %p28 = scmp.ge.s32.totalorder %s27, 8
      %s34 = sphi 0, %s46
      %s35 = sphi 0, %s42
      %s36 = sphi 0, %s34
      %s37 = sphi 0, %s35
      %s38 = sphi 0, %s36
      %s39 = sphi 0, %s37
      %s49 = sphi 0, %s51
      %s52 = sphi 0, %s49
      %s53 = sphi 0, %s52
      %s69 = sphi 0, %s53
      %s75 = sphi 0, %s77
      %s78 = sphi 0, %s75
      %s79 = sphi 0, %s78
      %s95 = sphi 0, %s79
      %s99 = sphi 0, %s99
      %s101 = sphi 0, %s99
      %s102 = sphi 0, %s101
      %s116 = sphi 0, %s102
      %s120 = sphi 0, %s120
      %s122 = sphi 0, %s120
      %s123 = sphi 0, %s122
      %s137 = sphi 0, %s123
      %s143 = sphi 0, %s145
      %s146 = sphi 0, %s143
      %s147 = sphi 0, %s146
      %s163 = sphi 0, %s147
      %s169 = sphi 0, %s171
      %s172 = sphi 0, %s169
      %s173 = sphi 0, %s172
      %s189 = sphi 0, %s173
      %s195 = sphi 0, %s197
      %s198 = sphi 0, %s195
      %s199 = sphi 0, %s198
      %s215 = sphi 0, %s199
      %s221 = sphi 0, %s223
      %s224 = sphi 0, %s221
      %s225 = sphi 0, %s224
      %s241 = sphi 0, %s225
      %s247 = sphi 0, %s249
      %s250 = sphi 0, %s247
      %s251 = sphi 0, %s250
      %s267 = sphi 0, %s251
      %s273 = sphi 0, %s275
      %s276 = sphi 0, %s273
      %s277 = sphi 0, %s276
      %s293 = sphi 0, %s277
      %s299 = sphi 0, %s301
      %s302 = sphi 0, %s299
      %s303 = sphi 0, %s302
      %s319 = sphi 0, %s303
      %s325 = sphi 0, %s327
      %s328 = sphi 0, %s325
      %s329 = sphi 0, %s328
      %s345 = sphi 0, %s329
      %s351 = sphi 0, %s353
      %s354 = sphi 0, %s351
      %s355 = sphi 0, %s354
      %s371 = sphi 0, %s355
      %s377 = sphi 0, %s379
      %s380 = sphi 0, %s377
      %s381 = sphi 0, %s380
      %s397 = sphi 0, %s381
      %s403 = sphi 0, %s405
      %s406 = sphi 0, %s403
      %s407 = sphi 0, %s406
      %s423 = sphi 0, %s407
      %s429 = sphi 0, %s431
      %s432 = sphi 0, %s429
      %s433 = sphi 0, %s432
      %s449 = sphi 0, %s433
      %s453 = sphi 0, %s453
      %s455 = sphi 0, %s453
      %s456 = sphi 0, %s455
      %s470 = sphi 0, %s456
      %s474 = sphi 0, %s474
      %s476 = sphi 0, %s474
      %s477 = sphi 0, %s476
      %s491 = sphi 0, %s477
      %s497 = sphi 0, %s499
      %s500 = sphi 0, %s497
      %s501 = sphi 0, %s500
      %s517 = sphi 0, %s501
    $region4: #{tpu_custom_call.1} parent=1 // loop_header_branch
      %30 = sbr.rel (%p28) target = $region8
    $region5: #{tpu_custom_call.1} parent=1 // loop_body
      %s32 = ssub.s32 %s27, 1
      %s33 = ssub.s32 %s27, 2
      %s40 = sadd.s32 1, %s35
      %p41 = scmp.ge.s32.totalorder %s40, 3
      %s42 = scalar_select %p41, 0, %s40
      %s43 = sadd.s32 1, %s34
      %s44 = scalar_select %p41, %s43, %s34
      %p45 = scmp.ge.s32.totalorder %s44, 2
      %s46 = scalar_select %p45, 0, %s44
      %s47 = ssub.s32 %s34, %s46
      %p48 = scmp.eq.s32.totalorder %s47, 0
      %s50 = sadd.s32 %s49, 1
      %s51 = scalar_select %p48, %s49, %s50
      %p54 = pneg %p48
      %p55 = scmp.eq.s32.totalorder %s27, 5
      %p56 = por %p54, %p55
      %p57 = scmp.ne.s32.totalorder %s49, %s52
      %p58 = scmp.eq.s32.totalorder %s27, 0
      %p59 = por %p57, %p58
      %p60 = scmp.ne.s32.totalorder %s49, %s52
      %p61 = scmp.eq.s32.totalorder %s32, 5
      %p62 = por %p60, %p61
      %p63 = scmp.ne.s32.totalorder %s52, %s53
      %p64 = scmp.eq.s32.totalorder %s32, 0
      %p65 = por %p63, %p64
      %p66 = scmp.ne.s32.totalorder %s52, %s53
      %p67 = scmp.eq.s32.totalorder %s33, 5
      %p68 = por %p66, %p67
      %p70 = scmp.ne.s32.totalorder %s53, %s69
      %p71 = scmp.eq.s32.totalorder %s33, 0
      %p72 = por %p70, %p71
      %s73 = ssub.s32 %s34, %s46
      %p74 = scmp.eq.s32.totalorder %s73, 0
      %s76 = sadd.s32 %s75, 1
      %s77 = scalar_select %p74, %s75, %s76
      %p80 = pneg %p74
      %p81 = scmp.eq.s32.totalorder %s27, 5
      %p82 = por %p80, %p81
      %p83 = scmp.ne.s32.totalorder %s75, %s78
      %p84 = scmp.eq.s32.totalorder %s27, 0
      %p85 = por %p83, %p84
      %p86 = scmp.ne.s32.totalorder %s75, %s78
      %p87 = scmp.eq.s32.totalorder %s32, 5
      %p88 = por %p86, %p87
      %p89 = scmp.ne.s32.totalorder %s78, %s79
      %p90 = scmp.eq.s32.totalorder %s32, 0
      %p91 = por %p89, %p90
      %p92 = scmp.ne.s32.totalorder %s78, %s79
      %p93 = scmp.eq.s32.totalorder %s33, 5
      %p94 = por %p92, %p93
      %p96 = scmp.ne.s32.totalorder %s79, %s95
      %p97 = scmp.eq.s32.totalorder %s33, 0
      %p98 = por %p96, %p97
      %s100 = sadd.s32 %s99, 1
      %p103 = scmp.eq.s32.totalorder %s27, 5
      %p104 = scmp.ne.s32.totalorder %s99, %s101
      %p105 = scmp.eq.s32.totalorder %s27, 0
      %p106 = por %p104, %p105
      %p107 = scmp.ne.s32.totalorder %s99, %s101
      %p108 = scmp.eq.s32.totalorder %s32, 5
      %p109 = por %p107, %p108
      %p110 = scmp.ne.s32.totalorder %s101, %s102
      %p111 = scmp.eq.s32.totalorder %s32, 0
      %p112 = por %p110, %p111
      %p113 = scmp.ne.s32.totalorder %s101, %s102
      %p114 = scmp.eq.s32.totalorder %s33, 5
      %p115 = por %p113, %p114
      %p117 = scmp.ne.s32.totalorder %s102, %s116
      %p118 = scmp.eq.s32.totalorder %s33, 0
      %p119 = por %p117, %p118
      %s121 = sadd.s32 %s120, 1
      %p124 = scmp.eq.s32.totalorder %s27, 5
      %p125 = scmp.ne.s32.totalorder %s120, %s122
      %p126 = scmp.eq.s32.totalorder %s27, 0
      %p127 = por %p125, %p126
      %p128 = scmp.ne.s32.totalorder %s120, %s122
      %p129 = scmp.eq.s32.totalorder %s32, 5
      %p130 = por %p128, %p129
      %p131 = scmp.ne.s32.totalorder %s122, %s123
      %p132 = scmp.eq.s32.totalorder %s32, 0
      %p133 = por %p131, %p132
      %p134 = scmp.ne.s32.totalorder %s122, %s123
      %p135 = scmp.eq.s32.totalorder %s33, 5
      %p136 = por %p134, %p135
      %p138 = scmp.ne.s32.totalorder %s123, %s137
      %p139 = scmp.eq.s32.totalorder %s33, 0
      %p140 = por %p138, %p139
      %s141 = ssub.s32 %s35, %s42
      %p142 = scmp.eq.s32.totalorder %s141, 0
      %s144 = sadd.s32 %s143, 1
      %s145 = scalar_select %p142, %s143, %s144
      %p148 = pneg %p142
      %p149 = scmp.eq.s32.totalorder %s27, 5
      %p150 = por %p148, %p149
      %p151 = scmp.ne.s32.totalorder %s143, %s146
      %p152 = scmp.eq.s32.totalorder %s27, 0
      %p153 = por %p151, %p152
      %p154 = scmp.ne.s32.totalorder %s143, %s146
      %p155 = scmp.eq.s32.totalorder %s32, 5
      %p156 = por %p154, %p155
      %p157 = scmp.ne.s32.totalorder %s146, %s147
      %p158 = scmp.eq.s32.totalorder %s32, 0
      %p159 = por %p157, %p158
      %p160 = scmp.ne.s32.totalorder %s146, %s147
      %p161 = scmp.eq.s32.totalorder %s33, 5
      %p162 = por %p160, %p161
      %p164 = scmp.ne.s32.totalorder %s147, %s163
      %p165 = scmp.eq.s32.totalorder %s33, 0
      %p166 = por %p164, %p165
      %s167 = ssub.s32 %s35, %s42
      %p168 = scmp.eq.s32.totalorder %s167, 0
      %s170 = sadd.s32 %s169, 1
      %s171 = scalar_select %p168, %s169, %s170
      %p174 = pneg %p168
      %p175 = scmp.eq.s32.totalorder %s27, 5
      %p176 = por %p174, %p175
      %p177 = scmp.ne.s32.totalorder %s169, %s172
      %p178 = scmp.eq.s32.totalorder %s27, 0
      %p179 = por %p177, %p178
      %p180 = scmp.ne.s32.totalorder %s169, %s172
      %p181 = scmp.eq.s32.totalorder %s32, 5
      %p182 = por %p180, %p181
      %p183 = scmp.ne.s32.totalorder %s172, %s173
      %p184 = scmp.eq.s32.totalorder %s32, 0
      %p185 = por %p183, %p184
      %p186 = scmp.ne.s32.totalorder %s172, %s173
      %p187 = scmp.eq.s32.totalorder %s33, 5
      %p188 = por %p186, %p187
      %p190 = scmp.ne.s32.totalorder %s173, %s189
      %p191 = scmp.eq.s32.totalorder %s33, 0
      %p192 = por %p190, %p191
      %s193 = ssub.s32 %s35, %s42
      %p194 = scmp.eq.s32.totalorder %s193, 0
      %s196 = sadd.s32 %s195, 1
      %s197 = scalar_select %p194, %s195, %s196
      %p200 = pneg %p194
      %p201 = scmp.eq.s32.totalorder %s27, 5
      %p202 = por %p200, %p201
      %p203 = scmp.ne.s32.totalorder %s195, %s198
      %p204 = scmp.eq.s32.totalorder %s27, 0
      %p205 = por %p203, %p204
      %p206 = scmp.ne.s32.totalorder %s195, %s198
      %p207 = scmp.eq.s32.totalorder %s32, 5
      %p208 = por %p206, %p207
      %p209 = scmp.ne.s32.totalorder %s198, %s199
      %p210 = scmp.eq.s32.totalorder %s32, 0
      %p211 = por %p209, %p210
      %p212 = scmp.ne.s32.totalorder %s198, %s199
      %p213 = scmp.eq.s32.totalorder %s33, 5
      %p214 = por %p212, %p213
      %p216 = scmp.ne.s32.totalorder %s199, %s215
      %p217 = scmp.eq.s32.totalorder %s33, 0
      %p218 = por %p216, %p217
      %s219 = ssub.s32 %s35, %s42
      %p220 = scmp.eq.s32.totalorder %s219, 0
      %s222 = sadd.s32 %s221, 1
      %s223 = scalar_select %p220, %s221, %s222
      %p226 = pneg %p220
      %p227 = scmp.eq.s32.totalorder %s27, 5
      %p228 = por %p226, %p227
      %p229 = scmp.ne.s32.totalorder %s221, %s224
      %p230 = scmp.eq.s32.totalorder %s27, 0
      %p231 = por %p229, %p230
      %p232 = scmp.ne.s32.totalorder %s221, %s224
      %p233 = scmp.eq.s32.totalorder %s32, 5
      %p234 = por %p232, %p233
      %p235 = scmp.ne.s32.totalorder %s224, %s225
      %p236 = scmp.eq.s32.totalorder %s32, 0
      %p237 = por %p235, %p236
      %p238 = scmp.ne.s32.totalorder %s224, %s225
      %p239 = scmp.eq.s32.totalorder %s33, 5
      %p240 = por %p238, %p239
      %p242 = scmp.ne.s32.totalorder %s225, %s241
      %p243 = scmp.eq.s32.totalorder %s33, 0
      %p244 = por %p242, %p243
      %s245 = ssub.s32 %s35, %s42
      %p246 = scmp.eq.s32.totalorder %s245, 0
      %s248 = sadd.s32 %s247, 1
      %s249 = scalar_select %p246, %s247, %s248
      %p252 = pneg %p246
      %p253 = scmp.eq.s32.totalorder %s27, 5
      %p254 = por %p252, %p253
      %p255 = scmp.ne.s32.totalorder %s247, %s250
      %p256 = scmp.eq.s32.totalorder %s27, 0
      %p257 = por %p255, %p256
      %p258 = scmp.ne.s32.totalorder %s247, %s250
      %p259 = scmp.eq.s32.totalorder %s32, 5
      %p260 = por %p258, %p259
      %p261 = scmp.ne.s32.totalorder %s250, %s251
      %p262 = scmp.eq.s32.totalorder %s32, 0
      %p263 = por %p261, %p262
      %p264 = scmp.ne.s32.totalorder %s250, %s251
      %p265 = scmp.eq.s32.totalorder %s33, 5
      %p266 = por %p264, %p265
      %p268 = scmp.ne.s32.totalorder %s251, %s267
      %p269 = scmp.eq.s32.totalorder %s33, 0
      %p270 = por %p268, %p269
      %s271 = ssub.s32 %s35, %s42
      %p272 = scmp.eq.s32.totalorder %s271, 0
      %s274 = sadd.s32 %s273, 1
      %s275 = scalar_select %p272, %s273, %s274
      %p278 = pneg %p272
      %p279 = scmp.eq.s32.totalorder %s27, 5
      %p280 = por %p278, %p279
      %p281 = scmp.ne.s32.totalorder %s273, %s276
      %p282 = scmp.eq.s32.totalorder %s27, 0
      %p283 = por %p281, %p282
      %p284 = scmp.ne.s32.totalorder %s273, %s276
      %p285 = scmp.eq.s32.totalorder %s32, 5
      %p286 = por %p284, %p285
      %p287 = scmp.ne.s32.totalorder %s276, %s277
      %p288 = scmp.eq.s32.totalorder %s32, 0
      %p289 = por %p287, %p288
      %p290 = scmp.ne.s32.totalorder %s276, %s277
      %p291 = scmp.eq.s32.totalorder %s33, 5
      %p292 = por %p290, %p291
      %p294 = scmp.ne.s32.totalorder %s277, %s293
      %p295 = scmp.eq.s32.totalorder %s33, 0
      %p296 = por %p294, %p295
      %s297 = ssub.s32 %s35, %s42
      %p298 = scmp.eq.s32.totalorder %s297, 0
      %s300 = sadd.s32 %s299, 1
      %s301 = scalar_select %p298, %s299, %s300
      %p304 = pneg %p298
      %p305 = scmp.eq.s32.totalorder %s27, 5
      %p306 = por %p304, %p305
      %p307 = scmp.ne.s32.totalorder %s299, %s302
      %p308 = scmp.eq.s32.totalorder %s27, 0
      %p309 = por %p307, %p308
      %p310 = scmp.ne.s32.totalorder %s299, %s302
      %p311 = scmp.eq.s32.totalorder %s32, 5
      %p312 = por %p310, %p311
      %p313 = scmp.ne.s32.totalorder %s302, %s303
      %p314 = scmp.eq.s32.totalorder %s32, 0
      %p315 = por %p313, %p314
      %p316 = scmp.ne.s32.totalorder %s302, %s303
      %p317 = scmp.eq.s32.totalorder %s33, 5
      %p318 = por %p316, %p317
      %p320 = scmp.ne.s32.totalorder %s303, %s319
      %p321 = scmp.eq.s32.totalorder %s33, 0
      %p322 = por %p320, %p321
      %s323 = ssub.s32 %s35, %s42
      %p324 = scmp.eq.s32.totalorder %s323, 0
      %s326 = sadd.s32 %s325, 1
      %s327 = scalar_select %p324, %s325, %s326
      %p330 = pneg %p324
      %p331 = scmp.eq.s32.totalorder %s27, 5
      %p332 = por %p330, %p331
      %p333 = scmp.ne.s32.totalorder %s325, %s328
      %p334 = scmp.eq.s32.totalorder %s27, 0
      %p335 = por %p333, %p334
      %p336 = scmp.ne.s32.totalorder %s325, %s328
      %p337 = scmp.eq.s32.totalorder %s32, 5
      %p338 = por %p336, %p337
      %p339 = scmp.ne.s32.totalorder %s328, %s329
      %p340 = scmp.eq.s32.totalorder %s32, 0
      %p341 = por %p339, %p340
      %p342 = scmp.ne.s32.totalorder %s328, %s329
      %p343 = scmp.eq.s32.totalorder %s33, 5
      %p344 = por %p342, %p343
      %p346 = scmp.ne.s32.totalorder %s329, %s345
      %p347 = scmp.eq.s32.totalorder %s33, 0
      %p348 = por %p346, %p347
      %s349 = ssub.s32 %s35, %s42
      %p350 = scmp.eq.s32.totalorder %s349, 0
      %s352 = sadd.s32 %s351, 1
      %s353 = scalar_select %p350, %s351, %s352
      %p356 = pneg %p350
      %p357 = scmp.eq.s32.totalorder %s27, 5
      %p358 = por %p356, %p357
      %p359 = scmp.ne.s32.totalorder %s351, %s354
      %p360 = scmp.eq.s32.totalorder %s27, 0
      %p361 = por %p359, %p360
      %p362 = scmp.ne.s32.totalorder %s351, %s354
      %p363 = scmp.eq.s32.totalorder %s32, 5
      %p364 = por %p362, %p363
      %p365 = scmp.ne.s32.totalorder %s354, %s355
      %p366 = scmp.eq.s32.totalorder %s32, 0
      %p367 = por %p365, %p366
      %p368 = scmp.ne.s32.totalorder %s354, %s355
      %p369 = scmp.eq.s32.totalorder %s33, 5
      %p370 = por %p368, %p369
      %p372 = scmp.ne.s32.totalorder %s355, %s371
      %p373 = scmp.eq.s32.totalorder %s33, 0
      %p374 = por %p372, %p373
      %s375 = ssub.s32 %s35, %s42
      %p376 = scmp.eq.s32.totalorder %s375, 0
      %s378 = sadd.s32 %s377, 1
      %s379 = scalar_select %p376, %s377, %s378
      %p382 = pneg %p376
      %p383 = scmp.eq.s32.totalorder %s27, 5
      %p384 = por %p382, %p383
      %p385 = scmp.ne.s32.totalorder %s377, %s380
      %p386 = scmp.eq.s32.totalorder %s27, 0
      %p387 = por %p385, %p386
      %p388 = scmp.ne.s32.totalorder %s377, %s380
      %p389 = scmp.eq.s32.totalorder %s32, 5
      %p390 = por %p388, %p389
      %p391 = scmp.ne.s32.totalorder %s380, %s381
      %p392 = scmp.eq.s32.totalorder %s32, 0
      %p393 = por %p391, %p392
      %p394 = scmp.ne.s32.totalorder %s380, %s381
      %p395 = scmp.eq.s32.totalorder %s33, 5
      %p396 = por %p394, %p395
      %p398 = scmp.ne.s32.totalorder %s381, %s397
      %p399 = scmp.eq.s32.totalorder %s33, 0
      %p400 = por %p398, %p399
      %s401 = ssub.s32 %s35, %s42
      %p402 = scmp.eq.s32.totalorder %s401, 0
      %s404 = sadd.s32 %s403, 1
      %s405 = scalar_select %p402, %s403, %s404
      %p408 = pneg %p402
      %p409 = scmp.eq.s32.totalorder %s27, 5
      %p410 = por %p408, %p409
      %p411 = scmp.ne.s32.totalorder %s403, %s406
      %p412 = scmp.eq.s32.totalorder %s27, 0
      %p413 = por %p411, %p412
      %p414 = scmp.ne.s32.totalorder %s403, %s406
      %p415 = scmp.eq.s32.totalorder %s32, 5
      %p416 = por %p414, %p415
      %p417 = scmp.ne.s32.totalorder %s406, %s407
      %p418 = scmp.eq.s32.totalorder %s32, 0
      %p419 = por %p417, %p418
      %p420 = scmp.ne.s32.totalorder %s406, %s407
      %p421 = scmp.eq.s32.totalorder %s33, 5
      %p422 = por %p420, %p421
      %p424 = scmp.ne.s32.totalorder %s407, %s423
      %p425 = scmp.eq.s32.totalorder %s33, 0
      %p426 = por %p424, %p425
      %s427 = ssub.s32 %s35, %s42
      %p428 = scmp.eq.s32.totalorder %s427, 0
      %s430 = sadd.s32 %s429, 1
      %s431 = scalar_select %p428, %s429, %s430
      %p434 = pneg %p428
      %p435 = scmp.eq.s32.totalorder %s27, 5
      %p436 = por %p434, %p435
      %p437 = scmp.ne.s32.totalorder %s429, %s432
      %p438 = scmp.eq.s32.totalorder %s27, 0
      %p439 = por %p437, %p438
      %p440 = scmp.ne.s32.totalorder %s429, %s432
      %p441 = scmp.eq.s32.totalorder %s32, 5
      %p442 = por %p440, %p441
      %p443 = scmp.ne.s32.totalorder %s432, %s433
      %p444 = scmp.eq.s32.totalorder %s32, 0
      %p445 = por %p443, %p444
      %p446 = scmp.ne.s32.totalorder %s432, %s433
      %p447 = scmp.eq.s32.totalorder %s33, 5
      %p448 = por %p446, %p447
      %p450 = scmp.ne.s32.totalorder %s433, %s449
      %p451 = scmp.eq.s32.totalorder %s33, 0
      %p452 = por %p450, %p451
      %s454 = sadd.s32 %s453, 1
      %p457 = scmp.eq.s32.totalorder %s27, 5
      %p458 = scmp.ne.s32.totalorder %s453, %s455
      %p459 = scmp.eq.s32.totalorder %s27, 0
      %p460 = por %p458, %p459
      %p461 = scmp.ne.s32.totalorder %s453, %s455
      %p462 = scmp.eq.s32.totalorder %s32, 5
      %p463 = por %p461, %p462
      %p464 = scmp.ne.s32.totalorder %s455, %s456
      %p465 = scmp.eq.s32.totalorder %s32, 0
      %p466 = por %p464, %p465
      %p467 = scmp.ne.s32.totalorder %s455, %s456
      %p468 = scmp.eq.s32.totalorder %s33, 5
      %p469 = por %p467, %p468
      %p471 = scmp.ne.s32.totalorder %s456, %s470
      %p472 = scmp.eq.s32.totalorder %s33, 0
      %p473 = por %p471, %p472
      %s475 = sadd.s32 %s474, 1
      %p478 = scmp.eq.s32.totalorder %s27, 5
      %p479 = scmp.ne.s32.totalorder %s474, %s476
      %p480 = scmp.eq.s32.totalorder %s27, 0
      %p481 = por %p479, %p480
      %p482 = scmp.ne.s32.totalorder %s474, %s476
      %p483 = scmp.eq.s32.totalorder %s32, 5
      %p484 = por %p482, %p483
      %p485 = scmp.ne.s32.totalorder %s476, %s477
      %p486 = scmp.eq.s32.totalorder %s32, 0
      %p487 = por %p485, %p486
      %p488 = scmp.ne.s32.totalorder %s476, %s477
      %p489 = scmp.eq.s32.totalorder %s33, 5
      %p490 = por %p488, %p489
      %p492 = scmp.ne.s32.totalorder %s477, %s491
      %p493 = scmp.eq.s32.totalorder %s33, 0
      %p494 = por %p492, %p493
      %s495 = ssub.s32 %s34, %s46
      %p496 = scmp.eq.s32.totalorder %s495, 0
      %s498 = sadd.s32 %s497, 1
      %s499 = scalar_select %p496, %s497, %s498
      %p502 = pneg %p496
      %p503 = scmp.eq.s32.totalorder %s27, 5
      %p504 = por %p502, %p503
      %p505 = scmp.ne.s32.totalorder %s497, %s500
      %p506 = scmp.eq.s32.totalorder %s27, 0
      %p507 = por %p505, %p506
      %p508 = scmp.ne.s32.totalorder %s497, %s500
      %p509 = scmp.eq.s32.totalorder %s32, 5
      %p510 = por %p508, %p509
      %p511 = scmp.ne.s32.totalorder %s500, %s501
      %p512 = scmp.eq.s32.totalorder %s32, 0
      %p513 = por %p511, %p512
      %p514 = scmp.ne.s32.totalorder %s500, %s501
      %p515 = scmp.eq.s32.totalorder %s33, 5
      %p516 = por %p514, %p515
      %p518 = scmp.ne.s32.totalorder %s501, %s517
      %p519 = scmp.eq.s32.totalorder %s33, 0
      %p520 = por %p518, %p519
      %p521 = scmp.le.s32.totalorder 1, %s27
      %p522 = scmp.lt.s32.totalorder %s27, 7
      %p523 = pnand %p521, %p522
      %p524 = pneg %p523
      // Predicated region
      $region9: #{tpu_custom_call.1} parent=5 // pred_check
        _
      $region10: #{tpu_custom_call.1} parent=5 // pred_check_branch
        %526 = sbr.rel (%p523) target = $region12
      $region11: #{tpu_custom_call.1} parent=5 // pred_region
        %s527 = ssub.s32 %s27, 1
        // Predicated region
        $region13: #{tpu_custom_call.1} parent=11 // pred_check
          %p528 = pneg %p112
        $region14: #{tpu_custom_call.1} parent=11 // pred_check_branch
          %530 = sbr.rel (%p528) target = $region16
        $region15: #{tpu_custom_call.1} parent=11 // pred_region
          _
        $region16: #{tpu_custom_call.1} parent=11 // pred_fallthru
          _
        // Predicated region
        $region17: #{tpu_custom_call.1} parent=11 // pred_check
          %p531 = pneg %p133
        $region18: #{tpu_custom_call.1} parent=11 // pred_check_branch
          %533 = sbr.rel (%p531) target = $region20
        $region19: #{tpu_custom_call.1} parent=11 // pred_region
          _
        $region20: #{tpu_custom_call.1} parent=11 // pred_fallthru
          _
        // Predicated region
        $region21: #{tpu_custom_call.1} parent=11 // pred_check
          %p534 = pneg %p466
        $region22: #{tpu_custom_call.1} parent=11 // pred_check_branch
          %536 = sbr.rel (%p534) target = $region24
        $region23: #{tpu_custom_call.1} parent=11 // pred_region
          _
        $region24: #{tpu_custom_call.1} parent=11 // pred_fallthru
          _
        // Predicated region
        $region25: #{tpu_custom_call.1} parent=11 // pred_check
          %p537 = pneg %p487
        $region26: #{tpu_custom_call.1} parent=11 // pred_check_branch
          %539 = sbr.rel (%p537) target = $region28
        $region27: #{tpu_custom_call.1} parent=11 // pred_region
          _
        $region28: #{tpu_custom_call.1} parent=11 // pred_fallthru
          _
      $region12: #{tpu_custom_call.1} parent=5 // pred_fallthru
        _
      %p540 = scmp.lt.s32.totalorder %s27, 6
      // Predicated region
      $region29: #{tpu_custom_call.1} parent=5 // pred_check
        %p541 = pneg %p540
      $region30: #{tpu_custom_call.1} parent=5 // pred_check_branch
        %543 = sbr.rel (%p541) target = $region32
      $region31: #{tpu_custom_call.1} parent=5 // pred_region
        // Predicated region
        $region33: #{tpu_custom_call.1} parent=31 // pred_check
          %p544 = pneg %p59
        $region34: #{tpu_custom_call.1} parent=31 // pred_check_branch
          %546 = sbr.rel (%p544) target = $region36
        $region35: #{tpu_custom_call.1} parent=31 // pred_region
          %p547 = scmp.lt.s32.totalorder %s34, 1
          %s548 = scalar_select %p547, %s34, 1
          %s549 = scalar_lea.vmem %s0, %s548
        $region36: #{tpu_custom_call.1} parent=31 // pred_fallthru
          _
        // Predicated region
        $region37: #{tpu_custom_call.1} parent=31 // pred_check
          %p550 = pneg %p85
        $region38: #{tpu_custom_call.1} parent=31 // pred_check_branch
          %552 = sbr.rel (%p550) target = $region40
        $region39: #{tpu_custom_call.1} parent=31 // pred_region
          %p553 = scmp.lt.s32.totalorder %s34, 1
          %s554 = scalar_select %p553, %s34, 1
          %s555 = smul.addr %s554, 8
          %s556 = scalar_lea.vmem %s1, %s555
        $region40: #{tpu_custom_call.1} parent=31 // pred_fallthru
          _
        // Predicated region
        $region41: #{tpu_custom_call.1} parent=31 // pred_check
          %p557 = pneg %p153
        $region42: #{tpu_custom_call.1} parent=31 // pred_check_branch
          %559 = sbr.rel (%p557) target = $region44
        $region43: #{tpu_custom_call.1} parent=31 // pred_region
          %p560 = scmp.lt.s32.totalorder %s35, 2
          %s561 = scalar_select %p560, %s35, 2
          %s562 = smul.addr %s561, 96
          %s563 = smul.addr %s562, 4
          %s564 = scalar_lea.vmem %s4, %s563
        $region44: #{tpu_custom_call.1} parent=31 // pred_fallthru
          _
        // Predicated region
        $region45: #{tpu_custom_call.1} parent=31 // pred_check
          %p565 = pneg %p179
        $region46: #{tpu_custom_call.1} parent=31 // pred_check_branch
          %567 = sbr.rel (%p565) target = $region48
        $region47: #{tpu_custom_call.1} parent=31 // pred_region
          %p568 = scmp.lt.s32.totalorder %s35, 2
          %s569 = scalar_select %p568, %s35, 2
          %s570 = smul.addr %s569, 12
          %s571 = scalar_lea.vmem %s5, %s570
        $region48: #{tpu_custom_call.1} parent=31 // pred_fallthru
          _
        // Predicated region
        $region49: #{tpu_custom_call.1} parent=31 // pred_check
          %p572 = pneg %p205
        $region50: #{tpu_custom_call.1} parent=31 // pred_check_branch
          %574 = sbr.rel (%p572) target = $region52
        $region51: #{tpu_custom_call.1} parent=31 // pred_region
          %p575 = scmp.lt.s32.totalorder %s35, 2
          %s576 = scalar_select %p575, %s35, 2
          %s577 = smul.addr %s576, 8
          %s578 = smul.addr %s577, 4
          %s579 = scalar_lea.vmem %s6, %s578
        $region52: #{tpu_custom_call.1} parent=31 // pred_fallthru
          _
        // Predicated region
        $region53: #{tpu_custom_call.1} parent=31 // pred_check
          %p580 = pneg %p231
        $region54: #{tpu_custom_call.1} parent=31 // pred_check_branch
          %582 = sbr.rel (%p580) target = $region56
        $region55: #{tpu_custom_call.1} parent=31 // pred_region
          %p583 = scmp.lt.s32.totalorder %s35, 2
          %s584 = scalar_select %p583, %s35, 2
          %s585 = scalar_lea.vmem %s7, %s584
        $region56: #{tpu_custom_call.1} parent=31 // pred_fallthru
          _
        // Predicated region
        $region57: #{tpu_custom_call.1} parent=31 // pred_check
          %p586 = pneg %p257
        $region58: #{tpu_custom_call.1} parent=31 // pred_check_branch
          %588 = sbr.rel (%p586) target = $region60
        $region59: #{tpu_custom_call.1} parent=31 // pred_region
          %p589 = scmp.lt.s32.totalorder %s35, 2
          %s590 = scalar_select %p589, %s35, 2
          %s591 = scalar_lea.vmem %s8, %s590
        $region60: #{tpu_custom_call.1} parent=31 // pred_fallthru
          _
        // Predicated region
        $region61: #{tpu_custom_call.1} parent=31 // pred_check
          %p592 = pneg %p283
        $region62: #{tpu_custom_call.1} parent=31 // pred_check_branch
          %594 = sbr.rel (%p592) target = $region64
        $region63: #{tpu_custom_call.1} parent=31 // pred_region
          %p595 = scmp.lt.s32.totalorder %s35, 2
          %s596 = scalar_select %p595, %s35, 2
          %s597 = scalar_lea.vmem %s9, %s596
        $region64: #{tpu_custom_call.1} parent=31 // pred_fallthru
          _
        // Predicated region
        $region65: #{tpu_custom_call.1} parent=31 // pred_check
          %p598 = pneg %p309
        $region66: #{tpu_custom_call.1} parent=31 // pred_check_branch
          %600 = sbr.rel (%p598) target = $region68
        $region67: #{tpu_custom_call.1} parent=31 // pred_region
          %p601 = scmp.lt.s32.totalorder %s35, 2
          %s602 = scalar_select %p601, %s35, 2
          %s603 = smul.addr %s602, 8
          %s604 = smul.addr %s603, 4
          %s605 = scalar_lea.vmem %s10, %s604
        $region68: #{tpu_custom_call.1} parent=31 // pred_fallthru
          _
        // Predicated region
        $region69: #{tpu_custom_call.1} parent=31 // pred_check
          %p606 = pneg %p335
        $region70: #{tpu_custom_call.1} parent=31 // pred_check_branch
          %608 = sbr.rel (%p606) target = $region72
        $region71: #{tpu_custom_call.1} parent=31 // pred_region
          %p609 = scmp.lt.s32.totalorder %s35, 2
          %s610 = scalar_select %p609, %s35, 2
          %s611 = scalar_lea.vmem %s11, %s610
        $region72: #{tpu_custom_call.1} parent=31 // pred_fallthru
          _
        // Predicated region
        $region73: #{tpu_custom_call.1} parent=31 // pred_check
          %p612 = pneg %p361
        $region74: #{tpu_custom_call.1} parent=31 // pred_check_branch
          %614 = sbr.rel (%p612) target = $region76
        $region75: #{tpu_custom_call.1} parent=31 // pred_region
          %p615 = scmp.lt.s32.totalorder %s35, 2
          %s616 = scalar_select %p615, %s35, 2
          %s617 = smul.addr %s616, 16
          %s618 = smul.addr %s617, 4
          %s619 = scalar_lea.vmem %s12, %s618
        $region76: #{tpu_custom_call.1} parent=31 // pred_fallthru
          _
        // Predicated region
        $region77: #{tpu_custom_call.1} parent=31 // pred_check
          %p620 = pneg %p387
        $region78: #{tpu_custom_call.1} parent=31 // pred_check_branch
          %622 = sbr.rel (%p620) target = $region80
        $region79: #{tpu_custom_call.1} parent=31 // pred_region
          %p623 = scmp.lt.s32.totalorder %s35, 2
          %s624 = scalar_select %p623, %s35, 2
          %s625 = scalar_lea.vmem %s13, %s624
        $region80: #{tpu_custom_call.1} parent=31 // pred_fallthru
          _
        // Predicated region
        $region81: #{tpu_custom_call.1} parent=31 // pred_check
          %p626 = pneg %p413
        $region82: #{tpu_custom_call.1} parent=31 // pred_check_branch
          %628 = sbr.rel (%p626) target = $region84
        $region83: #{tpu_custom_call.1} parent=31 // pred_region
          %p629 = scmp.lt.s32.totalorder %s35, 2
          %s630 = scalar_select %p629, %s35, 2
          %s631 = scalar_lea.vmem %s14, %s630
        $region84: #{tpu_custom_call.1} parent=31 // pred_fallthru
          _
        // Predicated region
        $region85: #{tpu_custom_call.1} parent=31 // pred_check
          %p632 = pneg %p439
        $region86: #{tpu_custom_call.1} parent=31 // pred_check_branch
          %634 = sbr.rel (%p632) target = $region88
        $region87: #{tpu_custom_call.1} parent=31 // pred_region
          %p635 = scmp.lt.s32.totalorder %s35, 2
          %s636 = scalar_select %p635, %s35, 2
          %s637 = scalar_lea.vmem %s15, %s636
        $region88: #{tpu_custom_call.1} parent=31 // pred_fallthru
          _
      $region32: #{tpu_custom_call.1} parent=5 // pred_fallthru
        _
      %p638 = scmp.le.s32.totalorder 1, %s27
      %p639 = scmp.lt.s32.totalorder %s27, 7
      %p640 = pnand %p638, %p639
      %p641 = pneg %p640
      // Predicated region
      $region89: #{tpu_custom_call.1} parent=5 // pred_check
        _
      $region90: #{tpu_custom_call.1} parent=5 // pred_check_branch
        %643 = sbr.rel (%p640) target = $region92
      $region91: #{tpu_custom_call.1} parent=5 // pred_region
        %s644 = ssub.s32 %s27, 1
        %p645 = scmp.lt.s32.totalorder %s36, 1
        %s646 = scalar_select %p645, %s36, 1
        %s647 = scalar_lea.vmem %s0, %s646
        %p648 = pneg %p65
        %p649 = pneg %p62
        %p650 = scmp.lt.s32.totalorder %s36, 1
        %s651 = scalar_select %p650, %s36, 1
        %s652 = smul.addr %s651, 8
        %s653 = scalar_lea.vmem %s1, %s652
        %p654 = pneg %p91
        %p655 = pneg %p88
        %p656 = pneg %p112
        %p657 = pneg %p109
        %p658 = pneg %p133
        %p659 = pneg %p130
        %p660 = scmp.lt.s32.totalorder %s37, 2
        %s661 = scalar_select %p660, %s37, 2
        %s662 = smul.addr %s661, 96
        %s663 = smul.addr %s662, 4
        %s664 = scalar_lea.vmem %s4, %s663
        %p665 = pneg %p159
        %p666 = pneg %p156
        %p667 = scmp.lt.s32.totalorder %s37, 2
        %s668 = scalar_select %p667, %s37, 2
        %s669 = smul.addr %s668, 12
        %s670 = scalar_lea.vmem %s5, %s669
        %p671 = pneg %p185
        %p672 = pneg %p182
        %p673 = scmp.lt.s32.totalorder %s37, 2
        %s674 = scalar_select %p673, %s37, 2
        %s675 = smul.addr %s674, 8
        %s676 = smul.addr %s675, 4
        %s677 = scalar_lea.vmem %s6, %s676
        %p678 = pneg %p211
        %p679 = pneg %p208
        %p680 = scmp.lt.s32.totalorder %s37, 2
        %s681 = scalar_select %p680, %s37, 2
        %s682 = scalar_lea.vmem %s7, %s681
        %p683 = pneg %p237
        %p684 = pneg %p234
        %p685 = scmp.lt.s32.totalorder %s37, 2
        %s686 = scalar_select %p685, %s37, 2
        %s687 = scalar_lea.vmem %s8, %s686
        %p688 = pneg %p263
        %p689 = pneg %p260
        %p690 = scmp.lt.s32.totalorder %s37, 2
        %s691 = scalar_select %p690, %s37, 2
        %s692 = scalar_lea.vmem %s9, %s691
        %p693 = pneg %p289
        %p694 = pneg %p286
        %p695 = scmp.lt.s32.totalorder %s37, 2
        %s696 = scalar_select %p695, %s37, 2
        %s697 = smul.addr %s696, 8
        %s698 = smul.addr %s697, 4
        %s699 = scalar_lea.vmem %s10, %s698
        %p700 = pneg %p315
        %p701 = pneg %p312
        %p702 = scmp.lt.s32.totalorder %s37, 2
        %s703 = scalar_select %p702, %s37, 2
        %s704 = scalar_lea.vmem %s11, %s703
        %p705 = pneg %p341
        %p706 = pneg %p338
        %p707 = scmp.lt.s32.totalorder %s37, 2
        %s708 = scalar_select %p707, %s37, 2
        %s709 = smul.addr %s708, 16
        %s710 = smul.addr %s709, 4
        %s711 = scalar_lea.vmem %s12, %s710
        %p712 = pneg %p367
        %p713 = pneg %p364
        %p714 = scmp.lt.s32.totalorder %s37, 2
        %s715 = scalar_select %p714, %s37, 2
        %s716 = scalar_lea.vmem %s13, %s715
        %p717 = pneg %p393
        %p718 = pneg %p390
        %p719 = scmp.lt.s32.totalorder %s37, 2
        %s720 = scalar_select %p719, %s37, 2
        %s721 = scalar_lea.vmem %s14, %s720
        %p722 = pneg %p419
        %p723 = pneg %p416
        %p724 = scmp.lt.s32.totalorder %s37, 2
        %s725 = scalar_select %p724, %s37, 2
        %s726 = scalar_lea.vmem %s15, %s725
        %p727 = pneg %p445
        %p728 = pneg %p442
        %p729 = pneg %p466
        %p730 = pneg %p463
        %p731 = pneg %p487
        %p732 = pneg %p484
        %p733 = pneg %p513
        %p734 = pneg %p510
        %s735 = sand.u32 %s500, 1
        %s736 = scalar_lea.sflag [#allocation4], %s735
        %s737 = sand.u32 %s500, 1
        %s738 = smul.addr %s737, 8
        %s739 = scalar_lea.vmem [#allocation3], %s738
        %p740 = scmp.lt.s32.totalorder %s36, 1
        %s741 = scalar_select %p740, %s36, 1
        %s742 = scalar_lea.vmem %s0, %s741
        %p743 = scmp.lt.s32.totalorder %s36, 1
        %s744 = scalar_select %p743, %s36, 1
        %s745 = smul.addr %s744, 8
        %s746 = scalar_lea.vmem %s1, %s745
        %p747 = scmp.lt.s32.totalorder %s37, 2
        %s748 = scalar_select %p747, %s37, 2
        %s749 = smul.addr %s748, 96
        %s750 = smul.addr %s749, 4
        %s751 = scalar_lea.vmem %s4, %s750
        %p752 = scmp.lt.s32.totalorder %s37, 2
        %s753 = scalar_select %p752, %s37, 2
        %s754 = smul.addr %s753, 12
        %s755 = scalar_lea.vmem %s5, %s754
        %p756 = scmp.lt.s32.totalorder %s37, 2
        %s757 = scalar_select %p756, %s37, 2
        %s758 = smul.addr %s757, 8
        %s759 = smul.addr %s758, 4
        %s760 = scalar_lea.vmem %s6, %s759
        %p761 = scmp.lt.s32.totalorder %s37, 2
        %s762 = scalar_select %p761, %s37, 2
        %s763 = scalar_lea.vmem %s7, %s762
        %p764 = scmp.lt.s32.totalorder %s37, 2
        %s765 = scalar_select %p764, %s37, 2
        %s766 = scalar_lea.vmem %s8, %s765
        %p767 = scmp.lt.s32.totalorder %s37, 2
        %s768 = scalar_select %p767, %s37, 2
        %s769 = scalar_lea.vmem %s9, %s768
        %p770 = scmp.lt.s32.totalorder %s37, 2
        %s771 = scalar_select %p770, %s37, 2
        %s772 = smul.addr %s771, 8
        %s773 = smul.addr %s772, 4
        %s774 = scalar_lea.vmem %s10, %s773
        %p775 = scmp.lt.s32.totalorder %s37, 2
        %s776 = scalar_select %p775, %s37, 2
        %s777 = scalar_lea.vmem %s11, %s776
        %p778 = scmp.lt.s32.totalorder %s37, 2
        %s779 = scalar_select %p778, %s37, 2
        %s780 = smul.addr %s779, 16
        %s781 = smul.addr %s780, 4
        %s782 = scalar_lea.vmem %s12, %s781
        %p783 = scmp.lt.s32.totalorder %s37, 2
        %s784 = scalar_select %p783, %s37, 2
        %s785 = scalar_lea.vmem %s13, %s784
        %p786 = scmp.lt.s32.totalorder %s37, 2
        %s787 = scalar_select %p786, %s37, 2
        %s788 = scalar_lea.vmem %s14, %s787
        %p789 = scmp.lt.s32.totalorder %s37, 2
        %s790 = scalar_select %p789, %s37, 2
        %s791 = scalar_lea.vmem %s15, %s790
        %p793 = scmp.eq.s32.totalorder %s37, 0
        // Predicated region
        $region93: #{tpu_custom_call.1} parent=91 // pred_check
          %p794 = pneg %p793
        $region94: #{tpu_custom_call.1} parent=91 // pred_check_branch
          %796 = sbr.rel (%p794) target = $region96
        $region95: #{tpu_custom_call.1} parent=91 // pred_region
          %v797 = vld [vmem:[%s746] sm:$0xff]
          %v798 = vld [vmem:[%s2] sm:$0x1]
          %v799 = vld [vmem:[%s3] sm:$0x1]
          %vm800 = vcmask 523264
          %v801 = vsel %vm800, %v797, 0.0
          %802 = vadd.xlane.f32.xlu0 %v801
          %v803 = vpop.xlane.xlu0 %802
          %v804 = vrcp.pop 64.0
          %v805 = vmul.f32 %v803, %v804
          %v806 = vsub.f32 %v797, %v805
          %v807 = vmul.f32 %v806, %v806
          %v808 = vsel %vm800, %v807, 0.0
          %809 = vadd.xlane.f32.xlu0 %v808
          %v810 = vpop.xlane.xlu0 %809
          %v811 = vmul.f32 %v810, %v804
          %v812 = vadd.f32 %v811, 1e-12
          %v813 = vrsqrt.pop %v812
          %v814 = vmul.f32 %v806, %v813
          %v816 = vlaneseq
          %v817 = vshrl.u32 %v816, 7
          %v818 = vsub.s32 0, %v817
          %v819 = vrot.slane %v798, %v818
          %v821 = vmul.f32 %v814, %v819
          %v823 = vlaneseq
          %v824 = vshrl.u32 %v823, 7
          %v825 = vsub.s32 0, %v824
          %v826 = vrot.slane %v799, %v825
          %v828 = vadd.f32 %v821, %v826
          %829 = vst.msk [vmem:[#allocation2] sm:$0xff] %vm800, %v828
        $region96: #{tpu_custom_call.1} parent=91 // pred_fallthru
          _
        %v830 = vld [vmem:[#allocation2] sm:$0xff]
        %v831 = vpack.c.bf16 %v830, %v830
        %v832 = vld [vmem:[%s742] sm:$0x1]
        %v833 = vld [vmem:[%s751] sm:$0xf]
        %v834 = vld [vmem:[%s751 + $0x4] sm:$0xf]
        %v835 = vld [vmem:[%s751 + $0x8] sm:$0xf]
        %v836 = vld [vmem:[%s751 + $0xc] sm:$0xf]
        %v837 = vld [vmem:[%s751 + $0x10] sm:$0xf]
        %v838 = vld [vmem:[%s751 + $0x14] sm:$0xf]
        %v839 = vld [vmem:[%s751 + $0x18] sm:$0xf]
        %v840 = vld [vmem:[%s751 + $0x1c] sm:$0xf]
        %v841 = vld [vmem:[%s755] sm:$0x1]
        %v843 = vlaneseq
        %v844 = vshrl.u32 %v843, 7
        %v845 = vsub.s32 0, %v844
        %v846 = vrot.slane %v841, %v845
        %v856 = vunpack.c.l.b16 %v833
        %v857 = vunpack.c.l.b16 %v834
        %v858 = vunpack.c.l.b16 %v835
        %v859 = vunpack.c.l.b16 %v836
        %v860 = vunpack.c.l.b16 %v837
        %v861 = vunpack.c.l.b16 %v838
        %v862 = vunpack.c.l.b16 %v839
        %v863 = vunpack.c.l.b16 %v840
        %v864 = vpack.c.b16 %v857, %v856
        %v865 = vpack.c.b16 %v859, %v858
        %v866 = vpack.c.b16 %v861, %v860
        %v867 = vpack.c.b16 %v863, %v862
        %vm872 = vcmask 523264
        %v874 = vsel %vm872, %v831, 0
        %876 = vmatprep.subr.bf16.mxu0 0
        %877 = vmatpush1.bf16.msra.mxu0 %v864
        %878 = vmatprep.subr.bf16.mxu0 0
        %879 = vmatpush1.bf16.msra.mxu0 %v865
        %880 = vmatprep.subr.bf16.mxu0 0
        %881 = vmatpush1.bf16.msra.mxu0 %v866
        %882 = vmatprep.subr.bf16.mxu0 0
        %883 = vmatpush1.bf16.msra.mxu0 %v867
        %884 = vmatprep.subr.bf16.mxu0 0
        %885 = vmatpush1.bf16.msra.mxu0 0
        %886 = vmatprep.subr.bf16.mxu0 0
        %887 = vmatpush1.bf16.msra.mxu0 0
        %888 = vmatprep.subr.bf16.mxu0 0
        %889 = vmatpush1.bf16.msra.mxu0 0
        %890 = vmatprep.subr.bf16.mxu0 0
        %891 = vmatpush1.bf16.msra.mxu0 0
        %892 = vmatprep.subr.bf16.mxu0 0
        %893 = vmatpush1.bf16.msra.mxu0 0
        %894 = vmatprep.subr.bf16.mxu0 0
        %895 = vmatpush1.bf16.msra.mxu0 0
        %896 = vmatprep.subr.bf16.mxu0 0
        %897 = vmatpush1.bf16.msra.mxu0 0
        %898 = vmatprep.subr.bf16.mxu0 0
        %899 = vmatpush1.bf16.msra.mxu0 0
        %900 = vmatprep.subr.bf16.mxu0 0
        %901 = vmatpush1.bf16.msra.mxu0 0
        %902 = vmatprep.subr.bf16.mxu0 0
        %903 = vmatpush1.bf16.msra.mxu0 0
        %904 = vmatprep.subr.bf16.mxu0 0
        %905 = vmatpush1.bf16.msra.mxu0 0
        %906 = vmatprep.subr.bf16.mxu0 0
        %907 = vmatpush1.bf16.msra.mxu0 0
        %908 = vmatprep.mubr.bf16.mxu0 0
        %909 = vmatmul.mubr.bf16.gmra.mrb[0].mxu0 %v874
        %v910 = vpop.f32.mrb[0].mxu0
        %v911 = vadd.f32 %v846, %v910
        %v912 = vpop.f32.mrb[0].mxu0
        %v913 = vpop.f32.mrb[0].mxu0
        %v914 = vpop.f32.mrb[0].mxu0
        %915 = vdwg.mxu0
        %s916 = scalar_lea.vmem %s751, 128
        %v917 = vld [vmem:[%s916] sm:$0xf]
        %v918 = vld [vmem:[%s916 + $0x4] sm:$0xf]
        %v919 = vld [vmem:[%s916 + $0x8] sm:$0xf]
        %v920 = vld [vmem:[%s916 + $0xc] sm:$0xf]
        %v921 = vld [vmem:[%s916 + $0x10] sm:$0xf]
        %v922 = vld [vmem:[%s916 + $0x14] sm:$0xf]
        %v923 = vld [vmem:[%s916 + $0x18] sm:$0xf]
        %v924 = vld [vmem:[%s916 + $0x1c] sm:$0xf]
        %s925 = scalar_lea.vmem %s755, 4
        %v926 = vld [vmem:[%s925] sm:$0x1]
        %v928 = vlaneseq
        %v929 = vshrl.u32 %v928, 7
        %v930 = vsub.s32 0, %v929
        %v931 = vrot.slane %v926, %v930
        %v941 = vunpack.c.l.b16 %v917
        %v942 = vunpack.c.l.b16 %v918
        %v943 = vunpack.c.l.b16 %v919
        %v944 = vunpack.c.l.b16 %v920
        %v945 = vunpack.c.l.b16 %v921
        %v946 = vunpack.c.l.b16 %v922
        %v947 = vunpack.c.l.b16 %v923
        %v948 = vunpack.c.l.b16 %v924
        %v949 = vpack.c.b16 %v942, %v941
        %v950 = vpack.c.b16 %v944, %v943
        %v951 = vpack.c.b16 %v946, %v945
        %v952 = vpack.c.b16 %v948, %v947
        %957 = vmatprep.subr.bf16.mxu0 0
        %958 = vmatpush1.bf16.msra.mxu0 %v949
        %959 = vmatprep.subr.bf16.mxu0 0
        %960 = vmatpush1.bf16.msra.mxu0 %v950
        %961 = vmatprep.subr.bf16.mxu0 0
        %962 = vmatpush1.bf16.msra.mxu0 %v951
        %963 = vmatprep.subr.bf16.mxu0 0
        %964 = vmatpush1.bf16.msra.mxu0 %v952
        %965 = vmatprep.subr.bf16.mxu0 0
        %966 = vmatpush1.bf16.msra.mxu0 0
        %967 = vmatprep.subr.bf16.mxu0 0
        %968 = vmatpush1.bf16.msra.mxu0 0
        %969 = vmatprep.subr.bf16.mxu0 0
        %970 = vmatpush1.bf16.msra.mxu0 0
        %971 = vmatprep.subr.bf16.mxu0 0
        %972 = vmatpush1.bf16.msra.mxu0 0
        %973 = vmatprep.subr.bf16.mxu0 0
        %974 = vmatpush1.bf16.msra.mxu0 0
        %975 = vmatprep.subr.bf16.mxu0 0
        %976 = vmatpush1.bf16.msra.mxu0 0
        %977 = vmatprep.subr.bf16.mxu0 0
        %978 = vmatpush1.bf16.msra.mxu0 0
        %979 = vmatprep.subr.bf16.mxu0 0
        %980 = vmatpush1.bf16.msra.mxu0 0
        %981 = vmatprep.subr.bf16.mxu0 0
        %982 = vmatpush1.bf16.msra.mxu0 0
        %983 = vmatprep.subr.bf16.mxu0 0
        %984 = vmatpush1.bf16.msra.mxu0 0
        %985 = vmatprep.subr.bf16.mxu0 0
        %986 = vmatpush1.bf16.msra.mxu0 0
        %987 = vmatprep.subr.bf16.mxu0 0
        %988 = vmatpush1.bf16.msra.mxu0 0
        %989 = vmatprep.mubr.bf16.mxu0 0
        %990 = vmatmul.mubr.bf16.gmra.mrb[0].mxu0 %v874
        %v991 = vpop.f32.mrb[0].mxu0
        %v992 = vadd.f32 %v931, %v991
        %v993 = vpop.f32.mrb[0].mxu0
        %v994 = vpop.f32.mrb[0].mxu0
        %v995 = vpop.f32.mrb[0].mxu0
        %996 = vdwg.mxu0
        %s997 = scalar_lea.vmem %s751, 256
        %v998 = vld [vmem:[%s997] sm:$0xf]
        %v999 = vld [vmem:[%s997 + $0x4] sm:$0xf]
        %v1000 = vld [vmem:[%s997 + $0x8] sm:$0xf]
        %v1001 = vld [vmem:[%s997 + $0xc] sm:$0xf]
        %v1002 = vld [vmem:[%s997 + $0x10] sm:$0xf]
        %v1003 = vld [vmem:[%s997 + $0x14] sm:$0xf]
        %v1004 = vld [vmem:[%s997 + $0x18] sm:$0xf]
        %v1005 = vld [vmem:[%s997 + $0x1c] sm:$0xf]
        %s1006 = scalar_lea.vmem %s755, 8
        %v1007 = vld [vmem:[%s1006] sm:$0x1]
        %v1009 = vlaneseq
        %v1010 = vshrl.u32 %v1009, 7
        %v1011 = vsub.s32 0, %v1010
        %v1012 = vrot.slane %v1007, %v1011
        %v1022 = vunpack.c.l.b16 %v998
        %v1023 = vunpack.c.l.b16 %v999
        %v1024 = vunpack.c.l.b16 %v1000
        %v1025 = vunpack.c.l.b16 %v1001
        %v1026 = vunpack.c.l.b16 %v1002
        %v1027 = vunpack.c.l.b16 %v1003
        %v1028 = vunpack.c.l.b16 %v1004
        %v1029 = vunpack.c.l.b16 %v1005
        %v1030 = vpack.c.b16 %v1023, %v1022
        %v1031 = vpack.c.b16 %v1025, %v1024
        %v1032 = vpack.c.b16 %v1027, %v1026
        %v1033 = vpack.c.b16 %v1029, %v1028
        %1038 = vmatprep.subr.bf16.mxu0 0
        %1039 = vmatpush1.bf16.msra.mxu0 %v1030
        %1040 = vmatprep.subr.bf16.mxu0 0
        %1041 = vmatpush1.bf16.msra.mxu0 %v1031
        %1042 = vmatprep.subr.bf16.mxu0 0
        %1043 = vmatpush1.bf16.msra.mxu0 %v1032
        %1044 = vmatprep.subr.bf16.mxu0 0
        %1045 = vmatpush1.bf16.msra.mxu0 %v1033
        %1046 = vmatprep.subr.bf16.mxu0 0
        %1047 = vmatpush1.bf16.msra.mxu0 0
        %1048 = vmatprep.subr.bf16.mxu0 0
        %1049 = vmatpush1.bf16.msra.mxu0 0
        %1050 = vmatprep.subr.bf16.mxu0 0
        %1051 = vmatpush1.bf16.msra.mxu0 0
        %1052 = vmatprep.subr.bf16.mxu0 0
        %1053 = vmatpush1.bf16.msra.mxu0 0
        %1054 = vmatprep.subr.bf16.mxu0 0
        %1055 = vmatpush1.bf16.msra.mxu0 0
        %1056 = vmatprep.subr.bf16.mxu0 0
        %1057 = vmatpush1.bf16.msra.mxu0 0
        %1058 = vmatprep.subr.bf16.mxu0 0
        %1059 = vmatpush1.bf16.msra.mxu0 0
        %1060 = vmatprep.subr.bf16.mxu0 0
        %1061 = vmatpush1.bf16.msra.mxu0 0
        %1062 = vmatprep.subr.bf16.mxu0 0
        %1063 = vmatpush1.bf16.msra.mxu0 0
        %1064 = vmatprep.subr.bf16.mxu0 0
        %1065 = vmatpush1.bf16.msra.mxu0 0
        %1066 = vmatprep.subr.bf16.mxu0 0
        %1067 = vmatpush1.bf16.msra.mxu0 0
        %1068 = vmatprep.subr.bf16.mxu0 0
        %1069 = vmatpush1.bf16.msra.mxu0 0
        %1070 = vmatprep.mubr.bf16.mxu0 0
        %1071 = vmatmul.mubr.bf16.gmra.mrb[0].mxu0 %v874
        %v1072 = vpop.f32.mrb[0].mxu0
        %v1073 = vadd.f32 %v1012, %v1072
        %v1074 = vpop.f32.mrb[0].mxu0
        %v1075 = vpop.f32.mrb[0].mxu0
        %v1076 = vpop.f32.mrb[0].mxu0
        %1077 = vdwg.mxu0
        %v1078 = vmul.f32 %v911, 0.25
        %v1079 = vpack.c.bf16 %v1078, %v1078
        %v1080 = vpack.c.bf16 %v992, %v992
        %v1081 = vpack.c.bf16 %v1073, %v1073
        %v1083 = vlaneseq
        %v1084 = vshrl.u32 %v1083, 7
        %v1085 = vsub.s32 0, %v1084
        %v1086 = vrot.slane %v832, %v1085
        %vm1088 = vcmask 130048
        %v1090 = vsel %vm1088, %v1079, 0
        %v1093 = vsel %vm1088, %v1080, 0
        %1095 = vmatprep.subr.bf16.mxu0 0
        %1096 = vmatpush1.bf16.xpose.msra.mxu0 %v1093
        %1097 = vmatprep.subr.bf16.mxu0 0
        %1098 = vmatpush1.bf16.xpose.msra.mxu0 0
        %1099 = vmatprep.subr.bf16.mxu0 0
        %1100 = vmatpush1.bf16.xpose.msra.mxu0 0
        %1101 = vmatprep.subr.bf16.mxu0 0
        %1102 = vmatpush1.bf16.xpose.msra.mxu0 0
        %1103 = vmatprep.subr.bf16.mxu0 0
        %1104 = vmatpush1.bf16.xpose.msra.mxu0 0
        %1105 = vmatprep.subr.bf16.mxu0 0
        %1106 = vmatpush1.bf16.xpose.msra.mxu0 0
        %1107 = vmatprep.subr.bf16.mxu0 0
        %1108 = vmatpush1.bf16.xpose.msra.mxu0 0
        %1109 = vmatprep.subr.bf16.mxu0 0
        %1110 = vmatpush1.bf16.xpose.msra.mxu0 0
        %1111 = vmatprep.subr.bf16.mxu0 0
        %1112 = vmatpush1.bf16.xpose.msra.mxu0 0
        %1113 = vmatprep.subr.bf16.mxu0 0
        %1114 = vmatpush1.bf16.xpose.msra.mxu0 0
        %1115 = vmatprep.subr.bf16.mxu0 0
        %1116 = vmatpush1.bf16.xpose.msra.mxu0 0
        %1117 = vmatprep.subr.bf16.mxu0 0
        %1118 = vmatpush1.bf16.xpose.msra.mxu0 0
        %1119 = vmatprep.subr.bf16.mxu0 0
        %1120 = vmatpush1.bf16.xpose.msra.mxu0 0
        %1121 = vmatprep.subr.bf16.mxu0 0
        %1122 = vmatpush1.bf16.xpose.msra.mxu0 0
        %1123 = vmatprep.subr.bf16.mxu0 0
        %1124 = vmatpush1.bf16.xpose.msra.mxu0 0
        %1125 = vmatprep.subr.bf16.mxu0 0
        %1126 = vmatpush1.bf16.xpose.msra.mxu0 0
        %1127 = vmatprep.mubr.bf16.mxu0 0
        %1128 = vmatmul.mubr.bf16.gmra.mrb[0].mxu0 %v1090
        %v1129 = vpop.f32.mrb[0].mxu0
        %v1130 = vadd.f32 %v1086, %v1129
        %v1131 = vpop.f32.mrb[0].mxu0
        %v1132 = vpop.f32.mrb[0].mxu0
        %v1133 = vpop.f32.mrb[0].mxu0
        %1134 = vdwg.mxu0
        %vm1135 = vcmask 64512
        %v1136 = vsel %vm1135, %v1130, -inf
        %1137 = vmax.xlane.f32.xlu0 %v1136
        %v1138 = vpop.xlane.xlu0 %1137
        %v1139 = vsub.f32 %v1130, %v1138
        %v1140 = vmul.f32 %v1139, 1.442695
        %v1141 = vpow.pop %v1140
        %v1142 = vsel %vm1135, %v1141, 0.0
        %1143 = vadd.xlane.f32.xlu0 %v1142
        %v1144 = vpop.xlane.xlu0 %1143
        %v1145 = vrcp.pop %v1144
        %v1146 = vmul.f32 %v1141, %v1145
        %v1147 = vpack.c.bf16 %v1146, %v1146
        %v1149 = vsel %vm1135, %v1147, 0
        %vm1151 = vcmask 1043456
        %v1153 = vsel %vm1151, %v1081, 0
        %1155 = vmatprep.subr.bf16.mxu0 0
        %1156 = vmatpush1.bf16.msra.mxu0 %v1153
        %1157 = vmatprep.subr.bf16.mxu0 0
        %1158 = vmatpush1.bf16.msra.mxu0 0
        %1159 = vmatprep.subr.bf16.mxu0 0
        %1160 = vmatpush1.bf16.msra.mxu0 0
        %1161 = vmatprep.subr.bf16.mxu0 0
        %1162 = vmatpush1.bf16.msra.mxu0 0
        %1163 = vmatprep.subr.bf16.mxu0 0
        %1164 = vmatpush1.bf16.msra.mxu0 0
        %1165 = vmatprep.subr.bf16.mxu0 0
        %1166 = vmatpush1.bf16.msra.mxu0 0
        %1167 = vmatprep.subr.bf16.mxu0 0
        %1168 = vmatpush1.bf16.msra.mxu0 0
        %1169 = vmatprep.subr.bf16.mxu0 0
        %1170 = vmatpush1.bf16.msra.mxu0 0
        %1171 = vmatprep.subr.bf16.mxu0 0
        %1172 = vmatpush1.bf16.msra.mxu0 0
        %1173 = vmatprep.subr.bf16.mxu0 0
        %1174 = vmatpush1.bf16.msra.mxu0 0
        %1175 = vmatprep.subr.bf16.mxu0 0
        %1176 = vmatpush1.bf16.msra.mxu0 0
        %1177 = vmatprep.subr.bf16.mxu0 0
        %1178 = vmatpush1.bf16.msra.mxu0 0
        %1179 = vmatprep.subr.bf16.mxu0 0
        %1180 = vmatpush1.bf16.msra.mxu0 0
        %1181 = vmatprep.subr.bf16.mxu0 0
        %1182 = vmatpush1.bf16.msra.mxu0 0
        %1183 = vmatprep.subr.bf16.mxu0 0
        %1184 = vmatpush1.bf16.msra.mxu0 0
        %1185 = vmatprep.subr.bf16.mxu0 0
        %1186 = vmatpush1.bf16.msra.mxu0 0
        %1187 = vmatprep.mubr.bf16.mxu0 0
        %1188 = vmatmul.mubr.bf16.gmra.mrb[0].mxu0 %v1149
        %v1189 = vpop.f32.mrb[0].mxu0
        %v1190 = vadd.f32 0.0, %v1189
        %v1191 = vpop.f32.mrb[0].mxu0
        %v1192 = vpop.f32.mrb[0].mxu0
        %v1193 = vpop.f32.mrb[0].mxu0
        %1194 = vdwg.mxu0
        %v1195 = vpack.c.bf16 %v1190, %v1190
        %v1196 = vld [vmem:[%s760] sm:$0xf]
        %v1197 = vld [vmem:[%s760 + $0x4] sm:$0xf]
        %s1198 = scalar_lea.vmem %s751, 32
        %v1199 = vld [vmem:[%s1198] sm:$0xf]
        %v1200 = vld [vmem:[%s1198 + $0x4] sm:$0xf]
        %v1201 = vld [vmem:[%s1198 + $0x8] sm:$0xf]
        %v1202 = vld [vmem:[%s1198 + $0xc] sm:$0xf]
        %v1203 = vld [vmem:[%s1198 + $0x10] sm:$0xf]
        %v1204 = vld [vmem:[%s1198 + $0x14] sm:$0xf]
        %v1205 = vld [vmem:[%s1198 + $0x18] sm:$0xf]
        %v1206 = vld [vmem:[%s1198 + $0x1c] sm:$0xf]
        %s1207 = scalar_lea.vmem %s755, 1
        %v1208 = vld [vmem:[%s1207] sm:$0x1]
        %v1210 = vlaneseq
        %v1211 = vshrl.u32 %v1210, 7
        %v1212 = vsub.s32 0, %v1211
        %v1213 = vrot.slane %v1208, %v1212
        %v1223 = vunpack.c.l.b16 %v1199
        %v1224 = vunpack.c.l.b16 %v1200
        %v1225 = vunpack.c.l.b16 %v1201
        %v1226 = vunpack.c.l.b16 %v1202
        %v1227 = vunpack.c.l.b16 %v1203
        %v1228 = vunpack.c.l.b16 %v1204
        %v1229 = vunpack.c.l.b16 %v1205
        %v1230 = vunpack.c.l.b16 %v1206
        %v1231 = vpack.c.b16 %v1224, %v1223
        %v1232 = vpack.c.b16 %v1226, %v1225
        %v1233 = vpack.c.b16 %v1228, %v1227
        %v1234 = vpack.c.b16 %v1230, %v1229
        %1239 = vmatprep.subr.bf16.mxu0 0
        %1240 = vmatpush1.bf16.msra.mxu0 %v1231
        %1241 = vmatprep.subr.bf16.mxu0 0
        %1242 = vmatpush1.bf16.msra.mxu0 %v1232
        %1243 = vmatprep.subr.bf16.mxu0 0
        %1244 = vmatpush1.bf16.msra.mxu0 %v1233
        %1245 = vmatprep.subr.bf16.mxu0 0
        %1246 = vmatpush1.bf16.msra.mxu0 %v1234
        %1247 = vmatprep.subr.bf16.mxu0 0
        %1248 = vmatpush1.bf16.msra.mxu0 0
        %1249 = vmatprep.subr.bf16.mxu0 0
        %1250 = vmatpush1.bf16.msra.mxu0 0
        %1251 = vmatprep.subr.bf16.mxu0 0
        %1252 = vmatpush1.bf16.msra.mxu0 0
        %1253 = vmatprep.subr.bf16.mxu0 0
        %1254 = vmatpush1.bf16.msra.mxu0 0
        %1255 = vmatprep.subr.bf16.mxu0 0
        %1256 = vmatpush1.bf16.msra.mxu0 0
        %1257 = vmatprep.subr.bf16.mxu0 0
        %1258 = vmatpush1.bf16.msra.mxu0 0
        %1259 = vmatprep.subr.bf16.mxu0 0
        %1260 = vmatpush1.bf16.msra.mxu0 0
        %1261 = vmatprep.subr.bf16.mxu0 0
        %1262 = vmatpush1.bf16.msra.mxu0 0
        %1263 = vmatprep.subr.bf16.mxu0 0
        %1264 = vmatpush1.bf16.msra.mxu0 0
        %1265 = vmatprep.subr.bf16.mxu0 0
        %1266 = vmatpush1.bf16.msra.mxu0 0
        %1267 = vmatprep.subr.bf16.mxu0 0
        %1268 = vmatpush1.bf16.msra.mxu0 0
        %1269 = vmatprep.subr.bf16.mxu0 0
        %1270 = vmatpush1.bf16.msra.mxu0 0
        %1271 = vmatprep.mubr.bf16.mxu0 0
        %1272 = vmatmul.mubr.bf16.gmra.mrb[0].mxu0 %v874
        %v1273 = vpop.f32.mrb[0].mxu0
        %v1274 = vadd.f32 %v1213, %v1273
        %v1275 = vpop.f32.mrb[0].mxu0
        %v1276 = vpop.f32.mrb[0].mxu0
        %v1277 = vpop.f32.mrb[0].mxu0
        %1278 = vdwg.mxu0
        %s1279 = scalar_lea.vmem %s751, 160
        %v1280 = vld [vmem:[%s1279] sm:$0xf]
        %v1281 = vld [vmem:[%s1279 + $0x4] sm:$0xf]
        %v1282 = vld [vmem:[%s1279 + $0x8] sm:$0xf]
        %v1283 = vld [vmem:[%s1279 + $0xc] sm:$0xf]
        %v1284 = vld [vmem:[%s1279 + $0x10] sm:$0xf]
        %v1285 = vld [vmem:[%s1279 + $0x14] sm:$0xf]
        %v1286 = vld [vmem:[%s1279 + $0x18] sm:$0xf]
        %v1287 = vld [vmem:[%s1279 + $0x1c] sm:$0xf]
        %s1288 = scalar_lea.vmem %s755, 5
        %v1289 = vld [vmem:[%s1288] sm:$0x1]
        %v1291 = vlaneseq
        %v1292 = vshrl.u32 %v1291, 7
        %v1293 = vsub.s32 0, %v1292
        %v1294 = vrot.slane %v1289, %v1293
        %v1304 = vunpack.c.l.b16 %v1280
        %v1305 = vunpack.c.l.b16 %v1281
        %v1306 = vunpack.c.l.b16 %v1282
        %v1307 = vunpack.c.l.b16 %v1283
        %v1308 = vunpack.c.l.b16 %v1284
        %v1309 = vunpack.c.l.b16 %v1285
        %v1310 = vunpack.c.l.b16 %v1286
        %v1311 = vunpack.c.l.b16 %v1287
        %v1312 = vpack.c.b16 %v1305, %v1304
        %v1313 = vpack.c.b16 %v1307, %v1306
        %v1314 = vpack.c.b16 %v1309, %v1308
        %v1315 = vpack.c.b16 %v1311, %v1310
        %1320 = vmatprep.subr.bf16.mxu0 0
        %1321 = vmatpush1.bf16.msra.mxu0 %v1312
        %1322 = vmatprep.subr.bf16.mxu0 0
        %1323 = vmatpush1.bf16.msra.mxu0 %v1313
        %1324 = vmatprep.subr.bf16.mxu0 0
        %1325 = vmatpush1.bf16.msra.mxu0 %v1314
        %1326 = vmatprep.subr.bf16.mxu0 0
        %1327 = vmatpush1.bf16.msra.mxu0 %v1315
        %1328 = vmatprep.subr.bf16.mxu0 0
        %1329 = vmatpush1.bf16.msra.mxu0 0
        %1330 = vmatprep.subr.bf16.mxu0 0
        %1331 = vmatpush1.bf16.msra.mxu0 0
        %1332 = vmatprep.subr.bf16.mxu0 0
        %1333 = vmatpush1.bf16.msra.mxu0 0
        %1334 = vmatprep.subr.bf16.mxu0 0
        %1335 = vmatpush1.bf16.msra.mxu0 0
        %1336 = vmatprep.subr.bf16.mxu0 0
        %1337 = vmatpush1.bf16.msra.mxu0 0
        %1338 = vmatprep.subr.bf16.mxu0 0
        %1339 = vmatpush1.bf16.msra.mxu0 0
        %1340 = vmatprep.subr.bf16.mxu0 0
        %1341 = vmatpush1.bf16.msra.mxu0 0
        %1342 = vmatprep.subr.bf16.mxu0 0
        %1343 = vmatpush1.bf16.msra.mxu0 0
        %1344 = vmatprep.subr.bf16.mxu0 0
        %1345 = vmatpush1.bf16.msra.mxu0 0
        %1346 = vmatprep.subr.bf16.mxu0 0
        %1347 = vmatpush1.bf16.msra.mxu0 0
        %1348 = vmatprep.subr.bf16.mxu0 0
        %1349 = vmatpush1.bf16.msra.mxu0 0
        %1350 = vmatprep.subr.bf16.mxu0 0
        %1351 = vmatpush1.bf16.msra.mxu0 0
        %1352 = vmatprep.mubr.bf16.mxu0 0
        %1353 = vmatmul.mubr.bf16.gmra.mrb[0].mxu0 %v874
        %v1354 = vpop.f32.mrb[0].mxu0
        %v1355 = vadd.f32 %v1294, %v1354
        %v1356 = vpop.f32.mrb[0].mxu0
        %v1357 = vpop.f32.mrb[0].mxu0
        %v1358 = vpop.f32.mrb[0].mxu0
        %1359 = vdwg.mxu0
        %s1360 = scalar_lea.vmem %s751, 288
        %v1361 = vld [vmem:[%s1360] sm:$0xf]
        %v1362 = vld [vmem:[%s1360 + $0x4] sm:$0xf]
        %v1363 = vld [vmem:[%s1360 + $0x8] sm:$0xf]
        %v1364 = vld [vmem:[%s1360 + $0xc] sm:$0xf]
        %v1365 = vld [vmem:[%s1360 + $0x10] sm:$0xf]
        %v1366 = vld [vmem:[%s1360 + $0x14] sm:$0xf]
        %v1367 = vld [vmem:[%s1360 + $0x18] sm:$0xf]
        %v1368 = vld [vmem:[%s1360 + $0x1c] sm:$0xf]
        %s1369 = scalar_lea.vmem %s755, 9
        %v1370 = vld [vmem:[%s1369] sm:$0x1]
        %v1372 = vlaneseq
        %v1373 = vshrl.u32 %v1372, 7
        %v1374 = vsub.s32 0, %v1373
        %v1375 = vrot.slane %v1370, %v1374
        %v1385 = vunpack.c.l.b16 %v1361
        %v1386 = vunpack.c.l.b16 %v1362
        %v1387 = vunpack.c.l.b16 %v1363
        %v1388 = vunpack.c.l.b16 %v1364
        %v1389 = vunpack.c.l.b16 %v1365
        %v1390 = vunpack.c.l.b16 %v1366
        %v1391 = vunpack.c.l.b16 %v1367
        %v1392 = vunpack.c.l.b16 %v1368
        %v1393 = vpack.c.b16 %v1386, %v1385
        %v1394 = vpack.c.b16 %v1388, %v1387
        %v1395 = vpack.c.b16 %v1390, %v1389
        %v1396 = vpack.c.b16 %v1392, %v1391
        %1401 = vmatprep.subr.bf16.mxu0 0
        %1402 = vmatpush1.bf16.msra.mxu0 %v1393
        %1403 = vmatprep.subr.bf16.mxu0 0
        %1404 = vmatpush1.bf16.msra.mxu0 %v1394
        %1405 = vmatprep.subr.bf16.mxu0 0
        %1406 = vmatpush1.bf16.msra.mxu0 %v1395
        %1407 = vmatprep.subr.bf16.mxu0 0
        %1408 = vmatpush1.bf16.msra.mxu0 %v1396
        %1409 = vmatprep.subr.bf16.mxu0 0
        %1410 = vmatpush1.bf16.msra.mxu0 0
        %1411 = vmatprep.subr.bf16.mxu0 0
        %1412 = vmatpush1.bf16.msra.mxu0 0
        %1413 = vmatprep.subr.bf16.mxu0 0
        %1414 = vmatpush1.bf16.msra.mxu0 0
        %1415 = vmatprep.subr.bf16.mxu0 0
        %1416 = vmatpush1.bf16.msra.mxu0 0
        %1417 = vmatprep.subr.bf16.mxu0 0
        %1418 = vmatpush1.bf16.msra.mxu0 0
        %1419 = vmatprep.subr.bf16.mxu0 0
        %1420 = vmatpush1.bf16.msra.mxu0 0
        %1421 = vmatprep.subr.bf16.mxu0 0
        %1422 = vmatpush1.bf16.msra.mxu0 0
        %1423 = vmatprep.subr.bf16.mxu0 0
        %1424 = vmatpush1.bf16.msra.mxu0 0
        %1425 = vmatprep.subr.bf16.mxu0 0
        %1426 = vmatpush1.bf16.msra.mxu0 0
        %1427 = vmatprep.subr.bf16.mxu0 0
        %1428 = vmatpush1.bf16.msra.mxu0 0
        %1429 = vmatprep.subr.bf16.mxu0 0
        %1430 = vmatpush1.bf16.msra.mxu0 0
        %1431 = vmatprep.subr.bf16.mxu0 0
        %1432 = vmatpush1.bf16.msra.mxu0 0
        %1433 = vmatprep.mubr.bf16.mxu0 0
        %1434 = vmatmul.mubr.bf16.gmra.mrb[0].mxu0 %v874
        %v1435 = vpop.f32.mrb[0].mxu0
        %v1436 = vadd.f32 %v1375, %v1435
        %v1437 = vpop.f32.mrb[0].mxu0
        %v1438 = vpop.f32.mrb[0].mxu0
        %v1439 = vpop.f32.mrb[0].mxu0
        %1440 = vdwg.mxu0
        %v1441 = vmul.f32 %v1274, 0.25
        %v1442 = vpack.c.bf16 %v1441, %v1441
        %v1443 = vpack.c.bf16 %v1355, %v1355
        %v1444 = vpack.c.bf16 %v1436, %v1436
        %v1446 = vsel %vm1088, %v1442, 0
        %v1449 = vsel %vm1088, %v1443, 0
        %1451 = vmatprep.subr.bf16.mxu0 0
        %1452 = vmatpush1.bf16.xpose.msra.mxu0 %v1449
        %1453 = vmatprep.subr.bf16.mxu0 0
        %1454 = vmatpush1.bf16.xpose.msra.mxu0 0
        %1455 = vmatprep.subr.bf16.mxu0 0
        %1456 = vmatpush1.bf16.xpose.msra.mxu0 0
        %1457 = vmatprep.subr.bf16.mxu0 0
        %1458 = vmatpush1.bf16.xpose.msra.mxu0 0
        %1459 = vmatprep.subr.bf16.mxu0 0
        %1460 = vmatpush1.bf16.xpose.msra.mxu0 0
        %1461 = vmatprep.subr.bf16.mxu0 0
        %1462 = vmatpush1.bf16.xpose.msra.mxu0 0
        %1463 = vmatprep.subr.bf16.mxu0 0
        %1464 = vmatpush1.bf16.xpose.msra.mxu0 0
        %1465 = vmatprep.subr.bf16.mxu0 0
        %1466 = vmatpush1.bf16.xpose.msra.mxu0 0
        %1467 = vmatprep.subr.bf16.mxu0 0
        %1468 = vmatpush1.bf16.xpose.msra.mxu0 0
        %1469 = vmatprep.subr.bf16.mxu0 0
        %1470 = vmatpush1.bf16.xpose.msra.mxu0 0
        %1471 = vmatprep.subr.bf16.mxu0 0
        %1472 = vmatpush1.bf16.xpose.msra.mxu0 0
        %1473 = vmatprep.subr.bf16.mxu0 0
        %1474 = vmatpush1.bf16.xpose.msra.mxu0 0
        %1475 = vmatprep.subr.bf16.mxu0 0
        %1476 = vmatpush1.bf16.xpose.msra.mxu0 0
        %1477 = vmatprep.subr.bf16.mxu0 0
        %1478 = vmatpush1.bf16.xpose.msra.mxu0 0
        %1479 = vmatprep.subr.bf16.mxu0 0
        %1480 = vmatpush1.bf16.xpose.msra.mxu0 0
        %1481 = vmatprep.subr.bf16.mxu0 0
        %1482 = vmatpush1.bf16.xpose.msra.mxu0 0
        %1483 = vmatprep.mubr.bf16.mxu0 0
        %1484 = vmatmul.mubr.bf16.gmra.mrb[0].mxu0 %v1446
        %v1485 = vpop.f32.mrb[0].mxu0
        %v1486 = vadd.f32 %v1086, %v1485
        %v1487 = vpop.f32.mrb[0].mxu0
        %v1488 = vpop.f32.mrb[0].mxu0
        %v1489 = vpop.f32.mrb[0].mxu0
        %1490 = vdwg.mxu0
        %v1491 = vsel %vm1135, %v1486, -inf
        %1492 = vmax.xlane.f32.xlu0 %v1491
        %v1493 = vpop.xlane.xlu0 %1492
        %v1494 = vsub.f32 %v1486, %v1493
        %v1495 = vmul.f32 %v1494, 1.442695
        %v1496 = vpow.pop %v1495
        %v1497 = vsel %vm1135, %v1496, 0.0
        %1498 = vadd.xlane.f32.xlu0 %v1497
        %v1499 = vpop.xlane.xlu0 %1498
        %v1500 = vrcp.pop %v1499
        %v1501 = vmul.f32 %v1496, %v1500
        %v1502 = vpack.c.bf16 %v1501, %v1501
        %v1504 = vsel %vm1135, %v1502, 0
        %v1507 = vsel %vm1151, %v1444, 0
        %1509 = vmatprep.subr.bf16.mxu0 0
        %1510 = vmatpush1.bf16.msra.mxu0 %v1507
        %1511 = vmatprep.subr.bf16.mxu0 0
        %1512 = vmatpush1.bf16.msra.mxu0 0
        %1513 = vmatprep.subr.bf16.mxu0 0
        %1514 = vmatpush1.bf16.msra.mxu0 0
        %1515 = vmatprep.subr.bf16.mxu0 0
        %1516 = vmatpush1.bf16.msra.mxu0 0
        %1517 = vmatprep.subr.bf16.mxu0 0
        %1518 = vmatpush1.bf16.msra.mxu0 0
        %1519 = vmatprep.subr.bf16.mxu0 0
        %1520 = vmatpush1.bf16.msra.mxu0 0
        %1521 = vmatprep.subr.bf16.mxu0 0
        %1522 = vmatpush1.bf16.msra.mxu0 0
        %1523 = vmatprep.subr.bf16.mxu0 0
        %1524 = vmatpush1.bf16.msra.mxu0 0
        %1525 = vmatprep.subr.bf16.mxu0 0
        %1526 = vmatpush1.bf16.msra.mxu0 0
        %1527 = vmatprep.subr.bf16.mxu0 0
        %1528 = vmatpush1.bf16.msra.mxu0 0
        %1529 = vmatprep.subr.bf16.mxu0 0
        %1530 = vmatpush1.bf16.msra.mxu0 0
        %1531 = vmatprep.subr.bf16.mxu0 0
        %1532 = vmatpush1.bf16.msra.mxu0 0
        %1533 = vmatprep.subr.bf16.mxu0 0
        %1534 = vmatpush1.bf16.msra.mxu0 0
        %1535 = vmatprep.subr.bf16.mxu0 0
        %1536 = vmatpush1.bf16.msra.mxu0 0
        %1537 = vmatprep.subr.bf16.mxu0 0
        %1538 = vmatpush1.bf16.msra.mxu0 0
        %1539 = vmatprep.subr.bf16.mxu0 0
        %1540 = vmatpush1.bf16.msra.mxu0 0
        %1541 = vmatprep.mubr.bf16.mxu0 0
        %1542 = vmatmul.mubr.bf16.gmra.mrb[0].mxu0 %v1504
        %v1543 = vpop.f32.mrb[0].mxu0
        %v1544 = vadd.f32 0.0, %v1543
        %v1545 = vpop.f32.mrb[0].mxu0
        %v1546 = vpop.f32.mrb[0].mxu0
        %v1547 = vpop.f32.mrb[0].mxu0
        %1548 = vdwg.mxu0
        %v1549 = vpack.c.bf16 %v1544, %v1544
        %s1550 = scalar_lea.vmem %s760, 8
        %v1551 = vld [vmem:[%s1550] sm:$0xf]
        %v1552 = vld [vmem:[%s1550 + $0x4] sm:$0xf]
        %v1555 = vunpack.c.l.b16 %v1551
        %v1556 = vunpack.c.l.b16 %v1552
        %v1557 = vpack.c.b16 %v1556, %v1555
        %v1560 = vsel %vm1088, %v1549, 0
        %1562 = vmatprep.subr.bf16.mxu0 0
        %1563 = vmatpush1.bf16.msra.mxu0 %v1557
        %1564 = vmatprep.subr.bf16.mxu0 0
        %1565 = vmatpush1.bf16.msra.mxu0 0
        %1566 = vmatprep.subr.bf16.mxu0 0
        %1567 = vmatpush1.bf16.msra.mxu0 0
        %1568 = vmatprep.subr.bf16.mxu0 0
        %1569 = vmatpush1.bf16.msra.mxu0 0
        %1570 = vmatprep.subr.bf16.mxu0 0
        %1571 = vmatpush1.bf16.msra.mxu0 0
        %1572 = vmatprep.subr.bf16.mxu0 0
        %1573 = vmatpush1.bf16.msra.mxu0 0
        %1574 = vmatprep.subr.bf16.mxu0 0
        %1575 = vmatpush1.bf16.msra.mxu0 0
        %1576 = vmatprep.subr.bf16.mxu0 0
        %1577 = vmatpush1.bf16.msra.mxu0 0
        %1578 = vmatprep.subr.bf16.mxu0 0
        %1579 = vmatpush1.bf16.msra.mxu0 0
        %1580 = vmatprep.subr.bf16.mxu0 0
        %1581 = vmatpush1.bf16.msra.mxu0 0
        %1582 = vmatprep.subr.bf16.mxu0 0
        %1583 = vmatpush1.bf16.msra.mxu0 0
        %1584 = vmatprep.subr.bf16.mxu0 0
        %1585 = vmatpush1.bf16.msra.mxu0 0
        %1586 = vmatprep.subr.bf16.mxu0 0
        %1587 = vmatpush1.bf16.msra.mxu0 0
        %1588 = vmatprep.subr.bf16.mxu0 0
        %1589 = vmatpush1.bf16.msra.mxu0 0
        %1590 = vmatprep.subr.bf16.mxu0 0
        %1591 = vmatpush1.bf16.msra.mxu0 0
        %1592 = vmatprep.subr.bf16.mxu0 0
        %1593 = vmatpush1.bf16.msra.mxu0 0
        %1594 = vmatprep.mubr.bf16.mxu0 0
        %1595 = vmatmul.mubr.bf16.gmra.mrb[0].mxu0 %v1560
        %v1596 = vpop.f32.mrb[0].mxu0
        %v1597 = vadd.f32 0.0, %v1596
        %v1598 = vpop.f32.mrb[0].mxu0
        %v1599 = vpop.f32.mrb[0].mxu0
        %v1600 = vpop.f32.mrb[0].mxu0
        %1601 = vdwg.mxu0
        %v1604 = vunpack.c.l.b16 %v1196
        %v1605 = vunpack.c.l.b16 %v1197
        %v1606 = vpack.c.b16 %v1605, %v1604
        %v1609 = vsel %vm1088, %v1195, 0
        %1611 = vmatprep.subr.bf16.mxu0 0
        %1612 = vmatpush1.bf16.msra.mxu0 %v1606
        %1613 = vmatprep.subr.bf16.mxu0 0
        %1614 = vmatpush1.bf16.msra.mxu0 0
        %1615 = vmatprep.subr.bf16.mxu0 0
        %1616 = vmatpush1.bf16.msra.mxu0 0
        %1617 = vmatprep.subr.bf16.mxu0 0
        %1618 = vmatpush1.bf16.msra.mxu0 0
        %1619 = vmatprep.subr.bf16.mxu0 0
        %1620 = vmatpush1.bf16.msra.mxu0 0
        %1621 = vmatprep.subr.bf16.mxu0 0
        %1622 = vmatpush1.bf16.msra.mxu0 0
        %1623 = vmatprep.subr.bf16.mxu0 0
        %1624 = vmatpush1.bf16.msra.mxu0 0
        %1625 = vmatprep.subr.bf16.mxu0 0
        %1626 = vmatpush1.bf16.msra.mxu0 0
        %1627 = vmatprep.subr.bf16.mxu0 0
        %1628 = vmatpush1.bf16.msra.mxu0 0
        %1629 = vmatprep.subr.bf16.mxu0 0
        %1630 = vmatpush1.bf16.msra.mxu0 0
        %1631 = vmatprep.subr.bf16.mxu0 0
        %1632 = vmatpush1.bf16.msra.mxu0 0
        %1633 = vmatprep.subr.bf16.mxu0 0
        %1634 = vmatpush1.bf16.msra.mxu0 0
        %1635 = vmatprep.subr.bf16.mxu0 0
        %1636 = vmatpush1.bf16.msra.mxu0 0
        %1637 = vmatprep.subr.bf16.mxu0 0
        %1638 = vmatpush1.bf16.msra.mxu0 0
        %1639 = vmatprep.subr.bf16.mxu0 0
        %1640 = vmatpush1.bf16.msra.mxu0 0
        %1641 = vmatprep.subr.bf16.mxu0 0
        %1642 = vmatpush1.bf16.msra.mxu0 0
        %1643 = vmatprep.mubr.bf16.mxu0 0
        %1644 = vmatmul.mubr.bf16.gmra.mrb[0].mxu0 %v1609
        %v1645 = vpop.f32.mrb[0].mxu0
        %v1646 = vadd.f32 %v1597, %v1645
        %v1647 = vpop.f32.mrb[0].mxu0
        %v1648 = vpop.f32.mrb[0].mxu0
        %v1649 = vpop.f32.mrb[0].mxu0
        %1650 = vdwg.mxu0
        %s1651 = scalar_lea.vmem %s751, 64
        %v1652 = vld [vmem:[%s1651] sm:$0xf]
        %v1653 = vld [vmem:[%s1651 + $0x4] sm:$0xf]
        %v1654 = vld [vmem:[%s1651 + $0x8] sm:$0xf]
        %v1655 = vld [vmem:[%s1651 + $0xc] sm:$0xf]
        %v1656 = vld [vmem:[%s1651 + $0x10] sm:$0xf]
        %v1657 = vld [vmem:[%s1651 + $0x14] sm:$0xf]
        %v1658 = vld [vmem:[%s1651 + $0x18] sm:$0xf]
        %v1659 = vld [vmem:[%s1651 + $0x1c] sm:$0xf]
        %s1660 = scalar_lea.vmem %s755, 2
        %v1661 = vld [vmem:[%s1660] sm:$0x1]
        %v1663 = vlaneseq
        %v1664 = vshrl.u32 %v1663, 7
        %v1665 = vsub.s32 0, %v1664
        %v1666 = vrot.slane %v1661, %v1665
        %v1676 = vunpack.c.l.b16 %v1652
        %v1677 = vunpack.c.l.b16 %v1653
        %v1678 = vunpack.c.l.b16 %v1654
        %v1679 = vunpack.c.l.b16 %v1655
        %v1680 = vunpack.c.l.b16 %v1656
        %v1681 = vunpack.c.l.b16 %v1657
        %v1682 = vunpack.c.l.b16 %v1658
        %v1683 = vunpack.c.l.b16 %v1659
        %v1684 = vpack.c.b16 %v1677, %v1676
        %v1685 = vpack.c.b16 %v1679, %v1678
        %v1686 = vpack.c.b16 %v1681, %v1680
        %v1687 = vpack.c.b16 %v1683, %v1682
        %1692 = vmatprep.subr.bf16.mxu0 0
        %1693 = vmatpush1.bf16.msra.mxu0 %v1684
        %1694 = vmatprep.subr.bf16.mxu0 0
        %1695 = vmatpush1.bf16.msra.mxu0 %v1685
        %1696 = vmatprep.subr.bf16.mxu0 0
        %1697 = vmatpush1.bf16.msra.mxu0 %v1686
        %1698 = vmatprep.subr.bf16.mxu0 0
        %1699 = vmatpush1.bf16.msra.mxu0 %v1687
        %1700 = vmatprep.subr.bf16.mxu0 0
        %1701 = vmatpush1.bf16.msra.mxu0 0
        %1702 = vmatprep.subr.bf16.mxu0 0
        %1703 = vmatpush1.bf16.msra.mxu0 0
        %1704 = vmatprep.subr.bf16.mxu0 0
        %1705 = vmatpush1.bf16.msra.mxu0 0
        %1706 = vmatprep.subr.bf16.mxu0 0
        %1707 = vmatpush1.bf16.msra.mxu0 0
        %1708 = vmatprep.subr.bf16.mxu0 0
        %1709 = vmatpush1.bf16.msra.mxu0 0
        %1710 = vmatprep.subr.bf16.mxu0 0
        %1711 = vmatpush1.bf16.msra.mxu0 0
        %1712 = vmatprep.subr.bf16.mxu0 0
        %1713 = vmatpush1.bf16.msra.mxu0 0
        %1714 = vmatprep.subr.bf16.mxu0 0
        %1715 = vmatpush1.bf16.msra.mxu0 0
        %1716 = vmatprep.subr.bf16.mxu0 0
        %1717 = vmatpush1.bf16.msra.mxu0 0
        %1718 = vmatprep.subr.bf16.mxu0 0
        %1719 = vmatpush1.bf16.msra.mxu0 0
        %1720 = vmatprep.subr.bf16.mxu0 0
        %1721 = vmatpush1.bf16.msra.mxu0 0
        %1722 = vmatprep.subr.bf16.mxu0 0
        %1723 = vmatpush1.bf16.msra.mxu0 0
        %1724 = vmatprep.mubr.bf16.mxu0 0
        %1725 = vmatmul.mubr.bf16.gmra.mrb[0].mxu0 %v874
        %v1726 = vpop.f32.mrb[0].mxu0
        %v1727 = vadd.f32 %v1666, %v1726
        %v1728 = vpop.f32.mrb[0].mxu0
        %v1729 = vpop.f32.mrb[0].mxu0
        %v1730 = vpop.f32.mrb[0].mxu0
        %1731 = vdwg.mxu0
        %s1732 = scalar_lea.vmem %s751, 192
        %v1733 = vld [vmem:[%s1732] sm:$0xf]
        %v1734 = vld [vmem:[%s1732 + $0x4] sm:$0xf]
        %v1735 = vld [vmem:[%s1732 + $0x8] sm:$0xf]
        %v1736 = vld [vmem:[%s1732 + $0xc] sm:$0xf]
        %v1737 = vld [vmem:[%s1732 + $0x10] sm:$0xf]
        %v1738 = vld [vmem:[%s1732 + $0x14] sm:$0xf]
        %v1739 = vld [vmem:[%s1732 + $0x18] sm:$0xf]
        %v1740 = vld [vmem:[%s1732 + $0x1c] sm:$0xf]
        %s1741 = scalar_lea.vmem %s755, 6
        %v1742 = vld [vmem:[%s1741] sm:$0x1]
        %v1744 = vlaneseq
        %v1745 = vshrl.u32 %v1744, 7
        %v1746 = vsub.s32 0, %v1745
        %v1747 = vrot.slane %v1742, %v1746
        %v1757 = vunpack.c.l.b16 %v1733
        %v1758 = vunpack.c.l.b16 %v1734
        %v1759 = vunpack.c.l.b16 %v1735
        %v1760 = vunpack.c.l.b16 %v1736
        %v1761 = vunpack.c.l.b16 %v1737
        %v1762 = vunpack.c.l.b16 %v1738
        %v1763 = vunpack.c.l.b16 %v1739
        %v1764 = vunpack.c.l.b16 %v1740
        %v1765 = vpack.c.b16 %v1758, %v1757
        %v1766 = vpack.c.b16 %v1760, %v1759
        %v1767 = vpack.c.b16 %v1762, %v1761
        %v1768 = vpack.c.b16 %v1764, %v1763
        %1773 = vmatprep.subr.bf16.mxu0 0
        %1774 = vmatpush1.bf16.msra.mxu0 %v1765
        %1775 = vmatprep.subr.bf16.mxu0 0
        %1776 = vmatpush1.bf16.msra.mxu0 %v1766
        %1777 = vmatprep.subr.bf16.mxu0 0
        %1778 = vmatpush1.bf16.msra.mxu0 %v1767
        %1779 = vmatprep.subr.bf16.mxu0 0
        %1780 = vmatpush1.bf16.msra.mxu0 %v1768
        %1781 = vmatprep.subr.bf16.mxu0 0
        %1782 = vmatpush1.bf16.msra.mxu0 0
        %1783 = vmatprep.subr.bf16.mxu0 0
        %1784 = vmatpush1.bf16.msra.mxu0 0
        %1785 = vmatprep.subr.bf16.mxu0 0
        %1786 = vmatpush1.bf16.msra.mxu0 0
        %1787 = vmatprep.subr.bf16.mxu0 0
        %1788 = vmatpush1.bf16.msra.mxu0 0
        %1789 = vmatprep.subr.bf16.mxu0 0
        %1790 = vmatpush1.bf16.msra.mxu0 0
        %1791 = vmatprep.subr.bf16.mxu0 0
        %1792 = vmatpush1.bf16.msra.mxu0 0
        %1793 = vmatprep.subr.bf16.mxu0 0
        %1794 = vmatpush1.bf16.msra.mxu0 0
        %1795 = vmatprep.subr.bf16.mxu0 0
        %1796 = vmatpush1.bf16.msra.mxu0 0
        %1797 = vmatprep.subr.bf16.mxu0 0
        %1798 = vmatpush1.bf16.msra.mxu0 0
        %1799 = vmatprep.subr.bf16.mxu0 0
        %1800 = vmatpush1.bf16.msra.mxu0 0
        %1801 = vmatprep.subr.bf16.mxu0 0
        %1802 = vmatpush1.bf16.msra.mxu0 0
        %1803 = vmatprep.subr.bf16.mxu0 0
        %1804 = vmatpush1.bf16.msra.mxu0 0
        %1805 = vmatprep.mubr.bf16.mxu0 0
        %1806 = vmatmul.mubr.bf16.gmra.mrb[0].mxu0 %v874
        %v1807 = vpop.f32.mrb[0].mxu0
        %v1808 = vadd.f32 %v1747, %v1807
        %v1809 = vpop.f32.mrb[0].mxu0
        %v1810 = vpop.f32.mrb[0].mxu0
        %v1811 = vpop.f32.mrb[0].mxu0
        %1812 = vdwg.mxu0
        %s1813 = scalar_lea.vmem %s751, 320
        %v1814 = vld [vmem:[%s1813] sm:$0xf]
        %v1815 = vld [vmem:[%s1813 + $0x4] sm:$0xf]
        %v1816 = vld [vmem:[%s1813 + $0x8] sm:$0xf]
        %v1817 = vld [vmem:[%s1813 + $0xc] sm:$0xf]
        %v1818 = vld [vmem:[%s1813 + $0x10] sm:$0xf]
        %v1819 = vld [vmem:[%s1813 + $0x14] sm:$0xf]
        %v1820 = vld [vmem:[%s1813 + $0x18] sm:$0xf]
        %v1821 = vld [vmem:[%s1813 + $0x1c] sm:$0xf]
        %s1822 = scalar_lea.vmem %s755, 10
        %v1823 = vld [vmem:[%s1822] sm:$0x1]
        %v1825 = vlaneseq
        %v1826 = vshrl.u32 %v1825, 7
        %v1827 = vsub.s32 0, %v1826
        %v1828 = vrot.slane %v1823, %v1827
        %v1838 = vunpack.c.l.b16 %v1814
        %v1839 = vunpack.c.l.b16 %v1815
        %v1840 = vunpack.c.l.b16 %v1816
        %v1841 = vunpack.c.l.b16 %v1817
        %v1842 = vunpack.c.l.b16 %v1818
        %v1843 = vunpack.c.l.b16 %v1819
        %v1844 = vunpack.c.l.b16 %v1820
        %v1845 = vunpack.c.l.b16 %v1821
        %v1846 = vpack.c.b16 %v1839, %v1838
        %v1847 = vpack.c.b16 %v1841, %v1840
        %v1848 = vpack.c.b16 %v1843, %v1842
        %v1849 = vpack.c.b16 %v1845, %v1844
        %1854 = vmatprep.subr.bf16.mxu0 0
        %1855 = vmatpush1.bf16.msra.mxu0 %v1846
        %1856 = vmatprep.subr.bf16.mxu0 0
        %1857 = vmatpush1.bf16.msra.mxu0 %v1847
        %1858 = vmatprep.subr.bf16.mxu0 0
        %1859 = vmatpush1.bf16.msra.mxu0 %v1848
        %1860 = vmatprep.subr.bf16.mxu0 0
        %1861 = vmatpush1.bf16.msra.mxu0 %v1849
        %1862 = vmatprep.subr.bf16.mxu0 0
        %1863 = vmatpush1.bf16.msra.mxu0 0
        %1864 = vmatprep.subr.bf16.mxu0 0
        %1865 = vmatpush1.bf16.msra.mxu0 0
        %1866 = vmatprep.subr.bf16.mxu0 0
        %1867 = vmatpush1.bf16.msra.mxu0 0
        %1868 = vmatprep.subr.bf16.mxu0 0
        %1869 = vmatpush1.bf16.msra.mxu0 0
        %1870 = vmatprep.subr.bf16.mxu0 0
        %1871 = vmatpush1.bf16.msra.mxu0 0
        %1872 = vmatprep.subr.bf16.mxu0 0
        %1873 = vmatpush1.bf16.msra.mxu0 0
        %1874 = vmatprep.subr.bf16.mxu0 0
        %1875 = vmatpush1.bf16.msra.mxu0 0
        %1876 = vmatprep.subr.bf16.mxu0 0
        %1877 = vmatpush1.bf16.msra.mxu0 0
        %1878 = vmatprep.subr.bf16.mxu0 0
        %1879 = vmatpush1.bf16.msra.mxu0 0
        %1880 = vmatprep.subr.bf16.mxu0 0
        %1881 = vmatpush1.bf16.msra.mxu0 0
        %1882 = vmatprep.subr.bf16.mxu0 0
        %1883 = vmatpush1.bf16.msra.mxu0 0
        %1884 = vmatprep.subr.bf16.mxu0 0
        %1885 = vmatpush1.bf16.msra.mxu0 0
        %1886 = vmatprep.mubr.bf16.mxu0 0
        %1887 = vmatmul.mubr.bf16.gmra.mrb[0].mxu0 %v874
        %v1888 = vpop.f32.mrb[0].mxu0
        %v1889 = vadd.f32 %v1828, %v1888
        %v1890 = vpop.f32.mrb[0].mxu0
        %v1891 = vpop.f32.mrb[0].mxu0
        %v1892 = vpop.f32.mrb[0].mxu0
        %1893 = vdwg.mxu0
        %v1894 = vmul.f32 %v1727, 0.25
        %v1895 = vpack.c.bf16 %v1894, %v1894
        %v1896 = vpack.c.bf16 %v1808, %v1808
        %v1897 = vpack.c.bf16 %v1889, %v1889
        %v1899 = vsel %vm1088, %v1895, 0
        %v1902 = vsel %vm1088, %v1896, 0
        %1904 = vmatprep.subr.bf16.mxu0 0
        %1905 = vmatpush1.bf16.xpose.msra.mxu0 %v1902
        %1906 = vmatprep.subr.bf16.mxu0 0
        %1907 = vmatpush1.bf16.xpose.msra.mxu0 0
        %1908 = vmatprep.subr.bf16.mxu0 0
        %1909 = vmatpush1.bf16.xpose.msra.mxu0 0
        %1910 = vmatprep.subr.bf16.mxu0 0
        %1911 = vmatpush1.bf16.xpose.msra.mxu0 0
        %1912 = vmatprep.subr.bf16.mxu0 0
        %1913 = vmatpush1.bf16.xpose.msra.mxu0 0
        %1914 = vmatprep.subr.bf16.mxu0 0
        %1915 = vmatpush1.bf16.xpose.msra.mxu0 0
        %1916 = vmatprep.subr.bf16.mxu0 0
        %1917 = vmatpush1.bf16.xpose.msra.mxu0 0
        %1918 = vmatprep.subr.bf16.mxu0 0
        %1919 = vmatpush1.bf16.xpose.msra.mxu0 0
        %1920 = vmatprep.subr.bf16.mxu0 0
        %1921 = vmatpush1.bf16.xpose.msra.mxu0 0
        %1922 = vmatprep.subr.bf16.mxu0 0
        %1923 = vmatpush1.bf16.xpose.msra.mxu0 0
        %1924 = vmatprep.subr.bf16.mxu0 0
        %1925 = vmatpush1.bf16.xpose.msra.mxu0 0
        %1926 = vmatprep.subr.bf16.mxu0 0
        %1927 = vmatpush1.bf16.xpose.msra.mxu0 0
        %1928 = vmatprep.subr.bf16.mxu0 0
        %1929 = vmatpush1.bf16.xpose.msra.mxu0 0
        %1930 = vmatprep.subr.bf16.mxu0 0
        %1931 = vmatpush1.bf16.xpose.msra.mxu0 0
        %1932 = vmatprep.subr.bf16.mxu0 0
        %1933 = vmatpush1.bf16.xpose.msra.mxu0 0
        %1934 = vmatprep.subr.bf16.mxu0 0
        %1935 = vmatpush1.bf16.xpose.msra.mxu0 0
        %1936 = vmatprep.mubr.bf16.mxu0 0
        %1937 = vmatmul.mubr.bf16.gmra.mrb[0].mxu0 %v1899
        %v1938 = vpop.f32.mrb[0].mxu0
        %v1939 = vadd.f32 %v1086, %v1938
        %v1940 = vpop.f32.mrb[0].mxu0
        %v1941 = vpop.f32.mrb[0].mxu0
        %v1942 = vpop.f32.mrb[0].mxu0
        %1943 = vdwg.mxu0
        %v1944 = vsel %vm1135, %v1939, -inf
        %1945 = vmax.xlane.f32.xlu0 %v1944
        %v1946 = vpop.xlane.xlu0 %1945
        %v1947 = vsub.f32 %v1939, %v1946
        %v1948 = vmul.f32 %v1947, 1.442695
        %v1949 = vpow.pop %v1948
        %v1950 = vsel %vm1135, %v1949, 0.0
        %1951 = vadd.xlane.f32.xlu0 %v1950
        %v1952 = vpop.xlane.xlu0 %1951
        %v1953 = vrcp.pop %v1952
        %v1954 = vmul.f32 %v1949, %v1953
        %v1955 = vpack.c.bf16 %v1954, %v1954
        %v1957 = vsel %vm1135, %v1955, 0
        %v1960 = vsel %vm1151, %v1897, 0
        %1962 = vmatprep.subr.bf16.mxu0 0
        %1963 = vmatpush1.bf16.msra.mxu0 %v1960
        %1964 = vmatprep.subr.bf16.mxu0 0
        %1965 = vmatpush1.bf16.msra.mxu0 0
        %1966 = vmatprep.subr.bf16.mxu0 0
        %1967 = vmatpush1.bf16.msra.mxu0 0
        %1968 = vmatprep.subr.bf16.mxu0 0
        %1969 = vmatpush1.bf16.msra.mxu0 0
        %1970 = vmatprep.subr.bf16.mxu0 0
        %1971 = vmatpush1.bf16.msra.mxu0 0
        %1972 = vmatprep.subr.bf16.mxu0 0
        %1973 = vmatpush1.bf16.msra.mxu0 0
        %1974 = vmatprep.subr.bf16.mxu0 0
        %1975 = vmatpush1.bf16.msra.mxu0 0
        %1976 = vmatprep.subr.bf16.mxu0 0
        %1977 = vmatpush1.bf16.msra.mxu0 0
        %1978 = vmatprep.subr.bf16.mxu0 0
        %1979 = vmatpush1.bf16.msra.mxu0 0
        %1980 = vmatprep.subr.bf16.mxu0 0
        %1981 = vmatpush1.bf16.msra.mxu0 0
        %1982 = vmatprep.subr.bf16.mxu0 0
        %1983 = vmatpush1.bf16.msra.mxu0 0
        %1984 = vmatprep.subr.bf16.mxu0 0
        %1985 = vmatpush1.bf16.msra.mxu0 0
        %1986 = vmatprep.subr.bf16.mxu0 0
        %1987 = vmatpush1.bf16.msra.mxu0 0
        %1988 = vmatprep.subr.bf16.mxu0 0
        %1989 = vmatpush1.bf16.msra.mxu0 0
        %1990 = vmatprep.subr.bf16.mxu0 0
        %1991 = vmatpush1.bf16.msra.mxu0 0
        %1992 = vmatprep.subr.bf16.mxu0 0
        %1993 = vmatpush1.bf16.msra.mxu0 0
        %1994 = vmatprep.mubr.bf16.mxu0 0
        %1995 = vmatmul.mubr.bf16.gmra.mrb[0].mxu0 %v1957
        %v1996 = vpop.f32.mrb[0].mxu0
        %v1997 = vadd.f32 0.0, %v1996
        %v1998 = vpop.f32.mrb[0].mxu0
        %v1999 = vpop.f32.mrb[0].mxu0
        %v2000 = vpop.f32.mrb[0].mxu0
        %2001 = vdwg.mxu0
        %v2002 = vpack.c.bf16 %v1997, %v1997
        %s2003 = scalar_lea.vmem %s760, 16
        %v2004 = vld [vmem:[%s2003] sm:$0xf]
        %v2005 = vld [vmem:[%s2003 + $0x4] sm:$0xf]
        %v2008 = vunpack.c.l.b16 %v2004
        %v2009 = vunpack.c.l.b16 %v2005
        %v2010 = vpack.c.b16 %v2009, %v2008
        %v2013 = vsel %vm1088, %v2002, 0
        %2015 = vmatprep.subr.bf16.mxu0 0
        %2016 = vmatpush1.bf16.msra.mxu0 %v2010
        %2017 = vmatprep.subr.bf16.mxu0 0
        %2018 = vmatpush1.bf16.msra.mxu0 0
        %2019 = vmatprep.subr.bf16.mxu0 0
        %2020 = vmatpush1.bf16.msra.mxu0 0
        %2021 = vmatprep.subr.bf16.mxu0 0
        %2022 = vmatpush1.bf16.msra.mxu0 0
        %2023 = vmatprep.subr.bf16.mxu0 0
        %2024 = vmatpush1.bf16.msra.mxu0 0
        %2025 = vmatprep.subr.bf16.mxu0 0
        %2026 = vmatpush1.bf16.msra.mxu0 0
        %2027 = vmatprep.subr.bf16.mxu0 0
        %2028 = vmatpush1.bf16.msra.mxu0 0
        %2029 = vmatprep.subr.bf16.mxu0 0
        %2030 = vmatpush1.bf16.msra.mxu0 0
        %2031 = vmatprep.subr.bf16.mxu0 0
        %2032 = vmatpush1.bf16.msra.mxu0 0
        %2033 = vmatprep.subr.bf16.mxu0 0
        %2034 = vmatpush1.bf16.msra.mxu0 0
        %2035 = vmatprep.subr.bf16.mxu0 0
        %2036 = vmatpush1.bf16.msra.mxu0 0
        %2037 = vmatprep.subr.bf16.mxu0 0
        %2038 = vmatpush1.bf16.msra.mxu0 0
        %2039 = vmatprep.subr.bf16.mxu0 0
        %2040 = vmatpush1.bf16.msra.mxu0 0
        %2041 = vmatprep.subr.bf16.mxu0 0
        %2042 = vmatpush1.bf16.msra.mxu0 0
        %2043 = vmatprep.subr.bf16.mxu0 0
        %2044 = vmatpush1.bf16.msra.mxu0 0
        %2045 = vmatprep.subr.bf16.mxu0 0
        %2046 = vmatpush1.bf16.msra.mxu0 0
        %2047 = vmatprep.mubr.bf16.mxu0 0
        %2048 = vmatmul.mubr.bf16.gmra.mrb[0].mxu0 %v2013
        %v2049 = vpop.f32.mrb[0].mxu0
        %v2050 = vadd.f32 0.0, %v2049
        %v2051 = vpop.f32.mrb[0].mxu0
        %v2052 = vpop.f32.mrb[0].mxu0
        %v2053 = vpop.f32.mrb[0].mxu0
        %2054 = vdwg.mxu0
        %v2055 = vadd.f32 %v1646, %v2050
        %s2056 = scalar_lea.vmem %s751, 96
        %v2057 = vld [vmem:[%s2056] sm:$0xf]
        %v2058 = vld [vmem:[%s2056 + $0x4] sm:$0xf]
        %v2059 = vld [vmem:[%s2056 + $0x8] sm:$0xf]
        %v2060 = vld [vmem:[%s2056 + $0xc] sm:$0xf]
        %v2061 = vld [vmem:[%s2056 + $0x10] sm:$0xf]
        %v2062 = vld [vmem:[%s2056 + $0x14] sm:$0xf]
        %v2063 = vld [vmem:[%s2056 + $0x18] sm:$0xf]
        %v2064 = vld [vmem:[%s2056 + $0x1c] sm:$0xf]
        %s2065 = scalar_lea.vmem %s755, 3
        %v2066 = vld [vmem:[%s2065] sm:$0x1]
        %v2068 = vlaneseq
        %v2069 = vshrl.u32 %v2068, 7
        %v2070 = vsub.s32 0, %v2069
        %v2071 = vrot.slane %v2066, %v2070
        %v2081 = vunpack.c.l.b16 %v2057
        %v2082 = vunpack.c.l.b16 %v2058
        %v2083 = vunpack.c.l.b16 %v2059
        %v2084 = vunpack.c.l.b16 %v2060
        %v2085 = vunpack.c.l.b16 %v2061
        %v2086 = vunpack.c.l.b16 %v2062
        %v2087 = vunpack.c.l.b16 %v2063
        %v2088 = vunpack.c.l.b16 %v2064
        %v2089 = vpack.c.b16 %v2082, %v2081
        %v2090 = vpack.c.b16 %v2084, %v2083
        %v2091 = vpack.c.b16 %v2086, %v2085
        %v2092 = vpack.c.b16 %v2088, %v2087
        %2097 = vmatprep.subr.bf16.mxu0 0
        %2098 = vmatpush1.bf16.msra.mxu0 %v2089
        %2099 = vmatprep.subr.bf16.mxu0 0
        %2100 = vmatpush1.bf16.msra.mxu0 %v2090
        %2101 = vmatprep.subr.bf16.mxu0 0
        %2102 = vmatpush1.bf16.msra.mxu0 %v2091
        %2103 = vmatprep.subr.bf16.mxu0 0
        %2104 = vmatpush1.bf16.msra.mxu0 %v2092
        %2105 = vmatprep.subr.bf16.mxu0 0
        %2106 = vmatpush1.bf16.msra.mxu0 0
        %2107 = vmatprep.subr.bf16.mxu0 0
        %2108 = vmatpush1.bf16.msra.mxu0 0
        %2109 = vmatprep.subr.bf16.mxu0 0
        %2110 = vmatpush1.bf16.msra.mxu0 0
        %2111 = vmatprep.subr.bf16.mxu0 0
        %2112 = vmatpush1.bf16.msra.mxu0 0
        %2113 = vmatprep.subr.bf16.mxu0 0
        %2114 = vmatpush1.bf16.msra.mxu0 0
        %2115 = vmatprep.subr.bf16.mxu0 0
        %2116 = vmatpush1.bf16.msra.mxu0 0
        %2117 = vmatprep.subr.bf16.mxu0 0
        %2118 = vmatpush1.bf16.msra.mxu0 0
        %2119 = vmatprep.subr.bf16.mxu0 0
        %2120 = vmatpush1.bf16.msra.mxu0 0
        %2121 = vmatprep.subr.bf16.mxu0 0
        %2122 = vmatpush1.bf16.msra.mxu0 0
        %2123 = vmatprep.subr.bf16.mxu0 0
        %2124 = vmatpush1.bf16.msra.mxu0 0
        %2125 = vmatprep.subr.bf16.mxu0 0
        %2126 = vmatpush1.bf16.msra.mxu0 0
        %2127 = vmatprep.subr.bf16.mxu0 0
        %2128 = vmatpush1.bf16.msra.mxu0 0
        %2129 = vmatprep.mubr.bf16.mxu0 0
        %2130 = vmatmul.mubr.bf16.gmra.mrb[0].mxu0 %v874
        %v2131 = vpop.f32.mrb[0].mxu0
        %v2132 = vadd.f32 %v2071, %v2131
        %v2133 = vpop.f32.mrb[0].mxu0
        %v2134 = vpop.f32.mrb[0].mxu0
        %v2135 = vpop.f32.mrb[0].mxu0
        %2136 = vdwg.mxu0
        %s2137 = scalar_lea.vmem %s751, 224
        %v2138 = vld [vmem:[%s2137] sm:$0xf]
        %v2139 = vld [vmem:[%s2137 + $0x4] sm:$0xf]
        %v2140 = vld [vmem:[%s2137 + $0x8] sm:$0xf]
        %v2141 = vld [vmem:[%s2137 + $0xc] sm:$0xf]
        %v2142 = vld [vmem:[%s2137 + $0x10] sm:$0xf]
        %v2143 = vld [vmem:[%s2137 + $0x14] sm:$0xf]
        %v2144 = vld [vmem:[%s2137 + $0x18] sm:$0xf]
        %v2145 = vld [vmem:[%s2137 + $0x1c] sm:$0xf]
        %s2146 = scalar_lea.vmem %s755, 7
        %v2147 = vld [vmem:[%s2146] sm:$0x1]
        %v2149 = vlaneseq
        %v2150 = vshrl.u32 %v2149, 7
        %v2151 = vsub.s32 0, %v2150
        %v2152 = vrot.slane %v2147, %v2151
        %v2162 = vunpack.c.l.b16 %v2138
        %v2163 = vunpack.c.l.b16 %v2139
        %v2164 = vunpack.c.l.b16 %v2140
        %v2165 = vunpack.c.l.b16 %v2141
        %v2166 = vunpack.c.l.b16 %v2142
        %v2167 = vunpack.c.l.b16 %v2143
        %v2168 = vunpack.c.l.b16 %v2144
        %v2169 = vunpack.c.l.b16 %v2145
        %v2170 = vpack.c.b16 %v2163, %v2162
        %v2171 = vpack.c.b16 %v2165, %v2164
        %v2172 = vpack.c.b16 %v2167, %v2166
        %v2173 = vpack.c.b16 %v2169, %v2168
        %2178 = vmatprep.subr.bf16.mxu0 0
        %2179 = vmatpush1.bf16.msra.mxu0 %v2170
        %2180 = vmatprep.subr.bf16.mxu0 0
        %2181 = vmatpush1.bf16.msra.mxu0 %v2171
        %2182 = vmatprep.subr.bf16.mxu0 0
        %2183 = vmatpush1.bf16.msra.mxu0 %v2172
        %2184 = vmatprep.subr.bf16.mxu0 0
        %2185 = vmatpush1.bf16.msra.mxu0 %v2173
        %2186 = vmatprep.subr.bf16.mxu0 0
        %2187 = vmatpush1.bf16.msra.mxu0 0
        %2188 = vmatprep.subr.bf16.mxu0 0
        %2189 = vmatpush1.bf16.msra.mxu0 0
        %2190 = vmatprep.subr.bf16.mxu0 0
        %2191 = vmatpush1.bf16.msra.mxu0 0
        %2192 = vmatprep.subr.bf16.mxu0 0
        %2193 = vmatpush1.bf16.msra.mxu0 0
        %2194 = vmatprep.subr.bf16.mxu0 0
        %2195 = vmatpush1.bf16.msra.mxu0 0
        %2196 = vmatprep.subr.bf16.mxu0 0
        %2197 = vmatpush1.bf16.msra.mxu0 0
        %2198 = vmatprep.subr.bf16.mxu0 0
        %2199 = vmatpush1.bf16.msra.mxu0 0
        %2200 = vmatprep.subr.bf16.mxu0 0
        %2201 = vmatpush1.bf16.msra.mxu0 0
        %2202 = vmatprep.subr.bf16.mxu0 0
        %2203 = vmatpush1.bf16.msra.mxu0 0
        %2204 = vmatprep.subr.bf16.mxu0 0
        %2205 = vmatpush1.bf16.msra.mxu0 0
        %2206 = vmatprep.subr.bf16.mxu0 0
        %2207 = vmatpush1.bf16.msra.mxu0 0
        %2208 = vmatprep.subr.bf16.mxu0 0
        %2209 = vmatpush1.bf16.msra.mxu0 0
        %2210 = vmatprep.mubr.bf16.mxu0 0
        %2211 = vmatmul.mubr.bf16.gmra.mrb[0].mxu0 %v874
        %v2212 = vpop.f32.mrb[0].mxu0
        %v2213 = vadd.f32 %v2152, %v2212
        %v2214 = vpop.f32.mrb[0].mxu0
        %v2215 = vpop.f32.mrb[0].mxu0
        %v2216 = vpop.f32.mrb[0].mxu0
        %2217 = vdwg.mxu0
        %s2218 = scalar_lea.vmem %s751, 352
        %v2219 = vld [vmem:[%s2218] sm:$0xf]
        %v2220 = vld [vmem:[%s2218 + $0x4] sm:$0xf]
        %v2221 = vld [vmem:[%s2218 + $0x8] sm:$0xf]
        %v2222 = vld [vmem:[%s2218 + $0xc] sm:$0xf]
        %v2223 = vld [vmem:[%s2218 + $0x10] sm:$0xf]
        %v2224 = vld [vmem:[%s2218 + $0x14] sm:$0xf]
        %v2225 = vld [vmem:[%s2218 + $0x18] sm:$0xf]
        %v2226 = vld [vmem:[%s2218 + $0x1c] sm:$0xf]
        %s2227 = scalar_lea.vmem %s755, 11
        %v2228 = vld [vmem:[%s2227] sm:$0x1]
        %v2230 = vlaneseq
        %v2231 = vshrl.u32 %v2230, 7
        %v2232 = vsub.s32 0, %v2231
        %v2233 = vrot.slane %v2228, %v2232
        %v2243 = vunpack.c.l.b16 %v2219
        %v2244 = vunpack.c.l.b16 %v2220
        %v2245 = vunpack.c.l.b16 %v2221
        %v2246 = vunpack.c.l.b16 %v2222
        %v2247 = vunpack.c.l.b16 %v2223
        %v2248 = vunpack.c.l.b16 %v2224
        %v2249 = vunpack.c.l.b16 %v2225
        %v2250 = vunpack.c.l.b16 %v2226
        %v2251 = vpack.c.b16 %v2244, %v2243
        %v2252 = vpack.c.b16 %v2246, %v2245
        %v2253 = vpack.c.b16 %v2248, %v2247
        %v2254 = vpack.c.b16 %v2250, %v2249
        %2259 = vmatprep.subr.bf16.mxu0 0
        %2260 = vmatpush1.bf16.msra.mxu0 %v2251
        %2261 = vmatprep.subr.bf16.mxu0 0
        %2262 = vmatpush1.bf16.msra.mxu0 %v2252
        %2263 = vmatprep.subr.bf16.mxu0 0
        %2264 = vmatpush1.bf16.msra.mxu0 %v2253
        %2265 = vmatprep.subr.bf16.mxu0 0
        %2266 = vmatpush1.bf16.msra.mxu0 %v2254
        %2267 = vmatprep.subr.bf16.mxu0 0
        %2268 = vmatpush1.bf16.msra.mxu0 0
        %2269 = vmatprep.subr.bf16.mxu0 0
        %2270 = vmatpush1.bf16.msra.mxu0 0
        %2271 = vmatprep.subr.bf16.mxu0 0
        %2272 = vmatpush1.bf16.msra.mxu0 0
        %2273 = vmatprep.subr.bf16.mxu0 0
        %2274 = vmatpush1.bf16.msra.mxu0 0
        %2275 = vmatprep.subr.bf16.mxu0 0
        %2276 = vmatpush1.bf16.msra.mxu0 0
        %2277 = vmatprep.subr.bf16.mxu0 0
        %2278 = vmatpush1.bf16.msra.mxu0 0
        %2279 = vmatprep.subr.bf16.mxu0 0
        %2280 = vmatpush1.bf16.msra.mxu0 0
        %2281 = vmatprep.subr.bf16.mxu0 0
        %2282 = vmatpush1.bf16.msra.mxu0 0
        %2283 = vmatprep.subr.bf16.mxu0 0
        %2284 = vmatpush1.bf16.msra.mxu0 0
        %2285 = vmatprep.subr.bf16.mxu0 0
        %2286 = vmatpush1.bf16.msra.mxu0 0
        %2287 = vmatprep.subr.bf16.mxu0 0
        %2288 = vmatpush1.bf16.msra.mxu0 0
        %2289 = vmatprep.subr.bf16.mxu0 0
        %2290 = vmatpush1.bf16.msra.mxu0 0
        %2291 = vmatprep.mubr.bf16.mxu0 0
        %2292 = vmatmul.mubr.bf16.gmra.mrb[0].mxu0 %v874
        %v2293 = vpop.f32.mrb[0].mxu0
        %v2294 = vadd.f32 %v2233, %v2293
        %v2295 = vpop.f32.mrb[0].mxu0
        %v2296 = vpop.f32.mrb[0].mxu0
        %v2297 = vpop.f32.mrb[0].mxu0
        %2298 = vdwg.mxu0
        %v2299 = vmul.f32 %v2132, 0.25
        %v2300 = vpack.c.bf16 %v2299, %v2299
        %v2301 = vpack.c.bf16 %v2213, %v2213
        %v2302 = vpack.c.bf16 %v2294, %v2294
        %v2304 = vsel %vm1088, %v2300, 0
        %v2307 = vsel %vm1088, %v2301, 0
        %2309 = vmatprep.subr.bf16.mxu0 0
        %2310 = vmatpush1.bf16.xpose.msra.mxu0 %v2307
        %2311 = vmatprep.subr.bf16.mxu0 0
        %2312 = vmatpush1.bf16.xpose.msra.mxu0 0
        %2313 = vmatprep.subr.bf16.mxu0 0
        %2314 = vmatpush1.bf16.xpose.msra.mxu0 0
        %2315 = vmatprep.subr.bf16.mxu0 0
        %2316 = vmatpush1.bf16.xpose.msra.mxu0 0
        %2317 = vmatprep.subr.bf16.mxu0 0
        %2318 = vmatpush1.bf16.xpose.msra.mxu0 0
        %2319 = vmatprep.subr.bf16.mxu0 0
        %2320 = vmatpush1.bf16.xpose.msra.mxu0 0
        %2321 = vmatprep.subr.bf16.mxu0 0
        %2322 = vmatpush1.bf16.xpose.msra.mxu0 0
        %2323 = vmatprep.subr.bf16.mxu0 0
        %2324 = vmatpush1.bf16.xpose.msra.mxu0 0
        %2325 = vmatprep.subr.bf16.mxu0 0
        %2326 = vmatpush1.bf16.xpose.msra.mxu0 0
        %2327 = vmatprep.subr.bf16.mxu0 0
        %2328 = vmatpush1.bf16.xpose.msra.mxu0 0
        %2329 = vmatprep.subr.bf16.mxu0 0
        %2330 = vmatpush1.bf16.xpose.msra.mxu0 0
        %2331 = vmatprep.subr.bf16.mxu0 0
        %2332 = vmatpush1.bf16.xpose.msra.mxu0 0
        %2333 = vmatprep.subr.bf16.mxu0 0
        %2334 = vmatpush1.bf16.xpose.msra.mxu0 0
        %2335 = vmatprep.subr.bf16.mxu0 0
        %2336 = vmatpush1.bf16.xpose.msra.mxu0 0
        %2337 = vmatprep.subr.bf16.mxu0 0
        %2338 = vmatpush1.bf16.xpose.msra.mxu0 0
        %2339 = vmatprep.subr.bf16.mxu0 0
        %2340 = vmatpush1.bf16.xpose.msra.mxu0 0
        %2341 = vmatprep.mubr.bf16.mxu0 0
        %2342 = vmatmul.mubr.bf16.gmra.mrb[0].mxu0 %v2304
        %v2343 = vpop.f32.mrb[0].mxu0
        %v2344 = vadd.f32 %v1086, %v2343
        %v2345 = vpop.f32.mrb[0].mxu0
        %v2346 = vpop.f32.mrb[0].mxu0
        %v2347 = vpop.f32.mrb[0].mxu0
        %2348 = vdwg.mxu0
        %v2349 = vsel %vm1135, %v2344, -inf
        %2350 = vmax.xlane.f32.xlu0 %v2349
        %v2351 = vpop.xlane.xlu0 %2350
        %v2352 = vsub.f32 %v2344, %v2351
        %v2353 = vmul.f32 %v2352, 1.442695
        %v2354 = vpow.pop %v2353
        %v2355 = vsel %vm1135, %v2354, 0.0
        %2356 = vadd.xlane.f32.xlu0 %v2355
        %v2357 = vpop.xlane.xlu0 %2356
        %v2358 = vrcp.pop %v2357
        %v2359 = vmul.f32 %v2354, %v2358
        %v2360 = vpack.c.bf16 %v2359, %v2359
        %v2362 = vsel %vm1135, %v2360, 0
        %v2365 = vsel %vm1151, %v2302, 0
        %2367 = vmatprep.subr.bf16.mxu0 0
        %2368 = vmatpush1.bf16.msra.mxu0 %v2365
        %2369 = vmatprep.subr.bf16.mxu0 0
        %2370 = vmatpush1.bf16.msra.mxu0 0
        %2371 = vmatprep.subr.bf16.mxu0 0
        %2372 = vmatpush1.bf16.msra.mxu0 0
        %2373 = vmatprep.subr.bf16.mxu0 0
        %2374 = vmatpush1.bf16.msra.mxu0 0
        %2375 = vmatprep.subr.bf16.mxu0 0
        %2376 = vmatpush1.bf16.msra.mxu0 0
        %2377 = vmatprep.subr.bf16.mxu0 0
        %2378 = vmatpush1.bf16.msra.mxu0 0
        %2379 = vmatprep.subr.bf16.mxu0 0
        %2380 = vmatpush1.bf16.msra.mxu0 0
        %2381 = vmatprep.subr.bf16.mxu0 0
        %2382 = vmatpush1.bf16.msra.mxu0 0
        %2383 = vmatprep.subr.bf16.mxu0 0
        %2384 = vmatpush1.bf16.msra.mxu0 0
        %2385 = vmatprep.subr.bf16.mxu0 0
        %2386 = vmatpush1.bf16.msra.mxu0 0
        %2387 = vmatprep.subr.bf16.mxu0 0
        %2388 = vmatpush1.bf16.msra.mxu0 0
        %2389 = vmatprep.subr.bf16.mxu0 0
        %2390 = vmatpush1.bf16.msra.mxu0 0
        %2391 = vmatprep.subr.bf16.mxu0 0
        %2392 = vmatpush1.bf16.msra.mxu0 0
        %2393 = vmatprep.subr.bf16.mxu0 0
        %2394 = vmatpush1.bf16.msra.mxu0 0
        %2395 = vmatprep.subr.bf16.mxu0 0
        %2396 = vmatpush1.bf16.msra.mxu0 0
        %2397 = vmatprep.subr.bf16.mxu0 0
        %2398 = vmatpush1.bf16.msra.mxu0 0
        %2399 = vmatprep.mubr.bf16.mxu0 0
        %2400 = vmatmul.mubr.bf16.gmra.mrb[0].mxu0 %v2362
        %v2401 = vpop.f32.mrb[0].mxu0
        %v2402 = vadd.f32 0.0, %v2401
        %v2403 = vpop.f32.mrb[0].mxu0
        %v2404 = vpop.f32.mrb[0].mxu0
        %v2405 = vpop.f32.mrb[0].mxu0
        %2406 = vdwg.mxu0
        %v2407 = vpack.c.bf16 %v2402, %v2402
        %s2408 = scalar_lea.vmem %s760, 24
        %v2409 = vld [vmem:[%s2408] sm:$0xf]
        %v2410 = vld [vmem:[%s2408 + $0x4] sm:$0xf]
        %v2413 = vunpack.c.l.b16 %v2409
        %v2414 = vunpack.c.l.b16 %v2410
        %v2415 = vpack.c.b16 %v2414, %v2413
        %v2418 = vsel %vm1088, %v2407, 0
        %2420 = vmatprep.subr.bf16.mxu0 0
        %2421 = vmatpush1.bf16.msra.mxu0 %v2415
        %2422 = vmatprep.subr.bf16.mxu0 0
        %2423 = vmatpush1.bf16.msra.mxu0 0
        %2424 = vmatprep.subr.bf16.mxu0 0
        %2425 = vmatpush1.bf16.msra.mxu0 0
        %2426 = vmatprep.subr.bf16.mxu0 0
        %2427 = vmatpush1.bf16.msra.mxu0 0
        %2428 = vmatprep.subr.bf16.mxu0 0
        %2429 = vmatpush1.bf16.msra.mxu0 0
        %2430 = vmatprep.subr.bf16.mxu0 0
        %2431 = vmatpush1.bf16.msra.mxu0 0
        %2432 = vmatprep.subr.bf16.mxu0 0
        %2433 = vmatpush1.bf16.msra.mxu0 0
        %2434 = vmatprep.subr.bf16.mxu0 0
        %2435 = vmatpush1.bf16.msra.mxu0 0
        %2436 = vmatprep.subr.bf16.mxu0 0
        %2437 = vmatpush1.bf16.msra.mxu0 0
        %2438 = vmatprep.subr.bf16.mxu0 0
        %2439 = vmatpush1.bf16.msra.mxu0 0
        %2440 = vmatprep.subr.bf16.mxu0 0
        %2441 = vmatpush1.bf16.msra.mxu0 0
        %2442 = vmatprep.subr.bf16.mxu0 0
        %2443 = vmatpush1.bf16.msra.mxu0 0
        %2444 = vmatprep.subr.bf16.mxu0 0
        %2445 = vmatpush1.bf16.msra.mxu0 0
        %2446 = vmatprep.subr.bf16.mxu0 0
        %2447 = vmatpush1.bf16.msra.mxu0 0
        %2448 = vmatprep.subr.bf16.mxu0 0
        %2449 = vmatpush1.bf16.msra.mxu0 0
        %2450 = vmatprep.subr.bf16.mxu0 0
        %2451 = vmatpush1.bf16.msra.mxu0 0
        %2452 = vmatprep.mubr.bf16.mxu0 0
        %2453 = vmatmul.mubr.bf16.gmra.mrb[0].mxu0 %v2418
        %v2454 = vpop.f32.mrb[0].mxu0
        %v2455 = vadd.f32 0.0, %v2454
        %v2456 = vpop.f32.mrb[0].mxu0
        %v2457 = vpop.f32.mrb[0].mxu0
        %v2458 = vpop.f32.mrb[0].mxu0
        %2459 = vdwg.mxu0
        %v2460 = vadd.f32 %v2055, %v2455
        %v2461 = vld [vmem:[%s763] sm:$0x1]
        %v2463 = vlaneseq
        %v2464 = vshrl.u32 %v2463, 7
        %v2465 = vsub.s32 0, %v2464
        %v2466 = vrot.slane %v2461, %v2465
        %v2468 = vadd.f32 %v2460, %v2466
        %v2469 = vadd.f32 %v2468, %v830
        %v2470 = vld [vmem:[%s766] sm:$0x1]
        %v2471 = vld [vmem:[%s769] sm:$0x1]
        %v2472 = vsel %vm872, %v2469, 0.0
        %2473 = vadd.xlane.f32.xlu0 %v2472
        %v2474 = vpop.xlane.xlu0 %2473
        %v2475 = vrcp.pop 64.0
        %v2476 = vmul.f32 %v2474, %v2475
        %v2477 = vsub.f32 %v2469, %v2476
        %v2478 = vmul.f32 %v2477, %v2477
        %v2479 = vsel %vm872, %v2478, 0.0
        %2480 = vadd.xlane.f32.xlu0 %v2479
        %v2481 = vpop.xlane.xlu0 %2480
        %v2482 = vmul.f32 %v2481, %v2475
        %v2483 = vadd.f32 %v2482, 1e-12
        %v2484 = vrsqrt.pop %v2483
        %v2485 = vmul.f32 %v2477, %v2484
        %v2487 = vlaneseq
        %v2488 = vshrl.u32 %v2487, 7
        %v2489 = vsub.s32 0, %v2488
        %v2490 = vrot.slane %v2470, %v2489
        %v2492 = vmul.f32 %v2485, %v2490
        %v2494 = vlaneseq
        %v2495 = vshrl.u32 %v2494, 7
        %v2496 = vsub.s32 0, %v2495
        %v2497 = vrot.slane %v2471, %v2496
        %v2499 = vadd.f32 %v2492, %v2497
        %v2500 = vpack.c.bf16 %v2499, %v2499
        %v2501 = vld [vmem:[%s774] sm:$0xf]
        %v2502 = vld [vmem:[%s774 + $0x4] sm:$0xf]
        %v2503 = vld [vmem:[%s774 + $0x8] sm:$0xf]
        %v2504 = vld [vmem:[%s774 + $0xc] sm:$0xf]
        %v2505 = vld [vmem:[%s774 + $0x10] sm:$0xf]
        %v2506 = vld [vmem:[%s774 + $0x14] sm:$0xf]
        %v2507 = vld [vmem:[%s774 + $0x18] sm:$0xf]
        %v2508 = vld [vmem:[%s774 + $0x1c] sm:$0xf]
        %v2509 = vld [vmem:[%s777] sm:$0x1]
        %v2511 = vlaneseq
        %v2512 = vshrl.u32 %v2511, 7
        %v2513 = vsub.s32 0, %v2512
        %v2514 = vrot.slane %v2509, %v2513
        %v2524 = vunpack.c.l.b16 %v2501
        %v2525 = vunpack.c.l.b16 %v2502
        %v2526 = vunpack.c.l.b16 %v2503
        %v2527 = vunpack.c.l.b16 %v2504
        %v2528 = vunpack.c.l.b16 %v2505
        %v2529 = vunpack.c.l.b16 %v2506
        %v2530 = vunpack.c.l.b16 %v2507
        %v2531 = vunpack.c.l.b16 %v2508
        %v2532 = vpack.c.b16 %v2525, %v2524
        %v2533 = vpack.c.b16 %v2527, %v2526
        %v2534 = vpack.c.b16 %v2529, %v2528
        %v2535 = vpack.c.b16 %v2531, %v2530
        %v2541 = vsel %vm872, %v2500, 0
        %2543 = vmatprep.subr.bf16.mxu0 0
        %2544 = vmatpush1.bf16.msra.mxu0 %v2532
        %2545 = vmatprep.subr.bf16.mxu0 0
        %2546 = vmatpush1.bf16.msra.mxu0 %v2533
        %2547 = vmatprep.subr.bf16.mxu0 0
        %2548 = vmatpush1.bf16.msra.mxu0 %v2534
        %2549 = vmatprep.subr.bf16.mxu0 0
        %2550 = vmatpush1.bf16.msra.mxu0 %v2535
        %2551 = vmatprep.subr.bf16.mxu0 0
        %2552 = vmatpush1.bf16.msra.mxu0 0
        %2553 = vmatprep.subr.bf16.mxu0 0
        %2554 = vmatpush1.bf16.msra.mxu0 0
        %2555 = vmatprep.subr.bf16.mxu0 0
        %2556 = vmatpush1.bf16.msra.mxu0 0
        %2557 = vmatprep.subr.bf16.mxu0 0
        %2558 = vmatpush1.bf16.msra.mxu0 0
        %2559 = vmatprep.subr.bf16.mxu0 0
        %2560 = vmatpush1.bf16.msra.mxu0 0
        %2561 = vmatprep.subr.bf16.mxu0 0
        %2562 = vmatpush1.bf16.msra.mxu0 0
        %2563 = vmatprep.subr.bf16.mxu0 0
        %2564 = vmatpush1.bf16.msra.mxu0 0
        %2565 = vmatprep.subr.bf16.mxu0 0
        %2566 = vmatpush1.bf16.msra.mxu0 0
        %2567 = vmatprep.subr.bf16.mxu0 0
        %2568 = vmatpush1.bf16.msra.mxu0 0
        %2569 = vmatprep.subr.bf16.mxu0 0
        %2570 = vmatpush1.bf16.msra.mxu0 0
        %2571 = vmatprep.subr.bf16.mxu0 0
        %2572 = vmatpush1.bf16.msra.mxu0 0
        %2573 = vmatprep.subr.bf16.mxu0 0
        %2574 = vmatpush1.bf16.msra.mxu0 0
        %2575 = vmatprep.mubr.bf16.mxu0 0
        %2576 = vmatmul.mubr.bf16.gmra.mrb[0].mxu0 %v2541
        %v2577 = vpop.f32.mrb[0].mxu0
        %v2578 = vadd.f32 %v2514, %v2577
        %v2579 = vpop.f32.mrb[0].mxu0
        %v2580 = vpop.f32.mrb[0].mxu0
        %v2581 = vpop.f32.mrb[0].mxu0
        %2582 = vdwg.mxu0
        %v2583 = vmul.f32 %v2578, 0.5
        %v2584 = vmul.f32 %v2578, 0.044715
        %v2585 = vmul.f32 %v2584, %v2578
        %v2586 = vmul.f32 %v2585, %v2578
        %v2587 = vadd.f32 %v2578, %v2586
        %v2588 = vmul.f32 %v2587, 0.7978846
        %v2589 = vtanh.pop %v2588
        %v2590 = vadd.f32 %v2589, 1.0
        %v2591 = vmul.f32 %v2583, %v2590
        %v2592 = vpack.c.bf16 %v2591, %v2591
        %v2593 = vld [vmem:[%s782] sm:$0xf]
        %v2594 = vld [vmem:[%s782 + $0x4] sm:$0xf]
        %v2595 = vld [vmem:[%s782 + $0x8] sm:$0xf]
        %v2596 = vld [vmem:[%s782 + $0xc] sm:$0xf]
        %v2597 = vld [vmem:[%s782 + $0x10] sm:$0xf]
        %v2598 = vld [vmem:[%s782 + $0x14] sm:$0xf]
        %v2599 = vld [vmem:[%s782 + $0x18] sm:$0xf]
        %v2600 = vld [vmem:[%s782 + $0x1c] sm:$0xf]
        %v2601 = vld [vmem:[%s782 + $0x20] sm:$0xf]
        %v2602 = vld [vmem:[%s782 + $0x24] sm:$0xf]
        %v2603 = vld [vmem:[%s782 + $0x28] sm:$0xf]
        %v2604 = vld [vmem:[%s782 + $0x2c] sm:$0xf]
        %v2605 = vld [vmem:[%s782 + $0x30] sm:$0xf]
        %v2606 = vld [vmem:[%s782 + $0x34] sm:$0xf]
        %v2607 = vld [vmem:[%s782 + $0x38] sm:$0xf]
        %v2608 = vld [vmem:[%s782 + $0x3c] sm:$0xf]
        %v2609 = vld [vmem:[%s785] sm:$0x1]
        %v2611 = vlaneseq
        %v2612 = vshrl.u32 %v2611, 7
        %v2613 = vsub.s32 0, %v2612
        %v2614 = vrot.slane %v2609, %v2613
        %v2632 = vunpack.c.l.b16 %v2593
        %v2633 = vunpack.c.l.b16 %v2594
        %v2634 = vunpack.c.l.b16 %v2595
        %v2635 = vunpack.c.l.b16 %v2596
        %v2636 = vunpack.c.l.b16 %v2597
        %v2637 = vunpack.c.l.b16 %v2598
        %v2638 = vunpack.c.l.b16 %v2599
        %v2639 = vunpack.c.l.b16 %v2600
        %v2640 = vunpack.c.l.b16 %v2601
        %v2641 = vunpack.c.l.b16 %v2602
        %v2642 = vunpack.c.l.b16 %v2603
        %v2643 = vunpack.c.l.b16 %v2604
        %v2644 = vunpack.c.l.b16 %v2605
        %v2645 = vunpack.c.l.b16 %v2606
        %v2646 = vunpack.c.l.b16 %v2607
        %v2647 = vunpack.c.l.b16 %v2608
        %v2648 = vpack.c.b16 %v2633, %v2632
        %v2649 = vpack.c.b16 %v2635, %v2634
        %v2650 = vpack.c.b16 %v2637, %v2636
        %v2651 = vpack.c.b16 %v2639, %v2638
        %v2652 = vpack.c.b16 %v2641, %v2640
        %v2653 = vpack.c.b16 %v2643, %v2642
        %v2654 = vpack.c.b16 %v2645, %v2644
        %v2655 = vpack.c.b16 %v2647, %v2646
        %2664 = vmatprep.subr.bf16.mxu0 0
        %2665 = vmatpush1.bf16.msra.mxu0 %v2648
        %2666 = vmatprep.subr.bf16.mxu0 0
        %2667 = vmatpush1.bf16.msra.mxu0 %v2649
        %2668 = vmatprep.subr.bf16.mxu0 0
        %2669 = vmatpush1.bf16.msra.mxu0 %v2650
        %2670 = vmatprep.subr.bf16.mxu0 0
        %2671 = vmatpush1.bf16.msra.mxu0 %v2651
        %2672 = vmatprep.subr.bf16.mxu0 0
        %2673 = vmatpush1.bf16.msra.mxu0 %v2652
        %2674 = vmatprep.subr.bf16.mxu0 0
        %2675 = vmatpush1.bf16.msra.mxu0 %v2653
        %2676 = vmatprep.subr.bf16.mxu0 0
        %2677 = vmatpush1.bf16.msra.mxu0 %v2654
        %2678 = vmatprep.subr.bf16.mxu0 0
        %2679 = vmatpush1.bf16.msra.mxu0 %v2655
        %2680 = vmatprep.subr.bf16.mxu0 0
        %2681 = vmatpush1.bf16.msra.mxu0 0
        %2682 = vmatprep.subr.bf16.mxu0 0
        %2683 = vmatpush1.bf16.msra.mxu0 0
        %2684 = vmatprep.subr.bf16.mxu0 0
        %2685 = vmatpush1.bf16.msra.mxu0 0
        %2686 = vmatprep.subr.bf16.mxu0 0
        %2687 = vmatpush1.bf16.msra.mxu0 0
        %2688 = vmatprep.subr.bf16.mxu0 0
        %2689 = vmatpush1.bf16.msra.mxu0 0
        %2690 = vmatprep.subr.bf16.mxu0 0
        %2691 = vmatpush1.bf16.msra.mxu0 0
        %2692 = vmatprep.subr.bf16.mxu0 0
        %2693 = vmatpush1.bf16.msra.mxu0 0
        %2694 = vmatprep.subr.bf16.mxu0 0
        %2695 = vmatpush1.bf16.msra.mxu0 0
        %2696 = vmatprep.mubr.bf16.mxu0 0
        %2697 = vmatmul.mubr.bf16.gmra.mrb[0].mxu0 %v2592
        %v2698 = vpop.f32.mrb[0].mxu0
        %v2699 = vadd.f32 %v2614, %v2698
        %v2700 = vpop.f32.mrb[0].mxu0
        %v2701 = vpop.f32.mrb[0].mxu0
        %v2702 = vpop.f32.mrb[0].mxu0
        %2703 = vdwg.mxu0
        %v2704 = vadd.f32 %v2699, %v2499
        %v2705 = vld [vmem:[%s788] sm:$0x1]
        %v2706 = vld [vmem:[%s791] sm:$0x1]
        %v2707 = vsel %vm872, %v2704, 0.0
        %2708 = vadd.xlane.f32.xlu0 %v2707
        %v2709 = vpop.xlane.xlu0 %2708
        %v2710 = vmul.f32 %v2709, %v2475
        %v2711 = vsub.f32 %v2704, %v2710
        %v2712 = vmul.f32 %v2711, %v2711
        %v2713 = vsel %vm872, %v2712, 0.0
        %2714 = vadd.xlane.f32.xlu0 %v2713
        %v2715 = vpop.xlane.xlu0 %2714
        %v2716 = vmul.f32 %v2715, %v2475
        %v2717 = vadd.f32 %v2716, 1e-12
        %v2718 = vrsqrt.pop %v2717
        %v2719 = vmul.f32 %v2711, %v2718
        %v2721 = vlaneseq
        %v2722 = vshrl.u32 %v2721, 7
        %v2723 = vsub.s32 0, %v2722
        %v2724 = vrot.slane %v2705, %v2723
        %v2726 = vmul.f32 %v2719, %v2724
        %v2728 = vlaneseq
        %v2729 = vshrl.u32 %v2728, 7
        %v2730 = vsub.s32 0, %v2729
        %v2731 = vrot.slane %v2706, %v2730
        %v2733 = vadd.f32 %v2726, %v2731
        %2734 = vst.msk [vmem:[#allocation2] sm:$0xff] %vm872, %v2733
        %p2735 = scmp.eq.s32.totalorder %s37, 2
        // Predicated region
        $region97: #{tpu_custom_call.1} parent=91 // pred_check
          %p2736 = pneg %p2735
        $region98: #{tpu_custom_call.1} parent=91 // pred_check_branch
          %2738 = sbr.rel (%p2736) target = $region100
        $region99: #{tpu_custom_call.1} parent=91 // pred_region
          %v2739 = vpack.c.bf16 %v2733, %v2733
          %v2740 = vld [vmem:[%s16] sm:$0xf]
          %v2741 = vld [vmem:[%s16 + $0x4] sm:$0xf]
          %v2742 = vld [vmem:[%s16 + $0x8] sm:$0xf]
          %v2743 = vld [vmem:[%s16 + $0xc] sm:$0xf]
          %v2744 = vld [vmem:[%s16 + $0x10] sm:$0xf]
          %v2745 = vld [vmem:[%s16 + $0x14] sm:$0xf]
          %v2746 = vld [vmem:[%s16 + $0x18] sm:$0xf]
          %v2747 = vld [vmem:[%s16 + $0x1c] sm:$0xf]
          %v2748 = vld [vmem:[%s17] sm:$0x1]
          %v2750 = vlaneseq
          %v2751 = vshrl.u32 %v2750, 7
          %v2752 = vsub.s32 0, %v2751
          %v2753 = vrot.slane %v2748, %v2752
          %v2763 = vunpack.c.l.b16 %v2740
          %v2764 = vunpack.c.l.b16 %v2741
          %v2765 = vunpack.c.l.b16 %v2742
          %v2766 = vunpack.c.l.b16 %v2743
          %v2767 = vunpack.c.l.b16 %v2744
          %v2768 = vunpack.c.l.b16 %v2745
          %v2769 = vunpack.c.l.b16 %v2746
          %v2770 = vunpack.c.l.b16 %v2747
          %v2771 = vpack.c.b16 %v2764, %v2763
          %v2772 = vpack.c.b16 %v2766, %v2765
          %v2773 = vpack.c.b16 %v2768, %v2767
          %v2774 = vpack.c.b16 %v2770, %v2769
          %v2780 = vsel %vm872, %v2739, 0
          %2782 = vmatprep.subr.bf16.mxu0 0
          %2783 = vmatpush1.bf16.msra.mxu0 %v2771
          %2784 = vmatprep.subr.bf16.mxu0 0
          %2785 = vmatpush1.bf16.msra.mxu0 %v2772
          %2786 = vmatprep.subr.bf16.mxu0 0
          %2787 = vmatpush1.bf16.msra.mxu0 %v2773
          %2788 = vmatprep.subr.bf16.mxu0 0
          %2789 = vmatpush1.bf16.msra.mxu0 %v2774
          %2790 = vmatprep.subr.bf16.mxu0 0
          %2791 = vmatpush1.bf16.msra.mxu0 0
          %2792 = vmatprep.subr.bf16.mxu0 0
          %2793 = vmatpush1.bf16.msra.mxu0 0
          %2794 = vmatprep.subr.bf16.mxu0 0
          %2795 = vmatpush1.bf16.msra.mxu0 0
          %2796 = vmatprep.subr.bf16.mxu0 0
          %2797 = vmatpush1.bf16.msra.mxu0 0
          %2798 = vmatprep.subr.bf16.mxu0 0
          %2799 = vmatpush1.bf16.msra.mxu0 0
          %2800 = vmatprep.subr.bf16.mxu0 0
          %2801 = vmatpush1.bf16.msra.mxu0 0
          %2802 = vmatprep.subr.bf16.mxu0 0
          %2803 = vmatpush1.bf16.msra.mxu0 0
          %2804 = vmatprep.subr.bf16.mxu0 0
          %2805 = vmatpush1.bf16.msra.mxu0 0
          %2806 = vmatprep.subr.bf16.mxu0 0
          %2807 = vmatpush1.bf16.msra.mxu0 0
          %2808 = vmatprep.subr.bf16.mxu0 0
          %2809 = vmatpush1.bf16.msra.mxu0 0
          %2810 = vmatprep.subr.bf16.mxu0 0
          %2811 = vmatpush1.bf16.msra.mxu0 0
          %2812 = vmatprep.subr.bf16.mxu0 0
          %2813 = vmatpush1.bf16.msra.mxu0 0
          %2814 = vmatprep.mubr.bf16.mxu0 0
          %2815 = vmatmul.mubr.bf16.gmra.mrb[0].mxu0 %v2780
          %v2816 = vpop.f32.mrb[0].mxu0
          %v2817 = vadd.f32 %v2753, %v2816
          %v2818 = vpop.f32.mrb[0].mxu0
          %v2819 = vpop.f32.mrb[0].mxu0
          %v2820 = vpop.f32.mrb[0].mxu0
          %2821 = vdwg.mxu0
          %2822 = vst [vmem:[%s739] sm:$0xff] %v2817
        $region100: #{tpu_custom_call.1} parent=91 // pred_fallthru
          _
        %s2823 = sand.u32 %s500, 1
        %s2824 = scalar_lea.sflag [#allocation4], %s2823
        %s2825 = sand.u32 %s500, 1
        %s2826 = smul.addr %s2825, 8
        %s2827 = scalar_lea.vmem [#allocation3], %s2826
        // Predicated region
        $region101: #{tpu_custom_call.1} parent=91 // pred_check
          %p2828 = pneg %p510
        $region102: #{tpu_custom_call.1} parent=91 // pred_check_branch
          %2830 = sbr.rel (%p2828) target = $region104
        $region103: #{tpu_custom_call.1} parent=91 // pred_region
          %s2832 = ssub.s32 128, 128
          %2833 = vsyncadd %s2824, %s2832
          %s2834 = smul.addr %s36, 128
          %s2835 = scalar_lea.hbm %s18, %s2834
          %s2837 = sshll.u32 %s2827, 4
          %s2838 = int_to_ptr.vmem [resolvable:$true] %s2837
          %2840 = dma.vmem_to_hbm [thread:$0]  %s2838, 128, %s2835, %s2824
        $region104: #{tpu_custom_call.1} parent=91 // pred_fallthru
          _
      $region92: #{tpu_custom_call.1} parent=5 // pred_fallthru
        _
      %p2841 = scmp.le.s32.totalorder 2, %s27
      // Predicated region
      $region105: #{tpu_custom_call.1} parent=5 // pred_check
        %p2842 = pneg %p2841
      $region106: #{tpu_custom_call.1} parent=5 // pred_check_branch
        %2844 = sbr.rel (%p2842) target = $region108
      $region107: #{tpu_custom_call.1} parent=5 // pred_region
        %s2845 = ssub.s32 %s27, 2
        // Predicated region
        $region109: #{tpu_custom_call.1} parent=107 // pred_check
          %p2846 = pneg %p516
        $region110: #{tpu_custom_call.1} parent=107 // pred_check_branch
          %2848 = sbr.rel (%p2846) target = $region112
        $region111: #{tpu_custom_call.1} parent=107 // pred_region
          %s2849 = sand.u32 %s501, 1
          %s2850 = scalar_lea.sflag [#allocation4], %s2849
          %s2851 = sand.u32 %s501, 1
          %s2852 = smul.addr %s2851, 8
          %s2853 = scalar_lea.vmem [#allocation3], %s2852
          %2854 = dma.done %s2850, 128
        $region112: #{tpu_custom_call.1} parent=107 // pred_fallthru
          _
      $region108: #{tpu_custom_call.1} parent=5 // pred_fallthru
        _
    $region6: #{tpu_custom_call.1} parent=1 // loop_footer
      %s31 = sadd.s32 1, %s27
    $region7: #{tpu_custom_call.1} parent=1 // loop_footer_branch
      %26 = sbr.rel target = $region3
    $region8: #{tpu_custom_call.1} parent=1 // loop_exit
      _
    %2855 = vsyncpa [#allocation4], 1
    %s2856 = scalar_lea.sflag [#allocation4], 1
    %2857 = vsyncpa %s2856, 1

</llo_original>
